<compile_context>
chip_gen: v7x
topology: tpu7x:2x2x1
jax: 0.10.0
libtpu: 0.0.40
codegen_flags: <defaults>
</compile_context>

<pallas_src>
import functools

import jax
import jax.numpy as jnp
from jax import lax
from jax.experimental import pallas as pl
from jax.experimental.pallas import tpu as pltpu

EPS = 1e-5


def _double_conv_kernel(xr_ref, t1_ref, s1_ref, p1_ref, t2_ref, s2_ref, p2_ref,
                        out_ref, mid_ref, *, N, H, W, Cin, Cmid, Cout):
    f32 = jnp.float32
    NH = N * H
    inv_cnt = 1.0 / float(N * H * W)

    def conv3x3(load_row, t_ref, k):
        # 3 matmuls (one per kernel row); each contracts K = W*C_in with the dw taps,
        # all W positions and the W zero-padding folded into the Toeplitz weight.
        acc = jnp.zeros((NH, t_ref.shape[-1]), f32)
        for dh in range(3):
            patch = load_row(dh).reshape(NH, k)                 # (N*H, W*C_in) bf16
            acc = acc + jnp.dot(patch, t_ref[dh],
                                preferred_element_type=f32)     # native bf16 MXU, f32 acc
        return acc

    def bn_relu(acc, s_ref, p_ref):
        # One-pass batch stats: lane-wise sum / sumsq, then a tiny matmul with the
        # periodic group-sum matrix gives per-channel sums broadcast to every lane.
        s = jnp.sum(acc, axis=0, keepdims=True)                 # (1, W*C)
        ss = jnp.sum(acc * acc, axis=0, keepdims=True)          # (1, W*C)
        csum = jnp.dot(s, p_ref[...], preferred_element_type=f32,
                       precision=lax.Precision.HIGHEST)         # negligible cost, exact stats
        csqs = jnp.dot(ss, p_ref[...], preferred_element_type=f32,
                       precision=lax.Precision.HIGHEST)
        mean = csum * inv_cnt
        var = csqs * inv_cnt - mean * mean                      # biased var (BN training fwd)
        scale = s_ref[0:1, :] * lax.rsqrt(var + EPS)            # gamma (lane-tiled)
        shift = s_ref[1:2, :] - mean * scale                    # beta  (lane-tiled)
        return jnp.maximum(acc * scale + shift, 0.0)

    # ---------------- conv1 + BN1 + ReLU ----------------
    acc1 = conv3x3(lambda dh: xr_ref[:, dh:dh + H, :], t1_ref, W * Cin)
    h1 = bn_relu(acc1, s1_ref, p1_ref)

    # ------ intermediate: zero only the 1-row H halo, store interior as bf16 ------
    mid_ref[:, 0:1, :] = jnp.zeros((N, 1, W * Cmid), mid_ref.dtype)
    mid_ref[:, H + 1:H + 2, :] = jnp.zeros((N, 1, W * Cmid), mid_ref.dtype)
    mid_ref[:, 1:H + 1, :] = h1.reshape(N, H, W * Cmid).astype(mid_ref.dtype)

    # ---------------- conv2 + BN2 + ReLU ----------------
    acc2 = conv3x3(lambda dh: mid_ref[:, dh:dh + H, :], t2_ref, W * Cmid)
    h2 = bn_relu(acc2, s2_ref, p2_ref)

    out_ref[...] = h2.astype(out_ref.dtype)                     # (N*H, W*Cout): lane-dense store


def _toeplitz_weights(w_hwio, W):
    """Fold dw taps + all W positions + W-direction zero padding of a 3x3 SAME conv
    into per-kernel-row matmul weights.

    Returns T of shape (3, W*Ci, W*Co) with
      T[dh, s*Ci + ci, w*Co + co] = w_hwio[dh, s - w + 1, ci, co]   if 0 <= s-w+1 < 3 else 0
    so that  y[n, h, w*Co + co] = sum_dh  x_row[n, h + dh, :] @ T[dh].
    """
    kh, kw, Ci, Co = w_hwio.shape
    src = jnp.arange(W)[:, None]
    dst = jnp.arange(W)[None, :]
    sel = jnp.stack([(src == dst + dw - 1) for dw in range(kw)], axis=0)   # (kw, W, W)
    t = jnp.einsum('dsw,hdio->hsiwo', sel.astype(w_hwio.dtype), w_hwio)
    return t.reshape(kh, W * Ci, W * Co)


def _group_sum_matrix(n_lanes, period):
    """P[l, m] = 1 if l == m (mod period); (1,L) @ P = per-channel group sums
    broadcast back onto every lane of that channel (no relayout needed)."""
    idx = jnp.arange(n_lanes)
    return (idx[:, None] % period == idx[None, :] % period).astype(jnp.float32)


def double_conv(x_nchw, w1_oihw, g1, b1, w2_oihw, g2, b2):
    """x: (N, Cin, H, W); w*: (Cout, Cin, 3, 3) as in nn.Conv2d (bias=False); g*/b*: (C,)."""
    N, Cin, H, W = x_nchw.shape
    Cmid = w1_oihw.shape[0]
    Cout = w2_oihw.shape[0]

    # NCHW -> lane-dense rows (N, H, W*Cin), bf16, with a 1-row zero H halo.
    xr = jnp.transpose(x_nchw, (0, 2, 3, 1)).reshape(N, H, W * Cin)
    xr = jnp.pad(xr, ((0, 0), (1, 1), (0, 0))).astype(jnp.bfloat16)

    w1_hwio = jnp.transpose(w1_oihw, (2, 3, 1, 0))
    w2_hwio = jnp.transpose(w2_oihw, (2, 3, 1, 0))
    t1 = _toeplitz_weights(w1_hwio, W).astype(jnp.bfloat16)     # (3, W*Cin,  W*Cmid)
    t2 = _toeplitz_weights(w2_hwio, W).astype(jnp.bfloat16)     # (3, W*Cmid, W*Cout)

    s1 = jnp.stack([jnp.tile(g1, W), jnp.tile(b1, W)]).astype(jnp.float32)   # (2, W*Cmid)
    s2 = jnp.stack([jnp.tile(g2, W), jnp.tile(b2, W)]).astype(jnp.float32)   # (2, W*Cout)
    p1 = _group_sum_matrix(W * Cmid, Cmid)                                   # (W*Cmid, W*Cmid)
    p2 = _group_sum_matrix(W * Cout, Cout)                                   # (W*Cout, W*Cout)

    kernel = functools.partial(_double_conv_kernel, N=N, H=H, W=W,
                               Cin=Cin, Cmid=Cmid, Cout=Cout)

    def full(shape):
        return pl.BlockSpec(shape, lambda i, _n=len(shape): (0,) * _n)

    out2d = pl.pallas_call(
        kernel,
        out_shape=jax.ShapeDtypeStruct((N * H, W * Cout), x_nchw.dtype),
        grid=(1,),
        in_specs=[full(xr.shape), full(t1.shape), full(s1.shape), full(p1.shape),
                  full(t2.shape), full(s2.shape), full(p2.shape)],
        out_specs=full((N * H, W * Cout)),
        scratch_shapes=[pltpu.VMEM((N, H + 2, W * Cmid), jnp.bfloat16)],
        compiler_params=pltpu.CompilerParams(
            dimension_semantics=("arbitrary",),
            vmem_limit_bytes=32 * 1024 * 1024),
    )(xr, t1, s1, p1, t2, s2, p2)

    return jnp.transpose(out2d.reshape(N, H, W, Cout), (0, 3, 1, 2))         # back to NCHW


def double_conv_ref(x, w1, g1, b1, w2, g2, b2):
    """Pure-JAX reference (PyTorch DoubleConv forward, training-mode BN)."""
    def conv(x, w_oihw):
        return lax.conv_general_dilated(
            x, w_oihw, (1, 1), 'SAME',
            dimension_numbers=('NCHW', 'OIHW', 'NCHW'),
            precision=lax.Precision.HIGHEST)

    def bn_relu(y, g, b):
        mean = jnp.mean(y, axis=(0, 2, 3), keepdims=True)
        var = jnp.mean((y - mean) ** 2, axis=(0, 2, 3), keepdims=True)
        yn = (y - mean) * lax.rsqrt(var + EPS)
        yn = yn * g.reshape(1, -1, 1, 1) + b.reshape(1, -1, 1, 1)
        return jnp.maximum(yn, 0.0)

    y = bn_relu(conv(x, w1), g1, b1)
    return bn_relu(conv(y, w2), g2, b2)


if __name__ == "__main__":
    N, Cin, H, W = 2, 4, 16, 16
    Cmid = Cout = 8                      # mid_channels defaults to out_channels

    key = jax.random.PRNGKey(0)
    k1, k2, k3, k4, k5, k6, k7 = jax.random.split(key, 7)

    x = jax.random.normal(k1, (N, Cin, H, W), jnp.float32)
    w1 = jax.random.normal(k2, (Cmid, Cin, 3, 3), jnp.float32) * 0.2    # OIHW, like nn.Conv2d
    w2 = jax.random.normal(k3, (Cout, Cmid, 3, 3), jnp.float32) * 0.2
    g1 = 1.0 + 0.1 * jax.random.normal(k4, (Cmid,), jnp.float32)
    b1 = 0.1 * jax.random.normal(k5, (Cmid,), jnp.float32)
    g2 = 1.0 + 0.1 * jax.random.normal(k6, (Cout,), jnp.float32)
    b2 = 0.1 * jax.random.normal(k7, (Cout,), jnp.float32)

    out = jax.block_until_ready(double_conv(x, w1, g1, b1, w2, g2, b2))
    ref = double_conv_ref(x, w1, g1, b1, w2, g2, b2)

    assert out.shape == (N, Cout, H, W)
    # bf16 MXU operands (vs the f32 HIGHEST reference) => relaxed tolerance.
    max_err = jnp.max(jnp.abs(out - ref))
    assert jnp.allclose(out, ref, atol=5e-2, rtol=5e-2), f"mismatch vs reference (max abs err {max_err})"

    print("KERNEL_OK")
</pallas_src>

<mosaic_0001>
module attributes {stable_mosaic.version = 11 : i64} {
  func.func @_double_conv_kernel(%arg0: i32, %arg1: memref<2x18x64xbf16, #tpu.memory_space<vmem>>, %arg2: memref<3x64x128xbf16, #tpu.memory_space<vmem>>, %arg3: memref<2x128xf32, #tpu.memory_space<vmem>>, %arg4: memref<128x128xf32, #tpu.memory_space<vmem>>, %arg5: memref<3x128x128xbf16, #tpu.memory_space<vmem>>, %arg6: memref<2x128xf32, #tpu.memory_space<vmem>>, %arg7: memref<128x128xf32, #tpu.memory_space<vmem>>, %arg8: memref<32x128xf32, #tpu.memory_space<vmem>>, %arg9: memref<2x18x128xbf16, #tpu.memory_space<vmem>>) attributes {dimension_semantics = [#tpu.dimension_semantics<arbitrary>], iteration_bounds = array<i64: 1>, scalar_prefetch = 0 : i64, scratch_operands = 1 : i64, tpu.core_type = #tpu.core_type<tc>, window_params = [{pipeline_mode = #tpu.pipeline_mode<synchronous>, transform_indices = @transform_0, window_bounds = array<i64: 2, 18, 64>}, {pipeline_mode = #tpu.pipeline_mode<synchronous>, transform_indices = @transform_1, window_bounds = array<i64: 3, 64, 128>}, {pipeline_mode = #tpu.pipeline_mode<synchronous>, transform_indices = @transform_2, window_bounds = array<i64: 2, 128>}, {pipeline_mode = #tpu.pipeline_mode<synchronous>, transform_indices = @transform_3, window_bounds = array<i64: 128, 128>}, {pipeline_mode = #tpu.pipeline_mode<synchronous>, transform_indices = @transform_4, window_bounds = array<i64: 3, 128, 128>}, {pipeline_mode = #tpu.pipeline_mode<synchronous>, transform_indices = @transform_5, window_bounds = array<i64: 2, 128>}, {pipeline_mode = #tpu.pipeline_mode<synchronous>, transform_indices = @transform_6, window_bounds = array<i64: 128, 128>}, {pipeline_mode = #tpu.pipeline_mode<synchronous>, transform_indices = @transform_7, window_bounds = array<i64: 32, 128>}]} {
    %cst = arith.constant 0.000000e+00 : f32
    %0 = vector.broadcast %cst : f32 to vector<32x128xf32>
    %c0 = arith.constant 0 : index
    %c0_0 = arith.constant 0 : index
    %c0_1 = arith.constant 0 : index
    %1 = vector.load %arg1[%c0, %c0_0, %c0_1] : memref<2x18x64xbf16, #tpu.memory_space<vmem>>, vector<2x16x64xbf16>
    %2 = vector.shape_cast %1 : vector<2x16x64xbf16> to vector<32x64xbf16>
    %c0_2 = arith.constant 0 : index
    %c0_3 = arith.constant 0 : index
    %c0_4 = arith.constant 0 : index
    %3 = vector.load %arg2[%c0_2, %c0_3, %c0_4] : memref<3x64x128xbf16, #tpu.memory_space<vmem>>, vector<1x64x128xbf16>
    %4 = vector.shape_cast %3 : vector<1x64x128xbf16> to vector<64x128xbf16>
    %cst_5 = arith.constant dense<0.000000e+00> : vector<32x128xf32>
    %5 = tpu.matmul %2, %4, %cst_5 {dimension_numbers = #tpu.dot_dimension_numbers<[1], [0], [0], [1], [0, 0, 1, 1], [], []>} : vector<32x64xbf16>, vector<64x128xbf16>, vector<32x128xf32> -> vector<32x128xf32>
    %6 = arith.addf %0, %5 : vector<32x128xf32>
    %c0_6 = arith.constant 0 : index
    %c1 = arith.constant 1 : index
    %c0_7 = arith.constant 0 : index
    %7 = vector.load %arg1[%c0_6, %c1, %c0_7] : memref<2x18x64xbf16, #tpu.memory_space<vmem>>, vector<2x16x64xbf16>
    %8 = vector.shape_cast %7 : vector<2x16x64xbf16> to vector<32x64xbf16>
    %c1_8 = arith.constant 1 : index
    %c0_9 = arith.constant 0 : index
    %c0_10 = arith.constant 0 : index
    %9 = vector.load %arg2[%c1_8, %c0_9, %c0_10] : memref<3x64x128xbf16, #tpu.memory_space<vmem>>, vector<1x64x128xbf16>
    %10 = vector.shape_cast %9 : vector<1x64x128xbf16> to vector<64x128xbf16>
    %cst_11 = arith.constant dense<0.000000e+00> : vector<32x128xf32>
    %11 = tpu.matmul %8, %10, %cst_11 {dimension_numbers = #tpu.dot_dimension_numbers<[1], [0], [0], [1], [0, 0, 1, 1], [], []>} : vector<32x64xbf16>, vector<64x128xbf16>, vector<32x128xf32> -> vector<32x128xf32>
    %12 = arith.addf %6, %11 : vector<32x128xf32>
    %c0_12 = arith.constant 0 : index
    %c2 = arith.constant 2 : index
    %c0_13 = arith.constant 0 : index
    %13 = vector.load %arg1[%c0_12, %c2, %c0_13] : memref<2x18x64xbf16, #tpu.memory_space<vmem>>, vector<2x16x64xbf16>
    %14 = vector.shape_cast %13 : vector<2x16x64xbf16> to vector<32x64xbf16>
    %c2_14 = arith.constant 2 : index
    %c0_15 = arith.constant 0 : index
    %c0_16 = arith.constant 0 : index
    %15 = vector.load %arg2[%c2_14, %c0_15, %c0_16] : memref<3x64x128xbf16, #tpu.memory_space<vmem>>, vector<1x64x128xbf16>
    %16 = vector.shape_cast %15 : vector<1x64x128xbf16> to vector<64x128xbf16>
    %cst_17 = arith.constant dense<0.000000e+00> : vector<32x128xf32>
    %17 = tpu.matmul %14, %16, %cst_17 {dimension_numbers = #tpu.dot_dimension_numbers<[1], [0], [0], [1], [0, 0, 1, 1], [], []>} : vector<32x64xbf16>, vector<64x128xbf16>, vector<32x128xf32> -> vector<32x128xf32>
    %18 = arith.addf %12, %17 : vector<32x128xf32>
    %cst_18 = arith.constant dense<0.000000e+00> : vector<128xf32>
    %19 = vector.multi_reduction <add>, %18, %cst_18 [0] : vector<32x128xf32> to vector<128xf32>
    %20 = vector.shape_cast %19 : vector<128xf32> to vector<1x128xf32>
    %21 = arith.mulf %18, %18 : vector<32x128xf32>
    %cst_19 = arith.constant dense<0.000000e+00> : vector<128xf32>
    %22 = vector.multi_reduction <add>, %21, %cst_19 [0] : vector<32x128xf32> to vector<128xf32>
    %23 = vector.shape_cast %22 : vector<128xf32> to vector<1x128xf32>
    %c0_20 = arith.constant 0 : index
    %c0_21 = arith.constant 0 : index
    %24 = vector.load %arg4[%c0_20, %c0_21] : memref<128x128xf32, #tpu.memory_space<vmem>>, vector<128x128xf32>
    %cst_22 = arith.constant dense<0.000000e+00> : vector<1x128xf32>
    %25 = tpu.matmul %20, %24, %cst_22 {dimension_numbers = #tpu.dot_dimension_numbers<[1], [0], [0], [1], [0, 0, 1, 1], [], []>, precision = #tpu.contract_precision<fp32>} : vector<1x128xf32>, vector<128x128xf32>, vector<1x128xf32> -> vector<1x128xf32>
    %c0_23 = arith.constant 0 : index
    %c0_24 = arith.constant 0 : index
    %26 = vector.load %arg4[%c0_23, %c0_24] : memref<128x128xf32, #tpu.memory_space<vmem>>, vector<128x128xf32>
    %cst_25 = arith.constant dense<0.000000e+00> : vector<1x128xf32>
    %27 = tpu.matmul %23, %26, %cst_25 {dimension_numbers = #tpu.dot_dimension_numbers<[1], [0], [0], [1], [0, 0, 1, 1], [], []>, precision = #tpu.contract_precision<fp32>} : vector<1x128xf32>, vector<128x128xf32>, vector<1x128xf32> -> vector<1x128xf32>
    %cst_26 = arith.constant 0.001953125 : f32
    %28 = vector.broadcast %cst_26 : f32 to vector<1x128xf32>
    %29 = arith.mulf %25, %28 : vector<1x128xf32>
    %cst_27 = arith.constant 0.001953125 : f32
    %30 = vector.broadcast %cst_27 : f32 to vector<1x128xf32>
    %31 = arith.mulf %27, %30 : vector<1x128xf32>
    %32 = arith.mulf %29, %29 : vector<1x128xf32>
    %33 = arith.subf %31, %32 : vector<1x128xf32>
    %c0_28 = arith.constant 0 : index
    %c0_29 = arith.constant 0 : index
    %34 = vector.load %arg3[%c0_28, %c0_29] : memref<2x128xf32, #tpu.memory_space<vmem>>, vector<1x128xf32>
    %cst_30 = arith.constant 9.99999974E-6 : f32
    %35 = vector.broadcast %cst_30 : f32 to vector<1x128xf32>
    %36 = arith.addf %33, %35 : vector<1x128xf32>
    %37 = math.rsqrt %36 : vector<1x128xf32>
    %38 = arith.mulf %34, %37 : vector<1x128xf32>
    %c1_31 = arith.constant 1 : index
    %c0_32 = arith.constant 0 : index
    %39 = vector.load %arg3[%c1_31, %c0_32] : memref<2x128xf32, #tpu.memory_space<vmem>>, vector<1x128xf32>
    %40 = arith.mulf %29, %38 : vector<1x128xf32>
    %41 = arith.subf %39, %40 : vector<1x128xf32>
    %42 = vector.broadcast %38 : vector<1x128xf32> to vector<32x128xf32>
    %43 = arith.mulf %18, %42 : vector<32x128xf32>
    %44 = vector.broadcast %41 : vector<1x128xf32> to vector<32x128xf32>
    %45 = arith.addf %43, %44 : vector<32x128xf32>
    %cst_33 = arith.constant 0.000000e+00 : f32
    %46 = vector.broadcast %cst_33 : f32 to vector<32x128xf32>
    %47 = arith.maximumf %45, %46 : vector<32x128xf32>
    %cst_34 = arith.constant 0.000000e+00 : bf16
    %48 = vector.broadcast %cst_34 : bf16 to vector<2x1x128xbf16>
    %c0_35 = arith.constant 0 : index
    %c0_36 = arith.constant 0 : index
    %c0_37 = arith.constant 0 : index
    %49 = vector.load %arg9[%c0_35, %c0_36, %c0_37] : memref<2x18x128xbf16, #tpu.memory_space<vmem>>, vector<2x1x128xbf16>
    tpu.vector_store %arg9[%c0_35, %c0_36, %c0_37], %48 {strides = array<i32>} : memref<2x18x128xbf16, #tpu.memory_space<vmem>>, vector<2x1x128xbf16>,
    %cst_38 = arith.constant 0.000000e+00 : bf16
    %50 = vector.broadcast %cst_38 : bf16 to vector<2x1x128xbf16>
    %c0_39 = arith.constant 0 : index
    %c17 = arith.constant 17 : index
    %c0_40 = arith.constant 0 : index
    %51 = vector.load %arg9[%c0_39, %c17, %c0_40] : memref<2x18x128xbf16, #tpu.memory_space<vmem>>, vector<2x1x128xbf16>
    tpu.vector_store %arg9[%c0_39, %c17, %c0_40], %50 {strides = array<i32>} : memref<2x18x128xbf16, #tpu.memory_space<vmem>>, vector<2x1x128xbf16>,
    %52 = vector.shape_cast %47 : vector<32x128xf32> to vector<2x16x128xf32>
    %53 = arith.truncf %52 : vector<2x16x128xf32> to vector<2x16x128xbf16>
    %c0_41 = arith.constant 0 : index
    %c1_42 = arith.constant 1 : index
    %c0_43 = arith.constant 0 : index
    %54 = vector.load %arg9[%c0_41, %c1_42, %c0_43] : memref<2x18x128xbf16, #tpu.memory_space<vmem>>, vector<2x16x128xbf16>
    tpu.vector_store %arg9[%c0_41, %c1_42, %c0_43], %53 {strides = array<i32>} : memref<2x18x128xbf16, #tpu.memory_space<vmem>>, vector<2x16x128xbf16>,
    %cst_44 = arith.constant 0.000000e+00 : f32
    %55 = vector.broadcast %cst_44 : f32 to vector<32x128xf32>
    %c0_45 = arith.constant 0 : index
    %c0_46 = arith.constant 0 : index
    %c0_47 = arith.constant 0 : index
    %56 = vector.load %arg9[%c0_45, %c0_46, %c0_47] : memref<2x18x128xbf16, #tpu.memory_space<vmem>>, vector<2x16x128xbf16>
    %57 = vector.shape_cast %56 : vector<2x16x128xbf16> to vector<32x128xbf16>
    %c0_48 = arith.constant 0 : index
    %c0_49 = arith.constant 0 : index
    %c0_50 = arith.constant 0 : index
    %58 = vector.load %arg5[%c0_48, %c0_49, %c0_50] : memref<3x128x128xbf16, #tpu.memory_space<vmem>>, vector<1x128x128xbf16>
    %59 = vector.shape_cast %58 : vector<1x128x128xbf16> to vector<128x128xbf16>
    %cst_51 = arith.constant dense<0.000000e+00> : vector<32x128xf32>
    %60 = tpu.matmul %57, %59, %cst_51 {dimension_numbers = #tpu.dot_dimension_numbers<[1], [0], [0], [1], [0, 0, 1, 1], [], []>} : vector<32x128xbf16>, vector<128x128xbf16>, vector<32x128xf32> -> vector<32x128xf32>
    %61 = arith.addf %55, %60 : vector<32x128xf32>
    %c0_52 = arith.constant 0 : index
    %c1_53 = arith.constant 1 : index
    %c0_54 = arith.constant 0 : index
    %62 = vector.load %arg9[%c0_52, %c1_53, %c0_54] : memref<2x18x128xbf16, #tpu.memory_space<vmem>>, vector<2x16x128xbf16>
    %63 = vector.shape_cast %62 : vector<2x16x128xbf16> to vector<32x128xbf16>
    %c1_55 = arith.constant 1 : index
    %c0_56 = arith.constant 0 : index
    %c0_57 = arith.constant 0 : index
    %64 = vector.load %arg5[%c1_55, %c0_56, %c0_57] : memref<3x128x128xbf16, #tpu.memory_space<vmem>>, vector<1x128x128xbf16>
    %65 = vector.shape_cast %64 : vector<1x128x128xbf16> to vector<128x128xbf16>
    %cst_58 = arith.constant dense<0.000000e+00> : vector<32x128xf32>
    %66 = tpu.matmul %63, %65, %cst_58 {dimension_numbers = #tpu.dot_dimension_numbers<[1], [0], [0], [1], [0, 0, 1, 1], [], []>} : vector<32x128xbf16>, vector<128x128xbf16>, vector<32x128xf32> -> vector<32x128xf32>
    %67 = arith.addf %61, %66 : vector<32x128xf32>
    %c0_59 = arith.constant 0 : index
    %c2_60 = arith.constant 2 : index
    %c0_61 = arith.constant 0 : index
    %68 = vector.load %arg9[%c0_59, %c2_60, %c0_61] : memref<2x18x128xbf16, #tpu.memory_space<vmem>>, vector<2x16x128xbf16>
    %69 = vector.shape_cast %68 : vector<2x16x128xbf16> to vector<32x128xbf16>
    %c2_62 = arith.constant 2 : index
    %c0_63 = arith.constant 0 : index
    %c0_64 = arith.constant 0 : index
    %70 = vector.load %arg5[%c2_62, %c0_63, %c0_64] : memref<3x128x128xbf16, #tpu.memory_space<vmem>>, vector<1x128x128xbf16>
    %71 = vector.shape_cast %70 : vector<1x128x128xbf16> to vector<128x128xbf16>
    %cst_65 = arith.constant dense<0.000000e+00> : vector<32x128xf32>
    %72 = tpu.matmul %69, %71, %cst_65 {dimension_numbers = #tpu.dot_dimension_numbers<[1], [0], [0], [1], [0, 0, 1, 1], [], []>} : vector<32x128xbf16>, vector<128x128xbf16>, vector<32x128xf32> -> vector<32x128xf32>
    %73 = arith.addf %67, %72 : vector<32x128xf32>
    %cst_66 = arith.constant dense<0.000000e+00> : vector<128xf32>
    %74 = vector.multi_reduction <add>, %73, %cst_66 [0] : vector<32x128xf32> to vector<128xf32>
    %75 = vector.shape_cast %74 : vector<128xf32> to vector<1x128xf32>
    %76 = arith.mulf %73, %73 : vector<32x128xf32>
    %cst_67 = arith.constant dense<0.000000e+00> : vector<128xf32>
    %77 = vector.multi_reduction <add>, %76, %cst_67 [0] : vector<32x128xf32> to vector<128xf32>
    %78 = vector.shape_cast %77 : vector<128xf32> to vector<1x128xf32>
    %c0_68 = arith.constant 0 : index
    %c0_69 = arith.constant 0 : index
    %79 = vector.load %arg7[%c0_68, %c0_69] : memref<128x128xf32, #tpu.memory_space<vmem>>, vector<128x128xf32>
    %cst_70 = arith.constant dense<0.000000e+00> : vector<1x128xf32>
    %80 = tpu.matmul %75, %79, %cst_70 {dimension_numbers = #tpu.dot_dimension_numbers<[1], [0], [0], [1], [0, 0, 1, 1], [], []>, precision = #tpu.contract_precision<fp32>} : vector<1x128xf32>, vector<128x128xf32>, vector<1x128xf32> -> vector<1x128xf32>
    %c0_71 = arith.constant 0 : index
    %c0_72 = arith.constant 0 : index
    %81 = vector.load %arg7[%c0_71, %c0_72] : memref<128x128xf32, #tpu.memory_space<vmem>>, vector<128x128xf32>
    %cst_73 = arith.constant dense<0.000000e+00> : vector<1x128xf32>
    %82 = tpu.matmul %78, %81, %cst_73 {dimension_numbers = #tpu.dot_dimension_numbers<[1], [0], [0], [1], [0, 0, 1, 1], [], []>, precision = #tpu.contract_precision<fp32>} : vector<1x128xf32>, vector<128x128xf32>, vector<1x128xf32> -> vector<1x128xf32>
    %cst_74 = arith.constant 0.001953125 : f32
    %83 = vector.broadcast %cst_74 : f32 to vector<1x128xf32>
    %84 = arith.mulf %80, %83 : vector<1x128xf32>
    %cst_75 = arith.constant 0.001953125 : f32
    %85 = vector.broadcast %cst_75 : f32 to vector<1x128xf32>
    %86 = arith.mulf %82, %85 : vector<1x128xf32>
    %87 = arith.mulf %84, %84 : vector<1x128xf32>
    %88 = arith.subf %86, %87 : vector<1x128xf32>
    %c0_76 = arith.constant 0 : index
    %c0_77 = arith.constant 0 : index
    %89 = vector.load %arg6[%c0_76, %c0_77] : memref<2x128xf32, #tpu.memory_space<vmem>>, vector<1x128xf32>
    %cst_78 = arith.constant 9.99999974E-6 : f32
    %90 = vector.broadcast %cst_78 : f32 to vector<1x128xf32>
    %91 = arith.addf %88, %90 : vector<1x128xf32>
    %92 = math.rsqrt %91 : vector<1x128xf32>
    %93 = arith.mulf %89, %92 : vector<1x128xf32>
    %c1_79 = arith.constant 1 : index
    %c0_80 = arith.constant 0 : index
    %94 = vector.load %arg6[%c1_79, %c0_80] : memref<2x128xf32, #tpu.memory_space<vmem>>, vector<1x128xf32>
    %95 = arith.mulf %84, %93 : vector<1x128xf32>
    %96 = arith.subf %94, %95 : vector<1x128xf32>
    %97 = vector.broadcast %93 : vector<1x128xf32> to vector<32x128xf32>
    %98 = arith.mulf %73, %97 : vector<32x128xf32>
    %99 = vector.broadcast %96 : vector<1x128xf32> to vector<32x128xf32>
    %100 = arith.addf %98, %99 : vector<32x128xf32>
    %cst_81 = arith.constant 0.000000e+00 : f32
    %101 = vector.broadcast %cst_81 : f32 to vector<32x128xf32>
    %102 = arith.maximumf %100, %101 : vector<32x128xf32>
    %c0_82 = arith.constant 0 : index
    %c0_83 = arith.constant 0 : index
    %103 = vector.load %arg8[%c0_82, %c0_83] : memref<32x128xf32, #tpu.memory_space<vmem>>, vector<32x128xf32>
    tpu.vector_store %arg8[%c0_82, %c0_83], %102 {strides = array<i32>} : memref<32x128xf32, #tpu.memory_space<vmem>>, vector<32x128xf32>,
    return
  }
  func.func @transform_0(%arg0: i32) -> (i32, i32, i32) {
    %c0_i32 = arith.constant 0 : i32
    %c0_i32_0 = arith.constant 0 : i32
    %c0_i32_1 = arith.constant 0 : i32
    %c0_i32_2 = arith.constant 0 : i32
    return %c0_i32, %c0_i32_0, %c0_i32_1 : i32, i32, i32
  }
  func.func @transform_1(%arg0: i32) -> (i32, i32, i32) {
    %c0_i32 = arith.constant 0 : i32
    %c0_i32_0 = arith.constant 0 : i32
    %c0_i32_1 = arith.constant 0 : i32
    %c0_i32_2 = arith.constant 0 : i32
    return %c0_i32, %c0_i32_0, %c0_i32_1 : i32, i32, i32
  }
  func.func @transform_2(%arg0: i32) -> (i32, i32) {
    %c0_i32 = arith.constant 0 : i32
    %c0_i32_0 = arith.constant 0 : i32
    %c0_i32_1 = arith.constant 0 : i32
    return %c0_i32, %c0_i32_0 : i32, i32
  }
  func.func @transform_3(%arg0: i32) -> (i32, i32) {
    %c0_i32 = arith.constant 0 : i32
    %c0_i32_0 = arith.constant 0 : i32
    %c0_i32_1 = arith.constant 0 : i32
    return %c0_i32, %c0_i32_0 : i32, i32
  }
  func.func @transform_4(%arg0: i32) -> (i32, i32, i32) {
    %c0_i32 = arith.constant 0 : i32
    %c0_i32_0 = arith.constant 0 : i32
    %c0_i32_1 = arith.constant 0 : i32
    %c0_i32_2 = arith.constant 0 : i32
    return %c0_i32, %c0_i32_0, %c0_i32_1 : i32, i32, i32
  }
  func.func @transform_5(%arg0: i32) -> (i32, i32) {
    %c0_i32 = arith.constant 0 : i32
    %c0_i32_0 = arith.constant 0 : i32
    %c0_i32_1 = arith.constant 0 : i32
    return %c0_i32, %c0_i32_0 : i32, i32
  }
  func.func @transform_6(%arg0: i32) -> (i32, i32) {
    %c0_i32 = arith.constant 0 : i32
    %c0_i32_0 = arith.constant 0 : i32
    %c0_i32_1 = arith.constant 0 : i32
    return %c0_i32, %c0_i32_0 : i32, i32
  }
  func.func @transform_7(%arg0: i32) -> (i32, i32) {
    %c0_i32 = arith.constant 0 : i32
    %c0_i32_0 = arith.constant 0 : i32
    %c0_i32_1 = arith.constant 0 : i32
    return %c0_i32, %c0_i32_0 : i32, i32
  }
}

</mosaic_0001>

<llo_original>
// kernel: tpu_custom_call.1
$region0: #{tpu_custom_call.1}
  #allocation0 [shape = 'u32[]', space=smem, size = 0x4, offset = 0x4, fixed_abs, tag = 'smem constant byte address 0x4 - core index']
  #allocation1 [shape = 'u32[144,128]{1,0:T(1,128)}', space=vmem, size = 0x12000, scoped, tag = 'internal scratch']
  #allocation2 [shape = 'bf16[2,18,128]{2,1,0:T(8,128)(2,1)}', space=vmem, size = 0x3000, scoped, tag = 'scratch operand']
  %s0 = inlined_call_operand.vmem [shape: bf16[2,18,64], index: 0, kind: input, shape index: {}]
  %s1 = inlined_call_operand.hbm [shape: bf16[3,64,128], index: 1, kind: input, shape index: {}]
  %s2 = inlined_call_operand.vmem [shape: f32[2,128], index: 2, kind: input, shape index: {}]
  %s3 = inlined_call_operand.hbm [shape: f32[128,128], index: 3, kind: input, shape index: {}]
  %s4 = inlined_call_operand.hbm [shape: bf16[3,128,128], index: 4, kind: input, shape index: {}]
  %s5 = inlined_call_operand.vmem [shape: f32[2,128], index: 5, kind: input, shape index: {}]
  %s6 = inlined_call_operand.hbm [shape: f32[128,128], index: 6, kind: input, shape index: {}]
  %s7 = inlined_call_operand.hbm [shape: f32[32,128], index: 7, kind: output, shape index: {}]
  %s8 = sld [smem:[#allocation0]]
  $region54: #{tpu_custom_call.1} parent=0
    _
  %s10 = ssub.s32 1, %s8
  %s11 = scalar_select 0, %s10, %s8
  $region1: #{tpu_custom_call.1} parent=0
    #allocation3 [shape = 'u8[49152]{0}', space=vmem, size = 0xc000, scoped, tag = 'input window, operand 1, single buffered']
    #allocation4 [shape = 's32[1]{0}', space=sflag, size = 0x4, scoped, tag = 'scoped memory for tpu_custom_call.1']
    #allocation5 [shape = 's32[1]{0}', space=sflag, size = 0x4, scoped, tag = 'scoped memory for tpu_custom_call.1']
    #allocation6 [shape = 'u8[65536]{0}', space=vmem, size = 0x10000, scoped, tag = 'input window, operand 3, single buffered']
    #allocation7 [shape = 's32[1]{0}', space=sflag, size = 0x4, scoped, tag = 'scoped memory for tpu_custom_call.1']
    #allocation8 [shape = 'u8[98304]{0}', space=vmem, size = 0x18000, scoped, tag = 'input window, operand 4, single buffered']
    #allocation9 [shape = 'u8[65536]{0}', space=vmem, size = 0x10000, scoped, tag = 'input window, operand 6, single buffered']
    #allocation10 [shape = 's32[1]{0}', space=sflag, size = 0x4, scoped, tag = 'scoped memory for tpu_custom_call.1']
    #allocation11 [shape = 'u8[16384]{0}', space=vmem, size = 0x4000, scoped, tag = 'output window, operand 0, single buffered']
    %12 = vsyncpa [#allocation4], 0
    %13 = vsyncpa [#allocation7], 0
    %14 = vsyncpa [#allocation10], 0
    %15 = vsyncpa [#allocation5], 0
    // Predicated region
    $region2: #{tpu_custom_call.1} parent=1 // pred_check
      _
    $region3: #{tpu_custom_call.1} parent=1 // pred_check_branch
      %17 = sbr.rel (0) target = $region5
    $region4: #{tpu_custom_call.1} parent=1 // pred_region
      _
    $region5: #{tpu_custom_call.1} parent=1 // pred_fallthru
      _
    // Predicated region
    $region6: #{tpu_custom_call.1} parent=1 // pred_check
      _
    $region7: #{tpu_custom_call.1} parent=1 // pred_check_branch
      %19 = sbr.rel (0) target = $region9
    $region8: #{tpu_custom_call.1} parent=1 // pred_region
      %s21 = ssub.s32 1536, 1536
      %22 = vsyncadd [#allocation4], %s21
      %s23 = sshll.u32 [#allocation3], 4
      %s24 = int_to_ptr.vmem [resolvable:$true] %s23
      %29 = dma.hbm_to_vmem [thread:$0]  %s1, 1536, %s24, [#allocation4], 64, 64, 4
    $region9: #{tpu_custom_call.1} parent=1 // pred_fallthru
      _
    // Predicated region
    $region10: #{tpu_custom_call.1} parent=1 // pred_check
      _
    $region11: #{tpu_custom_call.1} parent=1 // pred_check_branch
      %31 = sbr.rel (0) target = $region13
    $region12: #{tpu_custom_call.1} parent=1 // pred_region
      _
    $region13: #{tpu_custom_call.1} parent=1 // pred_fallthru
      _
    // Predicated region
    $region14: #{tpu_custom_call.1} parent=1 // pred_check
      _
    $region15: #{tpu_custom_call.1} parent=1 // pred_check_branch
      %33 = sbr.rel (0) target = $region17
    $region16: #{tpu_custom_call.1} parent=1 // pred_region
      %s35 = ssub.s32 2048, 2048
      %36 = vsyncadd [#allocation7], %s35
      %s37 = sshll.u32 [#allocation6], 4
      %s38 = int_to_ptr.vmem [resolvable:$true] %s37
      %43 = dma.hbm_to_vmem [thread:$0]  %s3, 2048, %s38, [#allocation7], 128, 128, 8
    $region17: #{tpu_custom_call.1} parent=1 // pred_fallthru
      _
    // Predicated region
    $region18: #{tpu_custom_call.1} parent=1 // pred_check
      _
    $region19: #{tpu_custom_call.1} parent=1 // pred_check_branch
      %45 = sbr.rel (0) target = $region21
    $region20: #{tpu_custom_call.1} parent=1 // pred_region
      %s47 = ssub.s32 3072, 3072
      %48 = vsyncadd [#allocation7], %s47
      %s49 = sshll.u32 [#allocation8], 4
      %s50 = int_to_ptr.vmem [resolvable:$true] %s49
      %55 = dma.hbm_to_vmem [thread:$0]  %s4, 3072, %s50, [#allocation7], 64, 64, 4
    $region21: #{tpu_custom_call.1} parent=1 // pred_fallthru
      _
    // Predicated region
    $region22: #{tpu_custom_call.1} parent=1 // pred_check
      _
    $region23: #{tpu_custom_call.1} parent=1 // pred_check_branch
      %57 = sbr.rel (0) target = $region25
    $region24: #{tpu_custom_call.1} parent=1 // pred_region
      _
    $region25: #{tpu_custom_call.1} parent=1 // pred_fallthru
      _
    // Predicated region
    $region26: #{tpu_custom_call.1} parent=1 // pred_check
      _
    $region27: #{tpu_custom_call.1} parent=1 // pred_check_branch
      %59 = sbr.rel (0) target = $region29
    $region28: #{tpu_custom_call.1} parent=1 // pred_region
      %s61 = ssub.s32 2048, 2048
      %62 = vsyncadd [#allocation10], %s61
      %s63 = sshll.u32 [#allocation9], 4
      %s64 = int_to_ptr.vmem [resolvable:$true] %s63
      %69 = dma.hbm_to_vmem [thread:$0]  %s6, 2048, %s64, [#allocation10], 128, 128, 8
    $region29: #{tpu_custom_call.1} parent=1 // pred_fallthru
      _
    // Predicated region
    $region30: #{tpu_custom_call.1} parent=1 // pred_check
      _
    $region31: #{tpu_custom_call.1} parent=1 // pred_check_branch
      %71 = sbr.rel (0) target = $region33
    $region32: #{tpu_custom_call.1} parent=1 // pred_region
      %72 = dma.done [#allocation4], 1536
    $region33: #{tpu_custom_call.1} parent=1 // pred_fallthru
      _
    // Predicated region
    $region34: #{tpu_custom_call.1} parent=1 // pred_check
      _
    $region35: #{tpu_custom_call.1} parent=1 // pred_check_branch
      %74 = sbr.rel (0) target = $region37
    $region36: #{tpu_custom_call.1} parent=1 // pred_region
      %75 = dma.done [#allocation7], 2048
    $region37: #{tpu_custom_call.1} parent=1 // pred_fallthru
      _
    // Predicated region
    $region38: #{tpu_custom_call.1} parent=1 // pred_check
      _
    $region39: #{tpu_custom_call.1} parent=1 // pred_check_branch
      %77 = sbr.rel (0) target = $region41
    $region40: #{tpu_custom_call.1} parent=1 // pred_region
      %78 = dma.done [#allocation7], 3072
    $region41: #{tpu_custom_call.1} parent=1 // pred_fallthru
      _
    // Predicated region
    $region42: #{tpu_custom_call.1} parent=1 // pred_check
      _
    $region43: #{tpu_custom_call.1} parent=1 // pred_check_branch
      %80 = sbr.rel (0) target = $region45
    $region44: #{tpu_custom_call.1} parent=1 // pred_region
      %81 = dma.done [#allocation10], 2048
    $region45: #{tpu_custom_call.1} parent=1 // pred_fallthru
      _
    %v83 = vld [vmem:[%s0] sm:$0xf]
    %v84 = vld [vmem:[%s0 + $0x4] sm:$0xf]
    %v85 = vld [vmem:[%s0 + $0xc] sm:$0xf]
    %v86 = vld [vmem:[%s0 + $0x10] sm:$0xf]
    %v87 = vld [vmem:[#allocation3] sm:$0xf]
    %v88 = vld [vmem:[#allocation3 + $0x4] sm:$0xf]
    %v89 = vld [vmem:[#allocation3 + $0x8] sm:$0xf]
    %v90 = vld [vmem:[#allocation3 + $0xc] sm:$0xf]
    %v91 = vld [vmem:[#allocation3 + $0x10] sm:$0xf]
    %v92 = vld [vmem:[#allocation3 + $0x14] sm:$0xf]
    %v93 = vld [vmem:[#allocation3 + $0x18] sm:$0xf]
    %v94 = vld [vmem:[#allocation3 + $0x1c] sm:$0xf]
    %v95 = vld [vmem:[%s0 + $0x8] sm:$0x1]
    %v96 = vld [vmem:[%s0 + $0x14] sm:$0x1]
    %vm97 = vsmask.f32 3328
    %vm98 = vsmask.f32 7440
    %vm99 = vmor %vm97, %vm98
    %v101 = vshrl.u32 %v83, 16
    %v103 = vrot.slane %v101, 4
    %v104 = vshll.u32 %v83, 16
    %v106 = vrot.slane %v104, 5
    %v107 = vor.u32 %v103, %v106
    %v108 = vrot.slane %v107, 4
    %v110 = vshll.u32 %v84, 16
    %v112 = vrot.slane %v110, 5
    %v113 = vsel %vm99, %v108, %v112
    %v114 = vshrl.u32 %v84, 16
    %v116 = vrot.slane %v114, 4
    %v117 = vor.u32 %v116, %v112
    %v118 = vrot.slane %v117, 4
    %v120 = vshll.u32 %v95, 16
    %v122 = vrot.slane %v120, 5
    %v123 = vsel %vm99, %v118, %v122
    %v125 = vshrl.u32 %v85, 16
    %v127 = vrot.slane %v125, 4
    %v128 = vshll.u32 %v85, 16
    %v130 = vrot.slane %v128, 5
    %v131 = vor.u32 %v127, %v130
    %v132 = vrot.slane %v131, 4
    %v134 = vshll.u32 %v86, 16
    %v136 = vrot.slane %v134, 5
    %v137 = vsel %vm99, %v132, %v136
    %v138 = vshrl.u32 %v86, 16
    %v140 = vrot.slane %v138, 4
    %v141 = vor.u32 %v140, %v136
    %v142 = vrot.slane %v141, 4
    %v144 = vshll.u32 %v96, 16
    %v146 = vrot.slane %v144, 5
    %v147 = vsel %vm99, %v142, %v146
    %s148 = scalar_lea.vmem [#allocation3], 32
    %v149 = vld [vmem:[%s148] sm:$0xf]
    %v150 = vld [vmem:[%s148 + $0x4] sm:$0xf]
    %v151 = vld [vmem:[%s148 + $0x8] sm:$0xf]
    %v152 = vld [vmem:[%s148 + $0xc] sm:$0xf]
    %v153 = vld [vmem:[%s148 + $0x10] sm:$0xf]
    %v154 = vld [vmem:[%s148 + $0x14] sm:$0xf]
    %v155 = vld [vmem:[%s148 + $0x18] sm:$0xf]
    %v156 = vld [vmem:[%s148 + $0x1c] sm:$0xf]
    %v157 = vunpack.c.l.b16 %v113
    %v158 = vunpack.c.l.b16 %v123
    %v159 = vunpack.c.l.b16 %v137
    %v160 = vunpack.c.l.b16 %v147
    %v161 = vpack.c.b16 %v158, %v157
    %v162 = vpack.c.b16 %v160, %v159
    %v171 = vunpack.c.l.b16 %v149
    %v172 = vunpack.c.l.b16 %v150
    %v173 = vunpack.c.l.b16 %v151
    %v174 = vunpack.c.l.b16 %v152
    %v175 = vunpack.c.l.b16 %v153
    %v176 = vunpack.c.l.b16 %v154
    %v177 = vunpack.c.l.b16 %v155
    %v178 = vunpack.c.l.b16 %v156
    %v179 = vpack.c.b16 %v172, %v171
    %v180 = vpack.c.b16 %v174, %v173
    %v181 = vpack.c.b16 %v176, %v175
    %v182 = vpack.c.b16 %v178, %v177
    %vm187 = vcmask 523264
    %v189 = vsel %vm187, %v161, 0
    %v192 = vsel %vm187, %v162, 0
    %194 = vmatprep.subr.bf16.mxu0 0
    %195 = vmatpush1.bf16.msra.mxu0 %v179
    %196 = vmatprep.subr.bf16.mxu0 0
    %197 = vmatpush1.bf16.msra.mxu0 %v180
    %198 = vmatprep.subr.bf16.mxu0 0
    %199 = vmatpush1.bf16.msra.mxu0 %v181
    %200 = vmatprep.subr.bf16.mxu0 0
    %201 = vmatpush1.bf16.msra.mxu0 %v182
    %202 = vmatprep.subr.bf16.mxu0 0
    %203 = vmatpush1.bf16.msra.mxu0 0
    %204 = vmatprep.subr.bf16.mxu0 0
    %205 = vmatpush1.bf16.msra.mxu0 0
    %206 = vmatprep.subr.bf16.mxu0 0
    %207 = vmatpush1.bf16.msra.mxu0 0
    %208 = vmatprep.subr.bf16.mxu0 0
    %209 = vmatpush1.bf16.msra.mxu0 0
    %210 = vmatprep.subr.bf16.mxu0 0
    %211 = vmatpush1.bf16.msra.mxu0 0
    %212 = vmatprep.subr.bf16.mxu0 0
    %213 = vmatpush1.bf16.msra.mxu0 0
    %214 = vmatprep.subr.bf16.mxu0 0
    %215 = vmatpush1.bf16.msra.mxu0 0
    %216 = vmatprep.subr.bf16.mxu0 0
    %217 = vmatpush1.bf16.msra.mxu0 0
    %218 = vmatprep.subr.bf16.mxu0 0
    %219 = vmatpush1.bf16.msra.mxu0 0
    %220 = vmatprep.subr.bf16.mxu0 0
    %221 = vmatpush1.bf16.msra.mxu0 0
    %222 = vmatprep.subr.bf16.mxu0 0
    %223 = vmatpush1.bf16.msra.mxu0 0
    %224 = vmatprep.subr.bf16.mxu0 0
    %225 = vmatpush1.bf16.msra.mxu0 0
    %226 = vmatprep.mubr.bf16.mxu0 0
    %227 = vmatmul.mubr.bf16.gmra.mrb[0].mxu0 %v189
    %v228 = vpop.f32.mrb[0].mxu0
    %v229 = vadd.f32 0.0, %v228
    %v230 = vpop.f32.mrb[0].mxu0
    %v231 = vpop.f32.mrb[0].mxu0
    %v232 = vadd.f32 0.0, %v231
    %v233 = vpop.f32.mrb[0].mxu0
    %234 = vmatprep.mubr.bf16.mxu0 0
    %235 = vmatmul.mubr.bf16.gmra.mrb[0].mxu0 %v192
    %v236 = vpop.f32.mrb[0].mxu0
    %v237 = vadd.f32 0.0, %v236
    %v238 = vpop.f32.mrb[0].mxu0
    %v239 = vpop.f32.mrb[0].mxu0
    %v240 = vadd.f32 0.0, %v239
    %v241 = vpop.f32.mrb[0].mxu0
    %242 = vdwg.mxu0
    %v247 = vunpack.c.l.b16 %v83
    %v248 = vunpack.c.l.b16 %v84
    %v249 = vunpack.c.l.b16 %v85
    %v250 = vunpack.c.l.b16 %v86
    %v251 = vpack.c.b16 %v248, %v247
    %v252 = vpack.c.b16 %v250, %v249
    %v261 = vunpack.c.l.b16 %v87
    %v262 = vunpack.c.l.b16 %v88
    %v263 = vunpack.c.l.b16 %v89
    %v264 = vunpack.c.l.b16 %v90
    %v265 = vunpack.c.l.b16 %v91
    %v266 = vunpack.c.l.b16 %v92
    %v267 = vunpack.c.l.b16 %v93
    %v268 = vunpack.c.l.b16 %v94
    %v269 = vpack.c.b16 %v262, %v261
    %v270 = vpack.c.b16 %v264, %v263
    %v271 = vpack.c.b16 %v266, %v265
    %v272 = vpack.c.b16 %v268, %v267
    %v278 = vsel %vm187, %v251, 0
    %v281 = vsel %vm187, %v252, 0
    %283 = vmatprep.subr.bf16.mxu0 0
    %284 = vmatpush1.bf16.msra.mxu0 %v269
    %285 = vmatprep.subr.bf16.mxu0 0
    %286 = vmatpush1.bf16.msra.mxu0 %v270
    %287 = vmatprep.subr.bf16.mxu0 0
    %288 = vmatpush1.bf16.msra.mxu0 %v271
    %289 = vmatprep.subr.bf16.mxu0 0
    %290 = vmatpush1.bf16.msra.mxu0 %v272
    %291 = vmatprep.subr.bf16.mxu0 0
    %292 = vmatpush1.bf16.msra.mxu0 0
    %293 = vmatprep.subr.bf16.mxu0 0
    %294 = vmatpush1.bf16.msra.mxu0 0
    %295 = vmatprep.subr.bf16.mxu0 0
    %296 = vmatpush1.bf16.msra.mxu0 0
    %297 = vmatprep.subr.bf16.mxu0 0
    %298 = vmatpush1.bf16.msra.mxu0 0
    %299 = vmatprep.subr.bf16.mxu0 0
    %300 = vmatpush1.bf16.msra.mxu0 0
    %301 = vmatprep.subr.bf16.mxu0 0
    %302 = vmatpush1.bf16.msra.mxu0 0
    %303 = vmatprep.subr.bf16.mxu0 0
    %304 = vmatpush1.bf16.msra.mxu0 0
    %305 = vmatprep.subr.bf16.mxu0 0
    %306 = vmatpush1.bf16.msra.mxu0 0
    %307 = vmatprep.subr.bf16.mxu0 0
    %308 = vmatpush1.bf16.msra.mxu0 0
    %309 = vmatprep.subr.bf16.mxu0 0
    %310 = vmatpush1.bf16.msra.mxu0 0
    %311 = vmatprep.subr.bf16.mxu0 0
    %312 = vmatpush1.bf16.msra.mxu0 0
    %313 = vmatprep.subr.bf16.mxu0 0
    %314 = vmatpush1.bf16.msra.mxu0 0
    %315 = vmatprep.mubr.bf16.mxu0 0
    %316 = vmatmul.mubr.bf16.gmra.mrb[0].mxu0 %v278
    %v317 = vpop.f32.mrb[0].mxu0
    %v318 = vadd.f32 %v229, %v317
    %v319 = vpop.f32.mrb[0].mxu0
    %v320 = vpop.f32.mrb[0].mxu0
    %v321 = vadd.f32 %v232, %v320
    %v322 = vpop.f32.mrb[0].mxu0
    %323 = vmatprep.mubr.bf16.mxu0 0
    %324 = vmatmul.mubr.bf16.gmra.mrb[0].mxu0 %v281
    %v325 = vpop.f32.mrb[0].mxu0
    %v326 = vadd.f32 %v237, %v325
    %v327 = vpop.f32.mrb[0].mxu0
    %v328 = vpop.f32.mrb[0].mxu0
    %v329 = vadd.f32 %v240, %v328
    %v330 = vpop.f32.mrb[0].mxu0
    %331 = vdwg.mxu0
    %v332 = vld [vmem:[%s0] sm:$0xe]
    %v333 = vld [vmem:[%s0 + $0xc] sm:$0xe]
    %vm338 = vcmask 1042432
    %vm339 = vcmask 1046532
    %vm340 = vmor %vm338, %vm339
    %v341 = vrot.slane %v332, 5
    %v342 = vrot.slane %v341, 4
    %v343 = vrot.slane %v84, 5
    %v344 = vsel %vm340, %v342, %v343
    %v345 = vrot.slane %v343, 4
    %v346 = vrot.slane %v95, 5
    %v347 = vsel %vm340, %v345, %v346
    %v348 = vrot.slane %v333, 5
    %v349 = vrot.slane %v348, 4
    %v350 = vrot.slane %v86, 5
    %v351 = vsel %vm340, %v349, %v350
    %v352 = vrot.slane %v350, 4
    %v353 = vrot.slane %v96, 5
    %v354 = vsel %vm340, %v352, %v353
    %s355 = scalar_lea.vmem [#allocation3], 64
    %v356 = vld [vmem:[%s355] sm:$0xf]
    %v357 = vld [vmem:[%s355 + $0x4] sm:$0xf]
    %v358 = vld [vmem:[%s355 + $0x8] sm:$0xf]
    %v359 = vld [vmem:[%s355 + $0xc] sm:$0xf]
    %v360 = vld [vmem:[%s355 + $0x10] sm:$0xf]
    %v361 = vld [vmem:[%s355 + $0x14] sm:$0xf]
    %v362 = vld [vmem:[%s355 + $0x18] sm:$0xf]
    %v363 = vld [vmem:[%s355 + $0x1c] sm:$0xf]
    %v364 = vunpack.c.l.b16 %v344
    %v365 = vunpack.c.l.b16 %v347
    %v366 = vunpack.c.l.b16 %v351
    %v367 = vunpack.c.l.b16 %v354
    %v368 = vpack.c.b16 %v365, %v364
    %v369 = vpack.c.b16 %v367, %v366
    %v378 = vunpack.c.l.b16 %v356
    %v379 = vunpack.c.l.b16 %v357
    %v380 = vunpack.c.l.b16 %v358
    %v381 = vunpack.c.l.b16 %v359
    %v382 = vunpack.c.l.b16 %v360
    %v383 = vunpack.c.l.b16 %v361
    %v384 = vunpack.c.l.b16 %v362
    %v385 = vunpack.c.l.b16 %v363
    %v386 = vpack.c.b16 %v379, %v378
    %v387 = vpack.c.b16 %v381, %v380
    %v388 = vpack.c.b16 %v383, %v382
    %v389 = vpack.c.b16 %v385, %v384
    %v395 = vsel %vm187, %v368, 0
    %v398 = vsel %vm187, %v369, 0
    %400 = vmatprep.subr.bf16.mxu0 0
    %401 = vmatpush1.bf16.msra.mxu0 %v386
    %402 = vmatprep.subr.bf16.mxu0 0
    %403 = vmatpush1.bf16.msra.mxu0 %v387
    %404 = vmatprep.subr.bf16.mxu0 0
    %405 = vmatpush1.bf16.msra.mxu0 %v388
    %406 = vmatprep.subr.bf16.mxu0 0
    %407 = vmatpush1.bf16.msra.mxu0 %v389
    %408 = vmatprep.subr.bf16.mxu0 0
    %409 = vmatpush1.bf16.msra.mxu0 0
    %410 = vmatprep.subr.bf16.mxu0 0
    %411 = vmatpush1.bf16.msra.mxu0 0
    %412 = vmatprep.subr.bf16.mxu0 0
    %413 = vmatpush1.bf16.msra.mxu0 0
    %414 = vmatprep.subr.bf16.mxu0 0
    %415 = vmatpush1.bf16.msra.mxu0 0
    %416 = vmatprep.subr.bf16.mxu0 0
    %417 = vmatpush1.bf16.msra.mxu0 0
    %418 = vmatprep.subr.bf16.mxu0 0
    %419 = vmatpush1.bf16.msra.mxu0 0
    %420 = vmatprep.subr.bf16.mxu0 0
    %421 = vmatpush1.bf16.msra.mxu0 0
    %422 = vmatprep.subr.bf16.mxu0 0
    %423 = vmatpush1.bf16.msra.mxu0 0
    %424 = vmatprep.subr.bf16.mxu0 0
    %425 = vmatpush1.bf16.msra.mxu0 0
    %426 = vmatprep.subr.bf16.mxu0 0
    %427 = vmatpush1.bf16.msra.mxu0 0
    %428 = vmatprep.subr.bf16.mxu0 0
    %429 = vmatpush1.bf16.msra.mxu0 0
    %430 = vmatprep.subr.bf16.mxu0 0
    %431 = vmatpush1.bf16.msra.mxu0 0
    %432 = vmatprep.mubr.bf16.mxu0 0
    %433 = vmatmul.mubr.bf16.gmra.mrb[0].mxu0 %v395
    %v434 = vpop.f32.mrb[0].mxu0
    %v435 = vadd.f32 0.0, %v434
    %v436 = vpop.f32.mrb[0].mxu0
    %v437 = vpop.f32.mrb[0].mxu0
    %v438 = vadd.f32 0.0, %v437
    %v439 = vpop.f32.mrb[0].mxu0
    %440 = vmatprep.mubr.bf16.mxu0 0
    %441 = vmatmul.mubr.bf16.gmra.mrb[0].mxu0 %v398
    %v442 = vpop.f32.mrb[0].mxu0
    %v443 = vadd.f32 0.0, %v442
    %v444 = vpop.f32.mrb[0].mxu0
    %v445 = vpop.f32.mrb[0].mxu0
    %v446 = vadd.f32 0.0, %v445
    %v447 = vpop.f32.mrb[0].mxu0
    %448 = vdwg.mxu0
    %v449 = vadd.f32 %v318, %v435
    %v450 = vadd.f32 %v321, %v438
    %v451 = vadd.f32 %v326, %v443
    %v452 = vadd.f32 %v329, %v446
    %v453 = vadd.f32 %v449, %v450
    %v454 = vadd.f32 %v453, %v451
    %v455 = vadd.f32 %v454, %v452
    %v456 = vrot.slane %v455, 4
    %v457 = vadd.f32 %v455, %v456
    %v458 = vrot.slane %v457, 2
    %v459 = vadd.f32 %v457, %v458
    %v460 = vrot.slane %v459, 1
    %v461 = vadd.f32 %v459, %v460
    %v462 = vmul.f32 %v449, %v449
    %v463 = vmul.f32 %v450, %v450
    %v464 = vmul.f32 %v451, %v451
    %v465 = vmul.f32 %v452, %v452
    %v466 = vadd.f32 %v462, %v463
    %v467 = vadd.f32 %v466, %v464
    %v468 = vadd.f32 %v467, %v465
    %v469 = vrot.slane %v468, 4
    %v470 = vadd.f32 %v468, %v469
    %v471 = vrot.slane %v470, 2
    %v472 = vadd.f32 %v470, %v471
    %v473 = vrot.slane %v472, 1
    %v474 = vadd.f32 %v472, %v473
    %v475 = vld [vmem:[#allocation6] sm:$0xff]
    %v476 = vld [vmem:[#allocation6 + $0x8] sm:$0xff]
    %v477 = vld [vmem:[#allocation6 + $0x10] sm:$0xff]
    %v478 = vld [vmem:[#allocation6 + $0x18] sm:$0xff]
    %v479 = vld [vmem:[#allocation6 + $0x20] sm:$0xff]
    %v480 = vld [vmem:[#allocation6 + $0x28] sm:$0xff]
    %v481 = vld [vmem:[#allocation6 + $0x30] sm:$0xff]
    %v482 = vld [vmem:[#allocation6 + $0x38] sm:$0xff]
    %v483 = vld [vmem:[#allocation6 + $0x40] sm:$0xff]
    %v484 = vld [vmem:[#allocation6 + $0x48] sm:$0xff]
    %v485 = vld [vmem:[#allocation6 + $0x50] sm:$0xff]
    %v486 = vld [vmem:[#allocation6 + $0x58] sm:$0xff]
    %v487 = vld [vmem:[#allocation6 + $0x60] sm:$0xff]
    %v488 = vld [vmem:[#allocation6 + $0x68] sm:$0xff]
    %v489 = vld [vmem:[#allocation6 + $0x70] sm:$0xff]
    %v490 = vld [vmem:[#allocation6 + $0x78] sm:$0xff]
    %491 = vmatprep.subr.mxu0 0.0
    %v492 = vand.u32 %v475, 4294901760
    %493 = vmatpush1.msra.mxu0 %v492
    %494 = vmatprep.subr.mxu0 0.0
    %v495 = vand.u32 %v476, 4294901760
    %496 = vmatpush1.msra.mxu0 %v495
    %497 = vmatprep.subr.mxu0 0.0
    %v498 = vand.u32 %v477, 4294901760
    %499 = vmatpush1.msra.mxu0 %v498
    %500 = vmatprep.subr.mxu0 0.0
    %v501 = vand.u32 %v478, 4294901760
    %502 = vmatpush1.msra.mxu0 %v501
    %503 = vmatprep.subr.mxu0 0.0
    %v504 = vand.u32 %v479, 4294901760
    %505 = vmatpush1.msra.mxu0 %v504
    %506 = vmatprep.subr.mxu0 0.0
    %v507 = vand.u32 %v480, 4294901760
    %508 = vmatpush1.msra.mxu0 %v507
    %509 = vmatprep.subr.mxu0 0.0
    %v510 = vand.u32 %v481, 4294901760
    %511 = vmatpush1.msra.mxu0 %v510
    %512 = vmatprep.subr.mxu0 0.0
    %v513 = vand.u32 %v482, 4294901760
    %514 = vmatpush1.msra.mxu0 %v513
    %515 = vmatprep.subr.mxu0 0.0
    %v516 = vand.u32 %v483, 4294901760
    %517 = vmatpush1.msra.mxu0 %v516
    %518 = vmatprep.subr.mxu0 0.0
    %v519 = vand.u32 %v484, 4294901760
    %520 = vmatpush1.msra.mxu0 %v519
    %521 = vmatprep.subr.mxu0 0.0
    %v522 = vand.u32 %v485, 4294901760
    %523 = vmatpush1.msra.mxu0 %v522
    %524 = vmatprep.subr.mxu0 0.0
    %v525 = vand.u32 %v486, 4294901760
    %526 = vmatpush1.msra.mxu0 %v525
    %527 = vmatprep.subr.mxu0 0.0
    %v528 = vand.u32 %v487, 4294901760
    %529 = vmatpush1.msra.mxu0 %v528
    %530 = vmatprep.subr.mxu0 0.0
    %v531 = vand.u32 %v488, 4294901760
    %532 = vmatpush1.msra.mxu0 %v531
    %533 = vmatprep.subr.mxu0 0.0
    %v534 = vand.u32 %v489, 4294901760
    %535 = vmatpush1.msra.mxu0 %v534
    %536 = vmatprep.subr.mxu0 0.0
    %v537 = vand.u32 %v490, 4294901760
    %538 = vmatpush1.msra.mxu0 %v537
    %539 = vmatprep.subr.mxu0 0.0
    %540 = vmatpush1.msra.mxu0 0.0
    %541 = vmatprep.subr.mxu0 0.0
    %542 = vmatpush1.msra.mxu0 0.0
    %543 = vmatprep.subr.mxu0 0.0
    %544 = vmatpush1.msra.mxu0 0.0
    %545 = vmatprep.subr.mxu0 0.0
    %546 = vmatpush1.msra.mxu0 0.0
    %547 = vmatprep.subr.mxu0 0.0
    %548 = vmatpush1.msra.mxu0 0.0
    %549 = vmatprep.subr.mxu0 0.0
    %550 = vmatpush1.msra.mxu0 0.0
    %551 = vmatprep.subr.mxu0 0.0
    %552 = vmatpush1.msra.mxu0 0.0
    %553 = vmatprep.subr.mxu0 0.0
    %554 = vmatpush1.msra.mxu0 0.0
    %555 = vmatprep.subr.mxu0 0.0
    %556 = vmatpush1.msra.mxu0 0.0
    %557 = vmatprep.subr.mxu0 0.0
    %558 = vmatpush1.msra.mxu0 0.0
    %559 = vmatprep.subr.mxu0 0.0
    %560 = vmatpush1.msra.mxu0 0.0
    %561 = vmatprep.subr.mxu0 0.0
    %562 = vmatpush1.msra.mxu0 0.0
    %563 = vmatprep.subr.mxu0 0.0
    %564 = vmatpush1.msra.mxu0 0.0
    %565 = vmatprep.subr.mxu0 0.0
    %566 = vmatpush1.msra.mxu0 0.0
    %567 = vmatprep.subr.mxu0 0.0
    %568 = vmatpush1.msra.mxu0 0.0
    %569 = vmatprep.subr.mxu0 0.0
    %570 = vmatpush1.msra.mxu0 0.0
    %571 = vmatprep.mubr.f32.mxu0 0.0
    %v572 = vand.u32 %v461, 4294901760
    %v573 = vsub.f32 %v461, %v572
    %v574 = vand.u32 %v573, 4294901760
    %v575 = vsub.f32 %v573, %v574
    %v576 = vand.u32 %v575, 4294901760
    %577 = vmatmul.mubr.f32.gmra.mrb[0].mxu0 %v576
    %v578 = vpop.f32.mrb[0].mxu0
    %v579 = vadd.f32 0.0, %v578
    %v580 = vpop.f32.mrb[0].mxu0
    %581 = vdwg.mxu0
    %582 = vmatprep.subr.mxu0 0.0
    %v583 = vand.u32 %v475, 4294901760
    %v584 = vsub.f32 %v475, %v583
    %v585 = vand.u32 %v584, 4294901760
    %v586 = vsub.f32 %v584, %v585
    %v587 = vand.u32 %v586, 4294901760
    %588 = vmatpush1.msra.mxu0 %v587
    %589 = vmatprep.subr.mxu0 0.0
    %v590 = vand.u32 %v476, 4294901760
    %v591 = vsub.f32 %v476, %v590
    %v592 = vand.u32 %v591, 4294901760
    %v593 = vsub.f32 %v591, %v592
    %v594 = vand.u32 %v593, 4294901760
    %595 = vmatpush1.msra.mxu0 %v594
    %596 = vmatprep.subr.mxu0 0.0
    %v597 = vand.u32 %v477, 4294901760
    %v598 = vsub.f32 %v477, %v597
    %v599 = vand.u32 %v598, 4294901760
    %v600 = vsub.f32 %v598, %v599
    %v601 = vand.u32 %v600, 4294901760
    %602 = vmatpush1.msra.mxu0 %v601
    %603 = vmatprep.subr.mxu0 0.0
    %v604 = vand.u32 %v478, 4294901760
    %v605 = vsub.f32 %v478, %v604
    %v606 = vand.u32 %v605, 4294901760
    %v607 = vsub.f32 %v605, %v606
    %v608 = vand.u32 %v607, 4294901760
    %609 = vmatpush1.msra.mxu0 %v608
    %610 = vmatprep.subr.mxu0 0.0
    %v611 = vand.u32 %v479, 4294901760
    %v612 = vsub.f32 %v479, %v611
    %v613 = vand.u32 %v612, 4294901760
    %v614 = vsub.f32 %v612, %v613
    %v615 = vand.u32 %v614, 4294901760
    %616 = vmatpush1.msra.mxu0 %v615
    %617 = vmatprep.subr.mxu0 0.0
    %v618 = vand.u32 %v480, 4294901760
    %v619 = vsub.f32 %v480, %v618
    %v620 = vand.u32 %v619, 4294901760
    %v621 = vsub.f32 %v619, %v620
    %v622 = vand.u32 %v621, 4294901760
    %623 = vmatpush1.msra.mxu0 %v622
    %624 = vmatprep.subr.mxu0 0.0
    %v625 = vand.u32 %v481, 4294901760
    %v626 = vsub.f32 %v481, %v625
    %v627 = vand.u32 %v626, 4294901760
    %v628 = vsub.f32 %v626, %v627
    %v629 = vand.u32 %v628, 4294901760
    %630 = vmatpush1.msra.mxu0 %v629
    %631 = vmatprep.subr.mxu0 0.0
    %v632 = vand.u32 %v482, 4294901760
    %v633 = vsub.f32 %v482, %v632
    %v634 = vand.u32 %v633, 4294901760
    %v635 = vsub.f32 %v633, %v634
    %v636 = vand.u32 %v635, 4294901760
    %637 = vmatpush1.msra.mxu0 %v636
    %638 = vmatprep.subr.mxu0 0.0
    %v639 = vand.u32 %v483, 4294901760
    %v640 = vsub.f32 %v483, %v639
    %v641 = vand.u32 %v640, 4294901760
    %v642 = vsub.f32 %v640, %v641
    %v643 = vand.u32 %v642, 4294901760
    %644 = vmatpush1.msra.mxu0 %v643
    %645 = vmatprep.subr.mxu0 0.0
    %v646 = vand.u32 %v484, 4294901760
    %v647 = vsub.f32 %v484, %v646
    %v648 = vand.u32 %v647, 4294901760
    %v649 = vsub.f32 %v647, %v648
    %v650 = vand.u32 %v649, 4294901760
    %651 = vmatpush1.msra.mxu0 %v650
    %652 = vmatprep.subr.mxu0 0.0
    %v653 = vand.u32 %v485, 4294901760
    %v654 = vsub.f32 %v485, %v653
    %v655 = vand.u32 %v654, 4294901760
    %v656 = vsub.f32 %v654, %v655
    %v657 = vand.u32 %v656, 4294901760
    %658 = vmatpush1.msra.mxu0 %v657
    %659 = vmatprep.subr.mxu0 0.0
    %v660 = vand.u32 %v486, 4294901760
    %v661 = vsub.f32 %v486, %v660
    %v662 = vand.u32 %v661, 4294901760
    %v663 = vsub.f32 %v661, %v662
    %v664 = vand.u32 %v663, 4294901760
    %665 = vmatpush1.msra.mxu0 %v664
    %666 = vmatprep.subr.mxu0 0.0
    %v667 = vand.u32 %v487, 4294901760
    %v668 = vsub.f32 %v487, %v667
    %v669 = vand.u32 %v668, 4294901760
    %v670 = vsub.f32 %v668, %v669
    %v671 = vand.u32 %v670, 4294901760
    %672 = vmatpush1.msra.mxu0 %v671
    %673 = vmatprep.subr.mxu0 0.0
    %v674 = vand.u32 %v488, 4294901760
    %v675 = vsub.f32 %v488, %v674
    %v676 = vand.u32 %v675, 4294901760
    %v677 = vsub.f32 %v675, %v676
    %v678 = vand.u32 %v677, 4294901760
    %679 = vmatpush1.msra.mxu0 %v678
    %680 = vmatprep.subr.mxu0 0.0
    %v681 = vand.u32 %v489, 4294901760
    %v682 = vsub.f32 %v489, %v681
    %v683 = vand.u32 %v682, 4294901760
    %v684 = vsub.f32 %v682, %v683
    %v685 = vand.u32 %v684, 4294901760
    %686 = vmatpush1.msra.mxu0 %v685
    %687 = vmatprep.subr.mxu0 0.0
    %v688 = vand.u32 %v490, 4294901760
    %v689 = vsub.f32 %v490, %v688
    %v690 = vand.u32 %v689, 4294901760
    %v691 = vsub.f32 %v689, %v690
    %v692 = vand.u32 %v691, 4294901760
    %693 = vmatpush1.msra.mxu0 %v692
    %694 = vmatprep.subr.mxu0 0.0
    %695 = vmatpush1.msra.mxu0 0.0
    %696 = vmatprep.subr.mxu0 0.0
    %697 = vmatpush1.msra.mxu0 0.0
    %698 = vmatprep.subr.mxu0 0.0
    %699 = vmatpush1.msra.mxu0 0.0
    %700 = vmatprep.subr.mxu0 0.0
    %701 = vmatpush1.msra.mxu0 0.0
    %702 = vmatprep.subr.mxu0 0.0
    %703 = vmatpush1.msra.mxu0 0.0
    %704 = vmatprep.subr.mxu0 0.0
    %705 = vmatpush1.msra.mxu0 0.0
    %706 = vmatprep.subr.mxu0 0.0
    %707 = vmatpush1.msra.mxu0 0.0
    %708 = vmatprep.subr.mxu0 0.0
    %709 = vmatpush1.msra.mxu0 0.0
    %710 = vmatprep.subr.mxu0 0.0
    %711 = vmatpush1.msra.mxu0 0.0
    %712 = vmatprep.subr.mxu0 0.0
    %713 = vmatpush1.msra.mxu0 0.0
    %714 = vmatprep.subr.mxu0 0.0
    %715 = vmatpush1.msra.mxu0 0.0
    %716 = vmatprep.subr.mxu0 0.0
    %717 = vmatpush1.msra.mxu0 0.0
    %718 = vmatprep.subr.mxu0 0.0
    %719 = vmatpush1.msra.mxu0 0.0
    %720 = vmatprep.subr.mxu0 0.0
    %721 = vmatpush1.msra.mxu0 0.0
    %722 = vmatprep.subr.mxu0 0.0
    %723 = vmatpush1.msra.mxu0 0.0
    %724 = vmatprep.subr.mxu0 0.0
    %725 = vmatpush1.msra.mxu0 0.0
    %726 = vmatprep.mubr.f32.mxu0 0.0
    %v727 = vand.u32 %v461, 4294901760
    %728 = vmatmul.mubr.f32.gmra.mrb[0].mxu0 %v727
    %v729 = vpop.f32.mrb[0].mxu0
    %v730 = vadd.f32 %v579, %v729
    %v731 = vpop.f32.mrb[0].mxu0
    %732 = vdwg.mxu0
    %733 = vmatprep.subr.mxu0 0.0
    %v734 = vand.u32 %v475, 4294901760
    %v735 = vsub.f32 %v475, %v734
    %736 = vmatpush1.msra.mxu0 %v735
    %737 = vmatprep.subr.mxu0 0.0
    %v738 = vand.u32 %v476, 4294901760
    %v739 = vsub.f32 %v476, %v738
    %740 = vmatpush1.msra.mxu0 %v739
    %741 = vmatprep.subr.mxu0 0.0
    %v742 = vand.u32 %v477, 4294901760
    %v743 = vsub.f32 %v477, %v742
    %744 = vmatpush1.msra.mxu0 %v743
    %745 = vmatprep.subr.mxu0 0.0
    %v746 = vand.u32 %v478, 4294901760
    %v747 = vsub.f32 %v478, %v746
    %748 = vmatpush1.msra.mxu0 %v747
    %749 = vmatprep.subr.mxu0 0.0
    %v750 = vand.u32 %v479, 4294901760
    %v751 = vsub.f32 %v479, %v750
    %752 = vmatpush1.msra.mxu0 %v751
    %753 = vmatprep.subr.mxu0 0.0
    %v754 = vand.u32 %v480, 4294901760
    %v755 = vsub.f32 %v480, %v754
    %756 = vmatpush1.msra.mxu0 %v755
    %757 = vmatprep.subr.mxu0 0.0
    %v758 = vand.u32 %v481, 4294901760
    %v759 = vsub.f32 %v481, %v758
    %760 = vmatpush1.msra.mxu0 %v759
    %761 = vmatprep.subr.mxu0 0.0
    %v762 = vand.u32 %v482, 4294901760
    %v763 = vsub.f32 %v482, %v762
    %764 = vmatpush1.msra.mxu0 %v763
    %765 = vmatprep.subr.mxu0 0.0
    %v766 = vand.u32 %v483, 4294901760
    %v767 = vsub.f32 %v483, %v766
    %768 = vmatpush1.msra.mxu0 %v767
    %769 = vmatprep.subr.mxu0 0.0
    %v770 = vand.u32 %v484, 4294901760
    %v771 = vsub.f32 %v484, %v770
    %772 = vmatpush1.msra.mxu0 %v771
    %773 = vmatprep.subr.mxu0 0.0
    %v774 = vand.u32 %v485, 4294901760
    %v775 = vsub.f32 %v485, %v774
    %776 = vmatpush1.msra.mxu0 %v775
    %777 = vmatprep.subr.mxu0 0.0
    %v778 = vand.u32 %v486, 4294901760
    %v779 = vsub.f32 %v486, %v778
    %780 = vmatpush1.msra.mxu0 %v779
    %781 = vmatprep.subr.mxu0 0.0
    %v782 = vand.u32 %v487, 4294901760
    %v783 = vsub.f32 %v487, %v782
    %784 = vmatpush1.msra.mxu0 %v783
    %785 = vmatprep.subr.mxu0 0.0
    %v786 = vand.u32 %v488, 4294901760
    %v787 = vsub.f32 %v488, %v786
    %788 = vmatpush1.msra.mxu0 %v787
    %789 = vmatprep.subr.mxu0 0.0
    %v790 = vand.u32 %v489, 4294901760
    %v791 = vsub.f32 %v489, %v790
    %792 = vmatpush1.msra.mxu0 %v791
    %793 = vmatprep.subr.mxu0 0.0
    %v794 = vand.u32 %v490, 4294901760
    %v795 = vsub.f32 %v490, %v794
    %796 = vmatpush1.msra.mxu0 %v795
    %797 = vmatprep.subr.mxu0 0.0
    %798 = vmatpush1.msra.mxu0 0.0
    %799 = vmatprep.subr.mxu0 0.0
    %800 = vmatpush1.msra.mxu0 0.0
    %801 = vmatprep.subr.mxu0 0.0
    %802 = vmatpush1.msra.mxu0 0.0
    %803 = vmatprep.subr.mxu0 0.0
    %804 = vmatpush1.msra.mxu0 0.0
    %805 = vmatprep.subr.mxu0 0.0
    %806 = vmatpush1.msra.mxu0 0.0
    %807 = vmatprep.subr.mxu0 0.0
    %808 = vmatpush1.msra.mxu0 0.0
    %809 = vmatprep.subr.mxu0 0.0
    %810 = vmatpush1.msra.mxu0 0.0
    %811 = vmatprep.subr.mxu0 0.0
    %812 = vmatpush1.msra.mxu0 0.0
    %813 = vmatprep.subr.mxu0 0.0
    %814 = vmatpush1.msra.mxu0 0.0
    %815 = vmatprep.subr.mxu0 0.0
    %816 = vmatpush1.msra.mxu0 0.0
    %817 = vmatprep.subr.mxu0 0.0
    %818 = vmatpush1.msra.mxu0 0.0
    %819 = vmatprep.subr.mxu0 0.0
    %820 = vmatpush1.msra.mxu0 0.0
    %821 = vmatprep.subr.mxu0 0.0
    %822 = vmatpush1.msra.mxu0 0.0
    %823 = vmatprep.subr.mxu0 0.0
    %824 = vmatpush1.msra.mxu0 0.0
    %825 = vmatprep.subr.mxu0 0.0
    %826 = vmatpush1.msra.mxu0 0.0
    %827 = vmatprep.subr.mxu0 0.0
    %828 = vmatpush1.msra.mxu0 0.0
    %829 = vmatprep.mubr.f32.mxu0 0.0
    %v830 = vand.u32 %v461, 4294901760
    %v831 = vsub.f32 %v461, %v830
    %832 = vmatmul.mubr.f32.gmra.mrb[0].mxu0 %v831
    %v833 = vpop.f32.mrb[0].mxu0
    %v834 = vadd.f32 %v730, %v833
    %v835 = vpop.f32.mrb[0].mxu0
    %836 = vdwg.mxu0
    %837 = vmatprep.subr.mxu0 0.0
    %v838 = vand.u32 %v475, 4294901760
    %839 = vmatpush1.msra.mxu0 %v838
    %840 = vmatprep.subr.mxu0 0.0
    %v841 = vand.u32 %v476, 4294901760
    %842 = vmatpush1.msra.mxu0 %v841
    %843 = vmatprep.subr.mxu0 0.0
    %v844 = vand.u32 %v477, 4294901760
    %845 = vmatpush1.msra.mxu0 %v844
    %846 = vmatprep.subr.mxu0 0.0
    %v847 = vand.u32 %v478, 4294901760
    %848 = vmatpush1.msra.mxu0 %v847
    %849 = vmatprep.subr.mxu0 0.0
    %v850 = vand.u32 %v479, 4294901760
    %851 = vmatpush1.msra.mxu0 %v850
    %852 = vmatprep.subr.mxu0 0.0
    %v853 = vand.u32 %v480, 4294901760
    %854 = vmatpush1.msra.mxu0 %v853
    %855 = vmatprep.subr.mxu0 0.0
    %v856 = vand.u32 %v481, 4294901760
    %857 = vmatpush1.msra.mxu0 %v856
    %858 = vmatprep.subr.mxu0 0.0
    %v859 = vand.u32 %v482, 4294901760
    %860 = vmatpush1.msra.mxu0 %v859
    %861 = vmatprep.subr.mxu0 0.0
    %v862 = vand.u32 %v483, 4294901760
    %863 = vmatpush1.msra.mxu0 %v862
    %864 = vmatprep.subr.mxu0 0.0
    %v865 = vand.u32 %v484, 4294901760
    %866 = vmatpush1.msra.mxu0 %v865
    %867 = vmatprep.subr.mxu0 0.0
    %v868 = vand.u32 %v485, 4294901760
    %869 = vmatpush1.msra.mxu0 %v868
    %870 = vmatprep.subr.mxu0 0.0
    %v871 = vand.u32 %v486, 4294901760
    %872 = vmatpush1.msra.mxu0 %v871
    %873 = vmatprep.subr.mxu0 0.0
    %v874 = vand.u32 %v487, 4294901760
    %875 = vmatpush1.msra.mxu0 %v874
    %876 = vmatprep.subr.mxu0 0.0
    %v877 = vand.u32 %v488, 4294901760
    %878 = vmatpush1.msra.mxu0 %v877
    %879 = vmatprep.subr.mxu0 0.0
    %v880 = vand.u32 %v489, 4294901760
    %881 = vmatpush1.msra.mxu0 %v880
    %882 = vmatprep.subr.mxu0 0.0
    %v883 = vand.u32 %v490, 4294901760
    %884 = vmatpush1.msra.mxu0 %v883
    %885 = vmatprep.subr.mxu0 0.0
    %886 = vmatpush1.msra.mxu0 0.0
    %887 = vmatprep.subr.mxu0 0.0
    %888 = vmatpush1.msra.mxu0 0.0
    %889 = vmatprep.subr.mxu0 0.0
    %890 = vmatpush1.msra.mxu0 0.0
    %891 = vmatprep.subr.mxu0 0.0
    %892 = vmatpush1.msra.mxu0 0.0
    %893 = vmatprep.subr.mxu0 0.0
    %894 = vmatpush1.msra.mxu0 0.0
    %895 = vmatprep.subr.mxu0 0.0
    %896 = vmatpush1.msra.mxu0 0.0
    %897 = vmatprep.subr.mxu0 0.0
    %898 = vmatpush1.msra.mxu0 0.0
    %899 = vmatprep.subr.mxu0 0.0
    %900 = vmatpush1.msra.mxu0 0.0
    %901 = vmatprep.subr.mxu0 0.0
    %902 = vmatpush1.msra.mxu0 0.0
    %903 = vmatprep.subr.mxu0 0.0
    %904 = vmatpush1.msra.mxu0 0.0
    %905 = vmatprep.subr.mxu0 0.0
    %906 = vmatpush1.msra.mxu0 0.0
    %907 = vmatprep.subr.mxu0 0.0
    %908 = vmatpush1.msra.mxu0 0.0
    %909 = vmatprep.subr.mxu0 0.0
    %910 = vmatpush1.msra.mxu0 0.0
    %911 = vmatprep.subr.mxu0 0.0
    %912 = vmatpush1.msra.mxu0 0.0
    %913 = vmatprep.subr.mxu0 0.0
    %914 = vmatpush1.msra.mxu0 0.0
    %915 = vmatprep.subr.mxu0 0.0
    %916 = vmatpush1.msra.mxu0 0.0
    %917 = vmatprep.mubr.f32.mxu0 0.0
    %v918 = vand.u32 %v461, 4294901760
    %v919 = vsub.f32 %v461, %v918
    %v920 = vand.u32 %v919, 4294901760
    %921 = vmatmul.mubr.f32.gmra.mrb[0].mxu0 %v920
    %v922 = vpop.f32.mrb[0].mxu0
    %v923 = vadd.f32 %v834, %v922
    %v924 = vpop.f32.mrb[0].mxu0
    %925 = vdwg.mxu0
    %926 = vmatprep.subr.mxu0 0.0
    %v927 = vand.u32 %v475, 4294901760
    %v928 = vsub.f32 %v475, %v927
    %v929 = vand.u32 %v928, 4294901760
    %930 = vmatpush1.msra.mxu0 %v929
    %931 = vmatprep.subr.mxu0 0.0
    %v932 = vand.u32 %v476, 4294901760
    %v933 = vsub.f32 %v476, %v932
    %v934 = vand.u32 %v933, 4294901760
    %935 = vmatpush1.msra.mxu0 %v934
    %936 = vmatprep.subr.mxu0 0.0
    %v937 = vand.u32 %v477, 4294901760
    %v938 = vsub.f32 %v477, %v937
    %v939 = vand.u32 %v938, 4294901760
    %940 = vmatpush1.msra.mxu0 %v939
    %941 = vmatprep.subr.mxu0 0.0
    %v942 = vand.u32 %v478, 4294901760
    %v943 = vsub.f32 %v478, %v942
    %v944 = vand.u32 %v943, 4294901760
    %945 = vmatpush1.msra.mxu0 %v944
    %946 = vmatprep.subr.mxu0 0.0
    %v947 = vand.u32 %v479, 4294901760
    %v948 = vsub.f32 %v479, %v947
    %v949 = vand.u32 %v948, 4294901760
    %950 = vmatpush1.msra.mxu0 %v949
    %951 = vmatprep.subr.mxu0 0.0
    %v952 = vand.u32 %v480, 4294901760
    %v953 = vsub.f32 %v480, %v952
    %v954 = vand.u32 %v953, 4294901760
    %955 = vmatpush1.msra.mxu0 %v954
    %956 = vmatprep.subr.mxu0 0.0
    %v957 = vand.u32 %v481, 4294901760
    %v958 = vsub.f32 %v481, %v957
    %v959 = vand.u32 %v958, 4294901760
    %960 = vmatpush1.msra.mxu0 %v959
    %961 = vmatprep.subr.mxu0 0.0
    %v962 = vand.u32 %v482, 4294901760
    %v963 = vsub.f32 %v482, %v962
    %v964 = vand.u32 %v963, 4294901760
    %965 = vmatpush1.msra.mxu0 %v964
    %966 = vmatprep.subr.mxu0 0.0
    %v967 = vand.u32 %v483, 4294901760
    %v968 = vsub.f32 %v483, %v967
    %v969 = vand.u32 %v968, 4294901760
    %970 = vmatpush1.msra.mxu0 %v969
    %971 = vmatprep.subr.mxu0 0.0
    %v972 = vand.u32 %v484, 4294901760
    %v973 = vsub.f32 %v484, %v972
    %v974 = vand.u32 %v973, 4294901760
    %975 = vmatpush1.msra.mxu0 %v974
    %976 = vmatprep.subr.mxu0 0.0
    %v977 = vand.u32 %v485, 4294901760
    %v978 = vsub.f32 %v485, %v977
    %v979 = vand.u32 %v978, 4294901760
    %980 = vmatpush1.msra.mxu0 %v979
    %981 = vmatprep.subr.mxu0 0.0
    %v982 = vand.u32 %v486, 4294901760
    %v983 = vsub.f32 %v486, %v982
    %v984 = vand.u32 %v983, 4294901760
    %985 = vmatpush1.msra.mxu0 %v984
    %986 = vmatprep.subr.mxu0 0.0
    %v987 = vand.u32 %v487, 4294901760
    %v988 = vsub.f32 %v487, %v987
    %v989 = vand.u32 %v988, 4294901760
    %990 = vmatpush1.msra.mxu0 %v989
    %991 = vmatprep.subr.mxu0 0.0
    %v992 = vand.u32 %v488, 4294901760
    %v993 = vsub.f32 %v488, %v992
    %v994 = vand.u32 %v993, 4294901760
    %995 = vmatpush1.msra.mxu0 %v994
    %996 = vmatprep.subr.mxu0 0.0
    %v997 = vand.u32 %v489, 4294901760
    %v998 = vsub.f32 %v489, %v997
    %v999 = vand.u32 %v998, 4294901760
    %1000 = vmatpush1.msra.mxu0 %v999
    %1001 = vmatprep.subr.mxu0 0.0
    %v1002 = vand.u32 %v490, 4294901760
    %v1003 = vsub.f32 %v490, %v1002
    %v1004 = vand.u32 %v1003, 4294901760
    %1005 = vmatpush1.msra.mxu0 %v1004
    %1006 = vmatprep.subr.mxu0 0.0
    %1007 = vmatpush1.msra.mxu0 0.0
    %1008 = vmatprep.subr.mxu0 0.0
    %1009 = vmatpush1.msra.mxu0 0.0
    %1010 = vmatprep.subr.mxu0 0.0
    %1011 = vmatpush1.msra.mxu0 0.0
    %1012 = vmatprep.subr.mxu0 0.0
    %1013 = vmatpush1.msra.mxu0 0.0
    %1014 = vmatprep.subr.mxu0 0.0
    %1015 = vmatpush1.msra.mxu0 0.0
    %1016 = vmatprep.subr.mxu0 0.0
    %1017 = vmatpush1.msra.mxu0 0.0
    %1018 = vmatprep.subr.mxu0 0.0
    %1019 = vmatpush1.msra.mxu0 0.0
    %1020 = vmatprep.subr.mxu0 0.0
    %1021 = vmatpush1.msra.mxu0 0.0
    %1022 = vmatprep.subr.mxu0 0.0
    %1023 = vmatpush1.msra.mxu0 0.0
    %1024 = vmatprep.subr.mxu0 0.0
    %1025 = vmatpush1.msra.mxu0 0.0
    %1026 = vmatprep.subr.mxu0 0.0
    %1027 = vmatpush1.msra.mxu0 0.0
    %1028 = vmatprep.subr.mxu0 0.0
    %1029 = vmatpush1.msra.mxu0 0.0
    %1030 = vmatprep.subr.mxu0 0.0
    %1031 = vmatpush1.msra.mxu0 0.0
    %1032 = vmatprep.subr.mxu0 0.0
    %1033 = vmatpush1.msra.mxu0 0.0
    %1034 = vmatprep.subr.mxu0 0.0
    %1035 = vmatpush1.msra.mxu0 0.0
    %1036 = vmatprep.subr.mxu0 0.0
    %1037 = vmatpush1.msra.mxu0 0.0
    %1038 = vmatprep.mubr.f32.mxu0 0.0
    %v1039 = vand.u32 %v461, 4294901760
    %1040 = vmatmul.mubr.f32.gmra.mrb[0].mxu0 %v1039
    %v1041 = vpop.f32.mrb[0].mxu0
    %v1042 = vadd.f32 %v923, %v1041
    %v1043 = vpop.f32.mrb[0].mxu0
    %1044 = vdwg.mxu0
    %1045 = vmatprep.subr.mxu0 0.0
    %v1046 = vand.u32 %v475, 4294901760
    %1047 = vmatpush1.msra.mxu0 %v1046
    %1048 = vmatprep.subr.mxu0 0.0
    %v1049 = vand.u32 %v476, 4294901760
    %1050 = vmatpush1.msra.mxu0 %v1049
    %1051 = vmatprep.subr.mxu0 0.0
    %v1052 = vand.u32 %v477, 4294901760
    %1053 = vmatpush1.msra.mxu0 %v1052
    %1054 = vmatprep.subr.mxu0 0.0
    %v1055 = vand.u32 %v478, 4294901760
    %1056 = vmatpush1.msra.mxu0 %v1055
    %1057 = vmatprep.subr.mxu0 0.0
    %v1058 = vand.u32 %v479, 4294901760
    %1059 = vmatpush1.msra.mxu0 %v1058
    %1060 = vmatprep.subr.mxu0 0.0
    %v1061 = vand.u32 %v480, 4294901760
    %1062 = vmatpush1.msra.mxu0 %v1061
    %1063 = vmatprep.subr.mxu0 0.0
    %v1064 = vand.u32 %v481, 4294901760
    %1065 = vmatpush1.msra.mxu0 %v1064
    %1066 = vmatprep.subr.mxu0 0.0
    %v1067 = vand.u32 %v482, 4294901760
    %1068 = vmatpush1.msra.mxu0 %v1067
    %1069 = vmatprep.subr.mxu0 0.0
    %v1070 = vand.u32 %v483, 4294901760
    %1071 = vmatpush1.msra.mxu0 %v1070
    %1072 = vmatprep.subr.mxu0 0.0
    %v1073 = vand.u32 %v484, 4294901760
    %1074 = vmatpush1.msra.mxu0 %v1073
    %1075 = vmatprep.subr.mxu0 0.0
    %v1076 = vand.u32 %v485, 4294901760
    %1077 = vmatpush1.msra.mxu0 %v1076
    %1078 = vmatprep.subr.mxu0 0.0
    %v1079 = vand.u32 %v486, 4294901760
    %1080 = vmatpush1.msra.mxu0 %v1079
    %1081 = vmatprep.subr.mxu0 0.0
    %v1082 = vand.u32 %v487, 4294901760
    %1083 = vmatpush1.msra.mxu0 %v1082
    %1084 = vmatprep.subr.mxu0 0.0
    %v1085 = vand.u32 %v488, 4294901760
    %1086 = vmatpush1.msra.mxu0 %v1085
    %1087 = vmatprep.subr.mxu0 0.0
    %v1088 = vand.u32 %v489, 4294901760
    %1089 = vmatpush1.msra.mxu0 %v1088
    %1090 = vmatprep.subr.mxu0 0.0
    %v1091 = vand.u32 %v490, 4294901760
    %1092 = vmatpush1.msra.mxu0 %v1091
    %1093 = vmatprep.subr.mxu0 0.0
    %1094 = vmatpush1.msra.mxu0 0.0
    %1095 = vmatprep.subr.mxu0 0.0
    %1096 = vmatpush1.msra.mxu0 0.0
    %1097 = vmatprep.subr.mxu0 0.0
    %1098 = vmatpush1.msra.mxu0 0.0
    %1099 = vmatprep.subr.mxu0 0.0
    %1100 = vmatpush1.msra.mxu0 0.0
    %1101 = vmatprep.subr.mxu0 0.0
    %1102 = vmatpush1.msra.mxu0 0.0
    %1103 = vmatprep.subr.mxu0 0.0
    %1104 = vmatpush1.msra.mxu0 0.0
    %1105 = vmatprep.subr.mxu0 0.0
    %1106 = vmatpush1.msra.mxu0 0.0
    %1107 = vmatprep.subr.mxu0 0.0
    %1108 = vmatpush1.msra.mxu0 0.0
    %1109 = vmatprep.subr.mxu0 0.0
    %1110 = vmatpush1.msra.mxu0 0.0
    %1111 = vmatprep.subr.mxu0 0.0
    %1112 = vmatpush1.msra.mxu0 0.0
    %1113 = vmatprep.subr.mxu0 0.0
    %1114 = vmatpush1.msra.mxu0 0.0
    %1115 = vmatprep.subr.mxu0 0.0
    %1116 = vmatpush1.msra.mxu0 0.0
    %1117 = vmatprep.subr.mxu0 0.0
    %1118 = vmatpush1.msra.mxu0 0.0
    %1119 = vmatprep.subr.mxu0 0.0
    %1120 = vmatpush1.msra.mxu0 0.0
    %1121 = vmatprep.subr.mxu0 0.0
    %1122 = vmatpush1.msra.mxu0 0.0
    %1123 = vmatprep.subr.mxu0 0.0
    %1124 = vmatpush1.msra.mxu0 0.0
    %1125 = vmatprep.mubr.f32.mxu0 0.0
    %v1126 = vand.u32 %v461, 4294901760
    %1127 = vmatmul.mubr.f32.gmra.mrb[0].mxu0 %v1126
    %v1128 = vpop.f32.mrb[0].mxu0
    %v1129 = vadd.f32 %v1042, %v1128
    %v1130 = vpop.f32.mrb[0].mxu0
    %1131 = vdwg.mxu0
    %1132 = vmatprep.subr.mxu0 0.0
    %v1133 = vand.u32 %v475, 4294901760
    %1134 = vmatpush1.msra.mxu0 %v1133
    %1135 = vmatprep.subr.mxu0 0.0
    %v1136 = vand.u32 %v476, 4294901760
    %1137 = vmatpush1.msra.mxu0 %v1136
    %1138 = vmatprep.subr.mxu0 0.0
    %v1139 = vand.u32 %v477, 4294901760
    %1140 = vmatpush1.msra.mxu0 %v1139
    %1141 = vmatprep.subr.mxu0 0.0
    %v1142 = vand.u32 %v478, 4294901760
    %1143 = vmatpush1.msra.mxu0 %v1142
    %1144 = vmatprep.subr.mxu0 0.0
    %v1145 = vand.u32 %v479, 4294901760
    %1146 = vmatpush1.msra.mxu0 %v1145
    %1147 = vmatprep.subr.mxu0 0.0
    %v1148 = vand.u32 %v480, 4294901760
    %1149 = vmatpush1.msra.mxu0 %v1148
    %1150 = vmatprep.subr.mxu0 0.0
    %v1151 = vand.u32 %v481, 4294901760
    %1152 = vmatpush1.msra.mxu0 %v1151
    %1153 = vmatprep.subr.mxu0 0.0
    %v1154 = vand.u32 %v482, 4294901760
    %1155 = vmatpush1.msra.mxu0 %v1154
    %1156 = vmatprep.subr.mxu0 0.0
    %v1157 = vand.u32 %v483, 4294901760
    %1158 = vmatpush1.msra.mxu0 %v1157
    %1159 = vmatprep.subr.mxu0 0.0
    %v1160 = vand.u32 %v484, 4294901760
    %1161 = vmatpush1.msra.mxu0 %v1160
    %1162 = vmatprep.subr.mxu0 0.0
    %v1163 = vand.u32 %v485, 4294901760
    %1164 = vmatpush1.msra.mxu0 %v1163
    %1165 = vmatprep.subr.mxu0 0.0
    %v1166 = vand.u32 %v486, 4294901760
    %1167 = vmatpush1.msra.mxu0 %v1166
    %1168 = vmatprep.subr.mxu0 0.0
    %v1169 = vand.u32 %v487, 4294901760
    %1170 = vmatpush1.msra.mxu0 %v1169
    %1171 = vmatprep.subr.mxu0 0.0
    %v1172 = vand.u32 %v488, 4294901760
    %1173 = vmatpush1.msra.mxu0 %v1172
    %1174 = vmatprep.subr.mxu0 0.0
    %v1175 = vand.u32 %v489, 4294901760
    %1176 = vmatpush1.msra.mxu0 %v1175
    %1177 = vmatprep.subr.mxu0 0.0
    %v1178 = vand.u32 %v490, 4294901760
    %1179 = vmatpush1.msra.mxu0 %v1178
    %1180 = vmatprep.subr.mxu0 0.0
    %1181 = vmatpush1.msra.mxu0 0.0
    %1182 = vmatprep.subr.mxu0 0.0
    %1183 = vmatpush1.msra.mxu0 0.0
    %1184 = vmatprep.subr.mxu0 0.0
    %1185 = vmatpush1.msra.mxu0 0.0
    %1186 = vmatprep.subr.mxu0 0.0
    %1187 = vmatpush1.msra.mxu0 0.0
    %1188 = vmatprep.subr.mxu0 0.0
    %1189 = vmatpush1.msra.mxu0 0.0
    %1190 = vmatprep.subr.mxu0 0.0
    %1191 = vmatpush1.msra.mxu0 0.0
    %1192 = vmatprep.subr.mxu0 0.0
    %1193 = vmatpush1.msra.mxu0 0.0
    %1194 = vmatprep.subr.mxu0 0.0
    %1195 = vmatpush1.msra.mxu0 0.0
    %1196 = vmatprep.subr.mxu0 0.0
    %1197 = vmatpush1.msra.mxu0 0.0
    %1198 = vmatprep.subr.mxu0 0.0
    %1199 = vmatpush1.msra.mxu0 0.0
    %1200 = vmatprep.subr.mxu0 0.0
    %1201 = vmatpush1.msra.mxu0 0.0
    %1202 = vmatprep.subr.mxu0 0.0
    %1203 = vmatpush1.msra.mxu0 0.0
    %1204 = vmatprep.subr.mxu0 0.0
    %1205 = vmatpush1.msra.mxu0 0.0
    %1206 = vmatprep.subr.mxu0 0.0
    %1207 = vmatpush1.msra.mxu0 0.0
    %1208 = vmatprep.subr.mxu0 0.0
    %1209 = vmatpush1.msra.mxu0 0.0
    %1210 = vmatprep.subr.mxu0 0.0
    %1211 = vmatpush1.msra.mxu0 0.0
    %1212 = vmatprep.mubr.f32.mxu0 0.0
    %v1213 = vand.u32 %v474, 4294901760
    %v1214 = vsub.f32 %v474, %v1213
    %v1215 = vand.u32 %v1214, 4294901760
    %v1216 = vsub.f32 %v1214, %v1215
    %v1217 = vand.u32 %v1216, 4294901760
    %1218 = vmatmul.mubr.f32.gmra.mrb[0].mxu0 %v1217
    %v1219 = vpop.f32.mrb[0].mxu0
    %v1220 = vadd.f32 0.0, %v1219
    %v1221 = vpop.f32.mrb[0].mxu0
    %1222 = vdwg.mxu0
    %1223 = vmatprep.subr.mxu0 0.0
    %v1224 = vand.u32 %v475, 4294901760
    %v1225 = vsub.f32 %v475, %v1224
    %v1226 = vand.u32 %v1225, 4294901760
    %v1227 = vsub.f32 %v1225, %v1226
    %v1228 = vand.u32 %v1227, 4294901760
    %1229 = vmatpush1.msra.mxu0 %v1228
    %1230 = vmatprep.subr.mxu0 0.0
    %v1231 = vand.u32 %v476, 4294901760
    %v1232 = vsub.f32 %v476, %v1231
    %v1233 = vand.u32 %v1232, 4294901760
    %v1234 = vsub.f32 %v1232, %v1233
    %v1235 = vand.u32 %v1234, 4294901760
    %1236 = vmatpush1.msra.mxu0 %v1235
    %1237 = vmatprep.subr.mxu0 0.0
    %v1238 = vand.u32 %v477, 4294901760
    %v1239 = vsub.f32 %v477, %v1238
    %v1240 = vand.u32 %v1239, 4294901760
    %v1241 = vsub.f32 %v1239, %v1240
    %v1242 = vand.u32 %v1241, 4294901760
    %1243 = vmatpush1.msra.mxu0 %v1242
    %1244 = vmatprep.subr.mxu0 0.0
    %v1245 = vand.u32 %v478, 4294901760
    %v1246 = vsub.f32 %v478, %v1245
    %v1247 = vand.u32 %v1246, 4294901760
    %v1248 = vsub.f32 %v1246, %v1247
    %v1249 = vand.u32 %v1248, 4294901760
    %1250 = vmatpush1.msra.mxu0 %v1249
    %1251 = vmatprep.subr.mxu0 0.0
    %v1252 = vand.u32 %v479, 4294901760
    %v1253 = vsub.f32 %v479, %v1252
    %v1254 = vand.u32 %v1253, 4294901760
    %v1255 = vsub.f32 %v1253, %v1254
    %v1256 = vand.u32 %v1255, 4294901760
    %1257 = vmatpush1.msra.mxu0 %v1256
    %1258 = vmatprep.subr.mxu0 0.0
    %v1259 = vand.u32 %v480, 4294901760
    %v1260 = vsub.f32 %v480, %v1259
    %v1261 = vand.u32 %v1260, 4294901760
    %v1262 = vsub.f32 %v1260, %v1261
    %v1263 = vand.u32 %v1262, 4294901760
    %1264 = vmatpush1.msra.mxu0 %v1263
    %1265 = vmatprep.subr.mxu0 0.0
    %v1266 = vand.u32 %v481, 4294901760
    %v1267 = vsub.f32 %v481, %v1266
    %v1268 = vand.u32 %v1267, 4294901760
    %v1269 = vsub.f32 %v1267, %v1268
    %v1270 = vand.u32 %v1269, 4294901760
    %1271 = vmatpush1.msra.mxu0 %v1270
    %1272 = vmatprep.subr.mxu0 0.0
    %v1273 = vand.u32 %v482, 4294901760
    %v1274 = vsub.f32 %v482, %v1273
    %v1275 = vand.u32 %v1274, 4294901760
    %v1276 = vsub.f32 %v1274, %v1275
    %v1277 = vand.u32 %v1276, 4294901760
    %1278 = vmatpush1.msra.mxu0 %v1277
    %1279 = vmatprep.subr.mxu0 0.0
    %v1280 = vand.u32 %v483, 4294901760
    %v1281 = vsub.f32 %v483, %v1280
    %v1282 = vand.u32 %v1281, 4294901760
    %v1283 = vsub.f32 %v1281, %v1282
    %v1284 = vand.u32 %v1283, 4294901760
    %1285 = vmatpush1.msra.mxu0 %v1284
    %1286 = vmatprep.subr.mxu0 0.0
    %v1287 = vand.u32 %v484, 4294901760
    %v1288 = vsub.f32 %v484, %v1287
    %v1289 = vand.u32 %v1288, 4294901760
    %v1290 = vsub.f32 %v1288, %v1289
    %v1291 = vand.u32 %v1290, 4294901760
    %1292 = vmatpush1.msra.mxu0 %v1291
    %1293 = vmatprep.subr.mxu0 0.0
    %v1294 = vand.u32 %v485, 4294901760
    %v1295 = vsub.f32 %v485, %v1294
    %v1296 = vand.u32 %v1295, 4294901760
    %v1297 = vsub.f32 %v1295, %v1296
    %v1298 = vand.u32 %v1297, 4294901760
    %1299 = vmatpush1.msra.mxu0 %v1298
    %1300 = vmatprep.subr.mxu0 0.0
    %v1301 = vand.u32 %v486, 4294901760
    %v1302 = vsub.f32 %v486, %v1301
    %v1303 = vand.u32 %v1302, 4294901760
    %v1304 = vsub.f32 %v1302, %v1303
    %v1305 = vand.u32 %v1304, 4294901760
    %1306 = vmatpush1.msra.mxu0 %v1305
    %1307 = vmatprep.subr.mxu0 0.0
    %v1308 = vand.u32 %v487, 4294901760
    %v1309 = vsub.f32 %v487, %v1308
    %v1310 = vand.u32 %v1309, 4294901760
    %v1311 = vsub.f32 %v1309, %v1310
    %v1312 = vand.u32 %v1311, 4294901760
    %1313 = vmatpush1.msra.mxu0 %v1312
    %1314 = vmatprep.subr.mxu0 0.0
    %v1315 = vand.u32 %v488, 4294901760
    %v1316 = vsub.f32 %v488, %v1315
    %v1317 = vand.u32 %v1316, 4294901760
    %v1318 = vsub.f32 %v1316, %v1317
    %v1319 = vand.u32 %v1318, 4294901760
    %1320 = vmatpush1.msra.mxu0 %v1319
    %1321 = vmatprep.subr.mxu0 0.0
    %v1322 = vand.u32 %v489, 4294901760
    %v1323 = vsub.f32 %v489, %v1322
    %v1324 = vand.u32 %v1323, 4294901760
    %v1325 = vsub.f32 %v1323, %v1324
    %v1326 = vand.u32 %v1325, 4294901760
    %1327 = vmatpush1.msra.mxu0 %v1326
    %1328 = vmatprep.subr.mxu0 0.0
    %v1329 = vand.u32 %v490, 4294901760
    %v1330 = vsub.f32 %v490, %v1329
    %v1331 = vand.u32 %v1330, 4294901760
    %v1332 = vsub.f32 %v1330, %v1331
    %v1333 = vand.u32 %v1332, 4294901760
    %1334 = vmatpush1.msra.mxu0 %v1333
    %1335 = vmatprep.subr.mxu0 0.0
    %1336 = vmatpush1.msra.mxu0 0.0
    %1337 = vmatprep.subr.mxu0 0.0
    %1338 = vmatpush1.msra.mxu0 0.0
    %1339 = vmatprep.subr.mxu0 0.0
    %1340 = vmatpush1.msra.mxu0 0.0
    %1341 = vmatprep.subr.mxu0 0.0
    %1342 = vmatpush1.msra.mxu0 0.0
    %1343 = vmatprep.subr.mxu0 0.0
    %1344 = vmatpush1.msra.mxu0 0.0
    %1345 = vmatprep.subr.mxu0 0.0
    %1346 = vmatpush1.msra.mxu0 0.0
    %1347 = vmatprep.subr.mxu0 0.0
    %1348 = vmatpush1.msra.mxu0 0.0
    %1349 = vmatprep.subr.mxu0 0.0
    %1350 = vmatpush1.msra.mxu0 0.0
    %1351 = vmatprep.subr.mxu0 0.0
    %1352 = vmatpush1.msra.mxu0 0.0
    %1353 = vmatprep.subr.mxu0 0.0
    %1354 = vmatpush1.msra.mxu0 0.0
    %1355 = vmatprep.subr.mxu0 0.0
    %1356 = vmatpush1.msra.mxu0 0.0
    %1357 = vmatprep.subr.mxu0 0.0
    %1358 = vmatpush1.msra.mxu0 0.0
    %1359 = vmatprep.subr.mxu0 0.0
    %1360 = vmatpush1.msra.mxu0 0.0
    %1361 = vmatprep.subr.mxu0 0.0
    %1362 = vmatpush1.msra.mxu0 0.0
    %1363 = vmatprep.subr.mxu0 0.0
    %1364 = vmatpush1.msra.mxu0 0.0
    %1365 = vmatprep.subr.mxu0 0.0
    %1366 = vmatpush1.msra.mxu0 0.0
    %1367 = vmatprep.mubr.f32.mxu0 0.0
    %v1368 = vand.u32 %v474, 4294901760
    %1369 = vmatmul.mubr.f32.gmra.mrb[0].mxu0 %v1368
    %v1370 = vpop.f32.mrb[0].mxu0
    %v1371 = vadd.f32 %v1220, %v1370
    %v1372 = vpop.f32.mrb[0].mxu0
    %1373 = vdwg.mxu0
    %1374 = vmatprep.subr.mxu0 0.0
    %v1375 = vand.u32 %v475, 4294901760
    %v1376 = vsub.f32 %v475, %v1375
    %1377 = vmatpush1.msra.mxu0 %v1376
    %1378 = vmatprep.subr.mxu0 0.0
    %v1379 = vand.u32 %v476, 4294901760
    %v1380 = vsub.f32 %v476, %v1379
    %1381 = vmatpush1.msra.mxu0 %v1380
    %1382 = vmatprep.subr.mxu0 0.0
    %v1383 = vand.u32 %v477, 4294901760
    %v1384 = vsub.f32 %v477, %v1383
    %1385 = vmatpush1.msra.mxu0 %v1384
    %1386 = vmatprep.subr.mxu0 0.0
    %v1387 = vand.u32 %v478, 4294901760
    %v1388 = vsub.f32 %v478, %v1387
    %1389 = vmatpush1.msra.mxu0 %v1388
    %1390 = vmatprep.subr.mxu0 0.0
    %v1391 = vand.u32 %v479, 4294901760
    %v1392 = vsub.f32 %v479, %v1391
    %1393 = vmatpush1.msra.mxu0 %v1392
    %1394 = vmatprep.subr.mxu0 0.0
    %v1395 = vand.u32 %v480, 4294901760
    %v1396 = vsub.f32 %v480, %v1395
    %1397 = vmatpush1.msra.mxu0 %v1396
    %1398 = vmatprep.subr.mxu0 0.0
    %v1399 = vand.u32 %v481, 4294901760
    %v1400 = vsub.f32 %v481, %v1399
    %1401 = vmatpush1.msra.mxu0 %v1400
    %1402 = vmatprep.subr.mxu0 0.0
    %v1403 = vand.u32 %v482, 4294901760
    %v1404 = vsub.f32 %v482, %v1403
    %1405 = vmatpush1.msra.mxu0 %v1404
    %1406 = vmatprep.subr.mxu0 0.0
    %v1407 = vand.u32 %v483, 4294901760
    %v1408 = vsub.f32 %v483, %v1407
    %1409 = vmatpush1.msra.mxu0 %v1408
    %1410 = vmatprep.subr.mxu0 0.0
    %v1411 = vand.u32 %v484, 4294901760
    %v1412 = vsub.f32 %v484, %v1411
    %1413 = vmatpush1.msra.mxu0 %v1412
    %1414 = vmatprep.subr.mxu0 0.0
    %v1415 = vand.u32 %v485, 4294901760
    %v1416 = vsub.f32 %v485, %v1415
    %1417 = vmatpush1.msra.mxu0 %v1416
    %1418 = vmatprep.subr.mxu0 0.0
    %v1419 = vand.u32 %v486, 4294901760
    %v1420 = vsub.f32 %v486, %v1419
    %1421 = vmatpush1.msra.mxu0 %v1420
    %1422 = vmatprep.subr.mxu0 0.0
    %v1423 = vand.u32 %v487, 4294901760
    %v1424 = vsub.f32 %v487, %v1423
    %1425 = vmatpush1.msra.mxu0 %v1424
    %1426 = vmatprep.subr.mxu0 0.0
    %v1427 = vand.u32 %v488, 4294901760
    %v1428 = vsub.f32 %v488, %v1427
    %1429 = vmatpush1.msra.mxu0 %v1428
    %1430 = vmatprep.subr.mxu0 0.0
    %v1431 = vand.u32 %v489, 4294901760
    %v1432 = vsub.f32 %v489, %v1431
    %1433 = vmatpush1.msra.mxu0 %v1432
    %1434 = vmatprep.subr.mxu0 0.0
    %v1435 = vand.u32 %v490, 4294901760
    %v1436 = vsub.f32 %v490, %v1435
    %1437 = vmatpush1.msra.mxu0 %v1436
    %1438 = vmatprep.subr.mxu0 0.0
    %1439 = vmatpush1.msra.mxu0 0.0
    %1440 = vmatprep.subr.mxu0 0.0
    %1441 = vmatpush1.msra.mxu0 0.0
    %1442 = vmatprep.subr.mxu0 0.0
    %1443 = vmatpush1.msra.mxu0 0.0
    %1444 = vmatprep.subr.mxu0 0.0
    %1445 = vmatpush1.msra.mxu0 0.0
    %1446 = vmatprep.subr.mxu0 0.0
    %1447 = vmatpush1.msra.mxu0 0.0
    %1448 = vmatprep.subr.mxu0 0.0
    %1449 = vmatpush1.msra.mxu0 0.0
    %1450 = vmatprep.subr.mxu0 0.0
    %1451 = vmatpush1.msra.mxu0 0.0
    %1452 = vmatprep.subr.mxu0 0.0
    %1453 = vmatpush1.msra.mxu0 0.0
    %1454 = vmatprep.subr.mxu0 0.0
    %1455 = vmatpush1.msra.mxu0 0.0
    %1456 = vmatprep.subr.mxu0 0.0
    %1457 = vmatpush1.msra.mxu0 0.0
    %1458 = vmatprep.subr.mxu0 0.0
    %1459 = vmatpush1.msra.mxu0 0.0
    %1460 = vmatprep.subr.mxu0 0.0
    %1461 = vmatpush1.msra.mxu0 0.0
    %1462 = vmatprep.subr.mxu0 0.0
    %1463 = vmatpush1.msra.mxu0 0.0
    %1464 = vmatprep.subr.mxu0 0.0
    %1465 = vmatpush1.msra.mxu0 0.0
    %1466 = vmatprep.subr.mxu0 0.0
    %1467 = vmatpush1.msra.mxu0 0.0
    %1468 = vmatprep.subr.mxu0 0.0
    %1469 = vmatpush1.msra.mxu0 0.0
    %1470 = vmatprep.mubr.f32.mxu0 0.0
    %v1471 = vand.u32 %v474, 4294901760
    %v1472 = vsub.f32 %v474, %v1471
    %1473 = vmatmul.mubr.f32.gmra.mrb[0].mxu0 %v1472
    %v1474 = vpop.f32.mrb[0].mxu0
    %v1475 = vadd.f32 %v1371, %v1474
    %v1476 = vpop.f32.mrb[0].mxu0
    %1477 = vdwg.mxu0
    %1478 = vmatprep.subr.mxu0 0.0
    %v1479 = vand.u32 %v475, 4294901760
    %1480 = vmatpush1.msra.mxu0 %v1479
    %1481 = vmatprep.subr.mxu0 0.0
    %v1482 = vand.u32 %v476, 4294901760
    %1483 = vmatpush1.msra.mxu0 %v1482
    %1484 = vmatprep.subr.mxu0 0.0
    %v1485 = vand.u32 %v477, 4294901760
    %1486 = vmatpush1.msra.mxu0 %v1485
    %1487 = vmatprep.subr.mxu0 0.0
    %v1488 = vand.u32 %v478, 4294901760
    %1489 = vmatpush1.msra.mxu0 %v1488
    %1490 = vmatprep.subr.mxu0 0.0
    %v1491 = vand.u32 %v479, 4294901760
    %1492 = vmatpush1.msra.mxu0 %v1491
    %1493 = vmatprep.subr.mxu0 0.0
    %v1494 = vand.u32 %v480, 4294901760
    %1495 = vmatpush1.msra.mxu0 %v1494
    %1496 = vmatprep.subr.mxu0 0.0
    %v1497 = vand.u32 %v481, 4294901760
    %1498 = vmatpush1.msra.mxu0 %v1497
    %1499 = vmatprep.subr.mxu0 0.0
    %v1500 = vand.u32 %v482, 4294901760
    %1501 = vmatpush1.msra.mxu0 %v1500
    %1502 = vmatprep.subr.mxu0 0.0
    %v1503 = vand.u32 %v483, 4294901760
    %1504 = vmatpush1.msra.mxu0 %v1503
    %1505 = vmatprep.subr.mxu0 0.0
    %v1506 = vand.u32 %v484, 4294901760
    %1507 = vmatpush1.msra.mxu0 %v1506
    %1508 = vmatprep.subr.mxu0 0.0
    %v1509 = vand.u32 %v485, 4294901760
    %1510 = vmatpush1.msra.mxu0 %v1509
    %1511 = vmatprep.subr.mxu0 0.0
    %v1512 = vand.u32 %v486, 4294901760
    %1513 = vmatpush1.msra.mxu0 %v1512
    %1514 = vmatprep.subr.mxu0 0.0
    %v1515 = vand.u32 %v487, 4294901760
    %1516 = vmatpush1.msra.mxu0 %v1515
    %1517 = vmatprep.subr.mxu0 0.0
    %v1518 = vand.u32 %v488, 4294901760
    %1519 = vmatpush1.msra.mxu0 %v1518
    %1520 = vmatprep.subr.mxu0 0.0
    %v1521 = vand.u32 %v489, 4294901760
    %1522 = vmatpush1.msra.mxu0 %v1521
    %1523 = vmatprep.subr.mxu0 0.0
    %v1524 = vand.u32 %v490, 4294901760
    %1525 = vmatpush1.msra.mxu0 %v1524
    %1526 = vmatprep.subr.mxu0 0.0
    %1527 = vmatpush1.msra.mxu0 0.0
    %1528 = vmatprep.subr.mxu0 0.0
    %1529 = vmatpush1.msra.mxu0 0.0
    %1530 = vmatprep.subr.mxu0 0.0
    %1531 = vmatpush1.msra.mxu0 0.0
    %1532 = vmatprep.subr.mxu0 0.0
    %1533 = vmatpush1.msra.mxu0 0.0
    %1534 = vmatprep.subr.mxu0 0.0
    %1535 = vmatpush1.msra.mxu0 0.0
    %1536 = vmatprep.subr.mxu0 0.0
    %1537 = vmatpush1.msra.mxu0 0.0
    %1538 = vmatprep.subr.mxu0 0.0
    %1539 = vmatpush1.msra.mxu0 0.0
    %1540 = vmatprep.subr.mxu0 0.0
    %1541 = vmatpush1.msra.mxu0 0.0
    %1542 = vmatprep.subr.mxu0 0.0
    %1543 = vmatpush1.msra.mxu0 0.0
    %1544 = vmatprep.subr.mxu0 0.0
    %1545 = vmatpush1.msra.mxu0 0.0
    %1546 = vmatprep.subr.mxu0 0.0
    %1547 = vmatpush1.msra.mxu0 0.0
    %1548 = vmatprep.subr.mxu0 0.0
    %1549 = vmatpush1.msra.mxu0 0.0
    %1550 = vmatprep.subr.mxu0 0.0
    %1551 = vmatpush1.msra.mxu0 0.0
    %1552 = vmatprep.subr.mxu0 0.0
    %1553 = vmatpush1.msra.mxu0 0.0
    %1554 = vmatprep.subr.mxu0 0.0
    %1555 = vmatpush1.msra.mxu0 0.0
    %1556 = vmatprep.subr.mxu0 0.0
    %1557 = vmatpush1.msra.mxu0 0.0
    %1558 = vmatprep.mubr.f32.mxu0 0.0
    %v1559 = vand.u32 %v474, 4294901760
    %v1560 = vsub.f32 %v474, %v1559
    %v1561 = vand.u32 %v1560, 4294901760
    %1562 = vmatmul.mubr.f32.gmra.mrb[0].mxu0 %v1561
    %v1563 = vpop.f32.mrb[0].mxu0
    %v1564 = vadd.f32 %v1475, %v1563
    %v1565 = vpop.f32.mrb[0].mxu0
    %1566 = vdwg.mxu0
    %1567 = vmatprep.subr.mxu0 0.0
    %v1568 = vand.u32 %v475, 4294901760
    %v1569 = vsub.f32 %v475, %v1568
    %v1570 = vand.u32 %v1569, 4294901760
    %1571 = vmatpush1.msra.mxu0 %v1570
    %1572 = vmatprep.subr.mxu0 0.0
    %v1573 = vand.u32 %v476, 4294901760
    %v1574 = vsub.f32 %v476, %v1573
    %v1575 = vand.u32 %v1574, 4294901760
    %1576 = vmatpush1.msra.mxu0 %v1575
    %1577 = vmatprep.subr.mxu0 0.0
    %v1578 = vand.u32 %v477, 4294901760
    %v1579 = vsub.f32 %v477, %v1578
    %v1580 = vand.u32 %v1579, 4294901760
    %1581 = vmatpush1.msra.mxu0 %v1580
    %1582 = vmatprep.subr.mxu0 0.0
    %v1583 = vand.u32 %v478, 4294901760
    %v1584 = vsub.f32 %v478, %v1583
    %v1585 = vand.u32 %v1584, 4294901760
    %1586 = vmatpush1.msra.mxu0 %v1585
    %1587 = vmatprep.subr.mxu0 0.0
    %v1588 = vand.u32 %v479, 4294901760
    %v1589 = vsub.f32 %v479, %v1588
    %v1590 = vand.u32 %v1589, 4294901760
    %1591 = vmatpush1.msra.mxu0 %v1590
    %1592 = vmatprep.subr.mxu0 0.0
    %v1593 = vand.u32 %v480, 4294901760
    %v1594 = vsub.f32 %v480, %v1593
    %v1595 = vand.u32 %v1594, 4294901760
    %1596 = vmatpush1.msra.mxu0 %v1595
    %1597 = vmatprep.subr.mxu0 0.0
    %v1598 = vand.u32 %v481, 4294901760
    %v1599 = vsub.f32 %v481, %v1598
    %v1600 = vand.u32 %v1599, 4294901760
    %1601 = vmatpush1.msra.mxu0 %v1600
    %1602 = vmatprep.subr.mxu0 0.0
    %v1603 = vand.u32 %v482, 4294901760
    %v1604 = vsub.f32 %v482, %v1603
    %v1605 = vand.u32 %v1604, 4294901760
    %1606 = vmatpush1.msra.mxu0 %v1605
    %1607 = vmatprep.subr.mxu0 0.0
    %v1608 = vand.u32 %v483, 4294901760
    %v1609 = vsub.f32 %v483, %v1608
    %v1610 = vand.u32 %v1609, 4294901760
    %1611 = vmatpush1.msra.mxu0 %v1610
    %1612 = vmatprep.subr.mxu0 0.0
    %v1613 = vand.u32 %v484, 4294901760
    %v1614 = vsub.f32 %v484, %v1613
    %v1615 = vand.u32 %v1614, 4294901760
    %1616 = vmatpush1.msra.mxu0 %v1615
    %1617 = vmatprep.subr.mxu0 0.0
    %v1618 = vand.u32 %v485, 4294901760
    %v1619 = vsub.f32 %v485, %v1618
    %v1620 = vand.u32 %v1619, 4294901760
    %1621 = vmatpush1.msra.mxu0 %v1620
    %1622 = vmatprep.subr.mxu0 0.0
    %v1623 = vand.u32 %v486, 4294901760
    %v1624 = vsub.f32 %v486, %v1623
    %v1625 = vand.u32 %v1624, 4294901760
    %1626 = vmatpush1.msra.mxu0 %v1625
    %1627 = vmatprep.subr.mxu0 0.0
    %v1628 = vand.u32 %v487, 4294901760
    %v1629 = vsub.f32 %v487, %v1628
    %v1630 = vand.u32 %v1629, 4294901760
    %1631 = vmatpush1.msra.mxu0 %v1630
    %1632 = vmatprep.subr.mxu0 0.0
    %v1633 = vand.u32 %v488, 4294901760
    %v1634 = vsub.f32 %v488, %v1633
    %v1635 = vand.u32 %v1634, 4294901760
    %1636 = vmatpush1.msra.mxu0 %v1635
    %1637 = vmatprep.subr.mxu0 0.0
    %v1638 = vand.u32 %v489, 4294901760
    %v1639 = vsub.f32 %v489, %v1638
    %v1640 = vand.u32 %v1639, 4294901760
    %1641 = vmatpush1.msra.mxu0 %v1640
    %1642 = vmatprep.subr.mxu0 0.0
    %v1643 = vand.u32 %v490, 4294901760
    %v1644 = vsub.f32 %v490, %v1643
    %v1645 = vand.u32 %v1644, 4294901760
    %1646 = vmatpush1.msra.mxu0 %v1645
    %1647 = vmatprep.subr.mxu0 0.0
    %1648 = vmatpush1.msra.mxu0 0.0
    %1649 = vmatprep.subr.mxu0 0.0
    %1650 = vmatpush1.msra.mxu0 0.0
    %1651 = vmatprep.subr.mxu0 0.0
    %1652 = vmatpush1.msra.mxu0 0.0
    %1653 = vmatprep.subr.mxu0 0.0
    %1654 = vmatpush1.msra.mxu0 0.0
    %1655 = vmatprep.subr.mxu0 0.0
    %1656 = vmatpush1.msra.mxu0 0.0
    %1657 = vmatprep.subr.mxu0 0.0
    %1658 = vmatpush1.msra.mxu0 0.0
    %1659 = vmatprep.subr.mxu0 0.0
    %1660 = vmatpush1.msra.mxu0 0.0
    %1661 = vmatprep.subr.mxu0 0.0
    %1662 = vmatpush1.msra.mxu0 0.0
    %1663 = vmatprep.subr.mxu0 0.0
    %1664 = vmatpush1.msra.mxu0 0.0
    %1665 = vmatprep.subr.mxu0 0.0
    %1666 = vmatpush1.msra.mxu0 0.0
    %1667 = vmatprep.subr.mxu0 0.0
    %1668 = vmatpush1.msra.mxu0 0.0
    %1669 = vmatprep.subr.mxu0 0.0
    %1670 = vmatpush1.msra.mxu0 0.0
    %1671 = vmatprep.subr.mxu0 0.0
    %1672 = vmatpush1.msra.mxu0 0.0
    %1673 = vmatprep.subr.mxu0 0.0
    %1674 = vmatpush1.msra.mxu0 0.0
    %1675 = vmatprep.subr.mxu0 0.0
    %1676 = vmatpush1.msra.mxu0 0.0
    %1677 = vmatprep.subr.mxu0 0.0
    %1678 = vmatpush1.msra.mxu0 0.0
    %1679 = vmatprep.mubr.f32.mxu0 0.0
    %v1680 = vand.u32 %v474, 4294901760
    %1681 = vmatmul.mubr.f32.gmra.mrb[0].mxu0 %v1680
    %v1682 = vpop.f32.mrb[0].mxu0
    %v1683 = vadd.f32 %v1564, %v1682
    %v1684 = vpop.f32.mrb[0].mxu0
    %1685 = vdwg.mxu0
    %1686 = vmatprep.subr.mxu0 0.0
    %v1687 = vand.u32 %v475, 4294901760
    %1688 = vmatpush1.msra.mxu0 %v1687
    %1689 = vmatprep.subr.mxu0 0.0
    %v1690 = vand.u32 %v476, 4294901760
    %1691 = vmatpush1.msra.mxu0 %v1690
    %1692 = vmatprep.subr.mxu0 0.0
    %v1693 = vand.u32 %v477, 4294901760
    %1694 = vmatpush1.msra.mxu0 %v1693
    %1695 = vmatprep.subr.mxu0 0.0
    %v1696 = vand.u32 %v478, 4294901760
    %1697 = vmatpush1.msra.mxu0 %v1696
    %1698 = vmatprep.subr.mxu0 0.0
    %v1699 = vand.u32 %v479, 4294901760
    %1700 = vmatpush1.msra.mxu0 %v1699
    %1701 = vmatprep.subr.mxu0 0.0
    %v1702 = vand.u32 %v480, 4294901760
    %1703 = vmatpush1.msra.mxu0 %v1702
    %1704 = vmatprep.subr.mxu0 0.0
    %v1705 = vand.u32 %v481, 4294901760
    %1706 = vmatpush1.msra.mxu0 %v1705
    %1707 = vmatprep.subr.mxu0 0.0
    %v1708 = vand.u32 %v482, 4294901760
    %1709 = vmatpush1.msra.mxu0 %v1708
    %1710 = vmatprep.subr.mxu0 0.0
    %v1711 = vand.u32 %v483, 4294901760
    %1712 = vmatpush1.msra.mxu0 %v1711
    %1713 = vmatprep.subr.mxu0 0.0
    %v1714 = vand.u32 %v484, 4294901760
    %1715 = vmatpush1.msra.mxu0 %v1714
    %1716 = vmatprep.subr.mxu0 0.0
    %v1717 = vand.u32 %v485, 4294901760
    %1718 = vmatpush1.msra.mxu0 %v1717
    %1719 = vmatprep.subr.mxu0 0.0
    %v1720 = vand.u32 %v486, 4294901760
    %1721 = vmatpush1.msra.mxu0 %v1720
    %1722 = vmatprep.subr.mxu0 0.0
    %v1723 = vand.u32 %v487, 4294901760
    %1724 = vmatpush1.msra.mxu0 %v1723
    %1725 = vmatprep.subr.mxu0 0.0
    %v1726 = vand.u32 %v488, 4294901760
    %1727 = vmatpush1.msra.mxu0 %v1726
    %1728 = vmatprep.subr.mxu0 0.0
    %v1729 = vand.u32 %v489, 4294901760
    %1730 = vmatpush1.msra.mxu0 %v1729
    %1731 = vmatprep.subr.mxu0 0.0
    %v1732 = vand.u32 %v490, 4294901760
    %1733 = vmatpush1.msra.mxu0 %v1732
    %1734 = vmatprep.subr.mxu0 0.0
    %1735 = vmatpush1.msra.mxu0 0.0
    %1736 = vmatprep.subr.mxu0 0.0
    %1737 = vmatpush1.msra.mxu0 0.0
    %1738 = vmatprep.subr.mxu0 0.0
    %1739 = vmatpush1.msra.mxu0 0.0
    %1740 = vmatprep.subr.mxu0 0.0
    %1741 = vmatpush1.msra.mxu0 0.0
    %1742 = vmatprep.subr.mxu0 0.0
    %1743 = vmatpush1.msra.mxu0 0.0
    %1744 = vmatprep.subr.mxu0 0.0
    %1745 = vmatpush1.msra.mxu0 0.0
    %1746 = vmatprep.subr.mxu0 0.0
    %1747 = vmatpush1.msra.mxu0 0.0
    %1748 = vmatprep.subr.mxu0 0.0
    %1749 = vmatpush1.msra.mxu0 0.0
    %1750 = vmatprep.subr.mxu0 0.0
    %1751 = vmatpush1.msra.mxu0 0.0
    %1752 = vmatprep.subr.mxu0 0.0
    %1753 = vmatpush1.msra.mxu0 0.0
    %1754 = vmatprep.subr.mxu0 0.0
    %1755 = vmatpush1.msra.mxu0 0.0
    %1756 = vmatprep.subr.mxu0 0.0
    %1757 = vmatpush1.msra.mxu0 0.0
    %1758 = vmatprep.subr.mxu0 0.0
    %1759 = vmatpush1.msra.mxu0 0.0
    %1760 = vmatprep.subr.mxu0 0.0
    %1761 = vmatpush1.msra.mxu0 0.0
    %1762 = vmatprep.subr.mxu0 0.0
    %1763 = vmatpush1.msra.mxu0 0.0
    %1764 = vmatprep.subr.mxu0 0.0
    %1765 = vmatpush1.msra.mxu0 0.0
    %1766 = vmatprep.mubr.f32.mxu0 0.0
    %v1767 = vand.u32 %v474, 4294901760
    %1768 = vmatmul.mubr.f32.gmra.mrb[0].mxu0 %v1767
    %v1769 = vpop.f32.mrb[0].mxu0
    %v1770 = vadd.f32 %v1683, %v1769
    %v1771 = vpop.f32.mrb[0].mxu0
    %1772 = vdwg.mxu0
    %v1773 = vmul.f32 %v1129, 0.001953125
    %v1774 = vmul.f32 %v1770, 0.001953125
    %v1775 = vmul.f32 %v1773, %v1773
    %v1776 = vsub.f32 %v1774, %v1775
    %v1777 = vld [vmem:[%s2] sm:$0x1]
    %v1778 = vadd.f32 %v1776, 1e-05
    %v1779 = vrsqrt.pop %v1778
    %v1780 = vmul.f32 %v1777, %v1779
    %v1781 = vld [vmem:[%s2 + $0x1] sm:$0x1]
    %v1782 = vmul.f32 %v1773, %v1780
    %v1783 = vsub.f32 %v1781, %v1782
    %v1784 = vlaneseq
    %v1785 = vshrl.u32 %v1784, 7
    %v1786 = vsub.s32 0, %v1785
    %v1787 = vrot.slane %v1780, %v1786
    %v1788 = vmul.f32 %v449, %v1787
    %v1789 = vmul.f32 %v450, %v1787
    %v1790 = vmul.f32 %v451, %v1787
    %v1791 = vmul.f32 %v452, %v1787
    %v1792 = vlaneseq
    %v1793 = vshrl.u32 %v1792, 7
    %v1794 = vsub.s32 0, %v1793
    %v1795 = vrot.slane %v1783, %v1794
    %v1796 = vadd.f32 %v1788, %v1795
    %v1797 = vadd.f32 %v1789, %v1795
    %v1798 = vadd.f32 %v1790, %v1795
    %v1799 = vadd.f32 %v1791, %v1795
    %v1800 = vmax.f32 %v1796, 0.0
    %v1801 = vmax.f32 %v1797, 0.0
    %v1802 = vmax.f32 %v1798, 0.0
    %v1803 = vmax.f32 %v1799, 0.0
    %vm1804 = vcmask 1040384
    %vm1805 = vsmask.f32 256
    %vm1806 = vmand %vm1804, %vm1805
    %v1807 = vld [vmem:[#allocation2] sm:$0x1]
    %v1808 = vsel %vm1806, 0, %v1807
    %1809 = vst [vmem:[#allocation2] sm:$0x1] %v1808
    %v1810 = vld [vmem:[#allocation2 + $0xc] sm:$0x1]
    %v1811 = vsel %vm1806, 0, %v1810
    %1812 = vst [vmem:[#allocation2 + $0xc] sm:$0x1] %v1811
    %vm1813 = vsmask.f32 7938
    %vm1814 = vmand %vm1804, %vm1813
    %v1815 = vld [vmem:[#allocation2 + $0x8] sm:$0x1]
    %v1816 = vsel %vm1814, 0, %v1815
    %1817 = vst [vmem:[#allocation2 + $0x8] sm:$0x1] %v1816
    %v1818 = vld [vmem:[#allocation2 + $0x14] sm:$0x1]
    %v1819 = vsel %vm1814, 0, %v1818
    %1820 = vst [vmem:[#allocation2 + $0x14] sm:$0x1] %v1819
    %v1821 = vpack.c.bf16 %v1801, %v1800
    %v1822 = vpack.c.bf16 %v1803, %v1802
    %v1825 = vunpack.c.l.b16 %v1821
    %v1826 = vunpack.c.h.b16 %v1821
    %v1827 = vunpack.c.l.b16 %v1822
    %v1828 = vunpack.c.h.b16 %v1822
    %v1829 = vpack.c.b16 %v1825, %v1825
    %v1830 = vpack.c.b16 %v1826, %v1826
    %v1831 = vpack.c.b16 %v1827, %v1827
    %v1832 = vpack.c.b16 %v1828, %v1828
    %vm1833 = vsmask.f32 4368
    %vm1834 = vmor %vm1805, %vm1833
    %v1836 = vshrl.u32 %v1829, 16
    %v1838 = vrot.slane %v1836, 7
    %v1839 = vshll.u32 %v1829, 16
    %v1841 = vor.u32 %v1838, %v1839
    %v1842 = vrot.slane %v1838, 4
    %v1844 = vshrl.u32 %v1830, 16
    %v1846 = vrot.slane %v1844, 7
    %v1847 = vshll.u32 %v1830, 16
    %v1849 = vor.u32 %v1846, %v1847
    %v1850 = vsel %vm1834, %v1842, %v1849
    %v1851 = vrot.slane %v1846, 4
    %v1853 = vshrl.u32 %v1831, 16
    %v1855 = vrot.slane %v1853, 7
    %v1856 = vshll.u32 %v1831, 16
    %v1858 = vor.u32 %v1855, %v1856
    %v1859 = vrot.slane %v1855, 4
    %v1861 = vshrl.u32 %v1832, 16
    %v1863 = vrot.slane %v1861, 7
    %v1864 = vshll.u32 %v1832, 16
    %v1866 = vor.u32 %v1863, %v1864
    %v1867 = vsel %vm1834, %v1859, %v1866
    %v1868 = vrot.slane %v1863, 4
    %vm1875 = vcmask 1043456
    %vm1876 = vmand %vm1875, %vm1813
    %v1877 = vld [vmem:[#allocation2] sm:$0xf]
    %v1878 = vsel %vm1876, %v1841, %v1877
    %1879 = vst [vmem:[#allocation2] sm:$0xf] %v1878
    %1880 = vst [vmem:[#allocation2 + $0x4] sm:$0xf] %v1850
    %v1881 = vld [vmem:[#allocation2 + $0x8] sm:$0x1]
    %v1882 = vsel %vm1806, %v1851, %v1881
    %1883 = vst [vmem:[#allocation2 + $0x8] sm:$0x1] %v1882
    %v1884 = vld [vmem:[#allocation2 + $0xc] sm:$0xf]
    %v1885 = vsel %vm1876, %v1858, %v1884
    %1886 = vst [vmem:[#allocation2 + $0xc] sm:$0xf] %v1885
    %1887 = vst [vmem:[#allocation2 + $0x10] sm:$0xf] %v1867
    %v1888 = vld [vmem:[#allocation2 + $0x14] sm:$0x1]
    %v1889 = vsel %vm1806, %v1868, %v1888
    %1890 = vst [vmem:[#allocation2 + $0x14] sm:$0x1] %v1889
    %v1891 = vld [vmem:[#allocation2] sm:$0xf]
    %v1892 = vld [vmem:[#allocation2 + $0x4] sm:$0xf]
    %v1893 = vld [vmem:[#allocation2 + $0xc] sm:$0xf]
    %v1894 = vld [vmem:[#allocation2 + $0x10] sm:$0xf]
    %v1895 = vld [vmem:[#allocation8] sm:$0xf]
    %v1896 = vld [vmem:[#allocation8 + $0x4] sm:$0xf]
    %v1897 = vld [vmem:[#allocation8 + $0x8] sm:$0xf]
    %v1898 = vld [vmem:[#allocation8 + $0xc] sm:$0xf]
    %v1899 = vld [vmem:[#allocation8 + $0x10] sm:$0xf]
    %v1900 = vld [vmem:[#allocation8 + $0x14] sm:$0xf]
    %v1901 = vld [vmem:[#allocation8 + $0x18] sm:$0xf]
    %v1902 = vld [vmem:[#allocation8 + $0x1c] sm:$0xf]
    %v1903 = vld [vmem:[#allocation8 + $0x20] sm:$0xf]
    %v1904 = vld [vmem:[#allocation8 + $0x24] sm:$0xf]
    %v1905 = vld [vmem:[#allocation8 + $0x28] sm:$0xf]
    %v1906 = vld [vmem:[#allocation8 + $0x2c] sm:$0xf]
    %v1907 = vld [vmem:[#allocation8 + $0x30] sm:$0xf]
    %v1908 = vld [vmem:[#allocation8 + $0x34] sm:$0xf]
    %v1909 = vld [vmem:[#allocation8 + $0x38] sm:$0xf]
    %v1910 = vld [vmem:[#allocation8 + $0x3c] sm:$0xf]
    %v1911 = vld [vmem:[#allocation2 + $0x8] sm:$0x1]
    %v1912 = vld [vmem:[#allocation2 + $0x14] sm:$0x1]
    %v1914 = vshrl.u32 %v1891, 16
    %v1916 = vrot.slane %v1914, 4
    %v1917 = vshll.u32 %v1891, 16
    %v1919 = vrot.slane %v1917, 5
    %v1920 = vor.u32 %v1916, %v1919
    %v1921 = vrot.slane %v1920, 4
    %v1923 = vshll.u32 %v1892, 16
    %v1925 = vrot.slane %v1923, 5
    %v1926 = vsel %vm99, %v1921, %v1925
    %v1927 = vshrl.u32 %v1892, 16
    %v1929 = vrot.slane %v1927, 4
    %v1930 = vor.u32 %v1929, %v1925
    %v1931 = vrot.slane %v1930, 4
    %v1933 = vshll.u32 %v1911, 16
    %v1935 = vrot.slane %v1933, 5
    %v1936 = vsel %vm99, %v1931, %v1935
    %v1938 = vshrl.u32 %v1893, 16
    %v1940 = vrot.slane %v1938, 4
    %v1941 = vshll.u32 %v1893, 16
    %v1943 = vrot.slane %v1941, 5
    %v1944 = vor.u32 %v1940, %v1943
    %v1945 = vrot.slane %v1944, 4
    %v1947 = vshll.u32 %v1894, 16
    %v1949 = vrot.slane %v1947, 5
    %v1950 = vsel %vm99, %v1945, %v1949
    %v1951 = vshrl.u32 %v1894, 16
    %v1953 = vrot.slane %v1951, 4
    %v1954 = vor.u32 %v1953, %v1949
    %v1955 = vrot.slane %v1954, 4
    %v1957 = vshll.u32 %v1912, 16
    %v1959 = vrot.slane %v1957, 5
    %v1960 = vsel %vm99, %v1955, %v1959
    %s1961 = scalar_lea.vmem [#allocation8], 64
    %v1962 = vld [vmem:[%s1961] sm:$0xf]
    %v1963 = vld [vmem:[%s1961 + $0x4] sm:$0xf]
    %v1964 = vld [vmem:[%s1961 + $0x8] sm:$0xf]
    %v1965 = vld [vmem:[%s1961 + $0xc] sm:$0xf]
    %v1966 = vld [vmem:[%s1961 + $0x10] sm:$0xf]
    %v1967 = vld [vmem:[%s1961 + $0x14] sm:$0xf]
    %v1968 = vld [vmem:[%s1961 + $0x18] sm:$0xf]
    %v1969 = vld [vmem:[%s1961 + $0x1c] sm:$0xf]
    %v1970 = vld [vmem:[%s1961 + $0x20] sm:$0xf]
    %v1971 = vld [vmem:[%s1961 + $0x24] sm:$0xf]
    %v1972 = vld [vmem:[%s1961 + $0x28] sm:$0xf]
    %v1973 = vld [vmem:[%s1961 + $0x2c] sm:$0xf]
    %v1974 = vld [vmem:[%s1961 + $0x30] sm:$0xf]
    %v1975 = vld [vmem:[%s1961 + $0x34] sm:$0xf]
    %v1976 = vld [vmem:[%s1961 + $0x38] sm:$0xf]
    %v1977 = vld [vmem:[%s1961 + $0x3c] sm:$0xf]
    %v1978 = vunpack.c.l.b16 %v1926
    %v1979 = vunpack.c.l.b16 %v1936
    %v1980 = vunpack.c.l.b16 %v1950
    %v1981 = vunpack.c.l.b16 %v1960
    %v1982 = vpack.c.b16 %v1979, %v1978
    %v1983 = vpack.c.b16 %v1981, %v1980
    %v2002 = vunpack.c.l.b16 %v1962
    %v2003 = vunpack.c.l.b16 %v1963
    %v2004 = vunpack.c.l.b16 %v1964
    %v2005 = vunpack.c.l.b16 %v1965
    %v2006 = vunpack.c.l.b16 %v1966
    %v2007 = vunpack.c.l.b16 %v1967
    %v2008 = vunpack.c.l.b16 %v1968
    %v2009 = vunpack.c.l.b16 %v1969
    %v2010 = vunpack.c.l.b16 %v1970
    %v2011 = vunpack.c.l.b16 %v1971
    %v2012 = vunpack.c.l.b16 %v1972
    %v2013 = vunpack.c.l.b16 %v1973
    %v2014 = vunpack.c.l.b16 %v1974
    %v2015 = vunpack.c.l.b16 %v1975
    %v2016 = vunpack.c.l.b16 %v1976
    %v2017 = vunpack.c.l.b16 %v1977
    %v2018 = vpack.c.b16 %v2003, %v2002
    %v2019 = vpack.c.b16 %v2005, %v2004
    %v2020 = vpack.c.b16 %v2007, %v2006
    %v2021 = vpack.c.b16 %v2009, %v2008
    %v2022 = vpack.c.b16 %v2011, %v2010
    %v2023 = vpack.c.b16 %v2013, %v2012
    %v2024 = vpack.c.b16 %v2015, %v2014
    %v2025 = vpack.c.b16 %v2017, %v2016
    %2034 = vmatprep.subr.bf16.mxu0 0
    %2035 = vmatpush1.bf16.msra.mxu0 %v2018
    %2036 = vmatprep.subr.bf16.mxu0 0
    %2037 = vmatpush1.bf16.msra.mxu0 %v2019
    %2038 = vmatprep.subr.bf16.mxu0 0
    %2039 = vmatpush1.bf16.msra.mxu0 %v2020
    %2040 = vmatprep.subr.bf16.mxu0 0
    %2041 = vmatpush1.bf16.msra.mxu0 %v2021
    %2042 = vmatprep.subr.bf16.mxu0 0
    %2043 = vmatpush1.bf16.msra.mxu0 %v2022
    %2044 = vmatprep.subr.bf16.mxu0 0
    %2045 = vmatpush1.bf16.msra.mxu0 %v2023
    %2046 = vmatprep.subr.bf16.mxu0 0
    %2047 = vmatpush1.bf16.msra.mxu0 %v2024
    %2048 = vmatprep.subr.bf16.mxu0 0
    %2049 = vmatpush1.bf16.msra.mxu0 %v2025
    %2050 = vmatprep.subr.bf16.mxu0 0
    %2051 = vmatpush1.bf16.msra.mxu0 0
    %2052 = vmatprep.subr.bf16.mxu0 0
    %2053 = vmatpush1.bf16.msra.mxu0 0
    %2054 = vmatprep.subr.bf16.mxu0 0
    %2055 = vmatpush1.bf16.msra.mxu0 0
    %2056 = vmatprep.subr.bf16.mxu0 0
    %2057 = vmatpush1.bf16.msra.mxu0 0
    %2058 = vmatprep.subr.bf16.mxu0 0
    %2059 = vmatpush1.bf16.msra.mxu0 0
    %2060 = vmatprep.subr.bf16.mxu0 0
    %2061 = vmatpush1.bf16.msra.mxu0 0
    %2062 = vmatprep.subr.bf16.mxu0 0
    %2063 = vmatpush1.bf16.msra.mxu0 0
    %2064 = vmatprep.subr.bf16.mxu0 0
    %2065 = vmatpush1.bf16.msra.mxu0 0
    %2066 = vmatprep.mubr.bf16.mxu0 0
    %2067 = vmatmul.mubr.bf16.gmra.mrb[0].mxu0 %v1982
    %v2068 = vpop.f32.mrb[0].mxu0
    %v2069 = vadd.f32 0.0, %v2068
    %v2070 = vpop.f32.mrb[0].mxu0
    %v2071 = vpop.f32.mrb[0].mxu0
    %v2072 = vadd.f32 0.0, %v2071
    %v2073 = vpop.f32.mrb[0].mxu0
    %2074 = vmatprep.mubr.bf16.mxu0 0
    %2075 = vmatmul.mubr.bf16.gmra.mrb[0].mxu0 %v1983
    %v2076 = vpop.f32.mrb[0].mxu0
    %v2077 = vadd.f32 0.0, %v2076
    %v2078 = vpop.f32.mrb[0].mxu0
    %v2079 = vpop.f32.mrb[0].mxu0
    %v2080 = vadd.f32 0.0, %v2079
    %v2081 = vpop.f32.mrb[0].mxu0
    %2082 = vdwg.mxu0
    %v2087 = vunpack.c.l.b16 %v1891
    %v2088 = vunpack.c.l.b16 %v1892
    %v2089 = vunpack.c.l.b16 %v1893
    %v2090 = vunpack.c.l.b16 %v1894
    %v2091 = vpack.c.b16 %v2088, %v2087
    %v2092 = vpack.c.b16 %v2090, %v2089
    %v2111 = vunpack.c.l.b16 %v1895
    %v2112 = vunpack.c.l.b16 %v1896
    %v2113 = vunpack.c.l.b16 %v1897
    %v2114 = vunpack.c.l.b16 %v1898
    %v2115 = vunpack.c.l.b16 %v1899
    %v2116 = vunpack.c.l.b16 %v1900
    %v2117 = vunpack.c.l.b16 %v1901
    %v2118 = vunpack.c.l.b16 %v1902
    %v2119 = vunpack.c.l.b16 %v1903
    %v2120 = vunpack.c.l.b16 %v1904
    %v2121 = vunpack.c.l.b16 %v1905
    %v2122 = vunpack.c.l.b16 %v1906
    %v2123 = vunpack.c.l.b16 %v1907
    %v2124 = vunpack.c.l.b16 %v1908
    %v2125 = vunpack.c.l.b16 %v1909
    %v2126 = vunpack.c.l.b16 %v1910
    %v2127 = vpack.c.b16 %v2112, %v2111
    %v2128 = vpack.c.b16 %v2114, %v2113
    %v2129 = vpack.c.b16 %v2116, %v2115
    %v2130 = vpack.c.b16 %v2118, %v2117
    %v2131 = vpack.c.b16 %v2120, %v2119
    %v2132 = vpack.c.b16 %v2122, %v2121
    %v2133 = vpack.c.b16 %v2124, %v2123
    %v2134 = vpack.c.b16 %v2126, %v2125
    %2143 = vmatprep.subr.bf16.mxu0 0
    %2144 = vmatpush1.bf16.msra.mxu0 %v2127
    %2145 = vmatprep.subr.bf16.mxu0 0
    %2146 = vmatpush1.bf16.msra.mxu0 %v2128
    %2147 = vmatprep.subr.bf16.mxu0 0
    %2148 = vmatpush1.bf16.msra.mxu0 %v2129
    %2149 = vmatprep.subr.bf16.mxu0 0
    %2150 = vmatpush1.bf16.msra.mxu0 %v2130
    %2151 = vmatprep.subr.bf16.mxu0 0
    %2152 = vmatpush1.bf16.msra.mxu0 %v2131
    %2153 = vmatprep.subr.bf16.mxu0 0
    %2154 = vmatpush1.bf16.msra.mxu0 %v2132
    %2155 = vmatprep.subr.bf16.mxu0 0
    %2156 = vmatpush1.bf16.msra.mxu0 %v2133
    %2157 = vmatprep.subr.bf16.mxu0 0
    %2158 = vmatpush1.bf16.msra.mxu0 %v2134
    %2159 = vmatprep.subr.bf16.mxu0 0
    %2160 = vmatpush1.bf16.msra.mxu0 0
    %2161 = vmatprep.subr.bf16.mxu0 0
    %2162 = vmatpush1.bf16.msra.mxu0 0
    %2163 = vmatprep.subr.bf16.mxu0 0
    %2164 = vmatpush1.bf16.msra.mxu0 0
    %2165 = vmatprep.subr.bf16.mxu0 0
    %2166 = vmatpush1.bf16.msra.mxu0 0
    %2167 = vmatprep.subr.bf16.mxu0 0
    %2168 = vmatpush1.bf16.msra.mxu0 0
    %2169 = vmatprep.subr.bf16.mxu0 0
    %2170 = vmatpush1.bf16.msra.mxu0 0
    %2171 = vmatprep.subr.bf16.mxu0 0
    %2172 = vmatpush1.bf16.msra.mxu0 0
    %2173 = vmatprep.subr.bf16.mxu0 0
    %2174 = vmatpush1.bf16.msra.mxu0 0
    %2175 = vmatprep.mubr.bf16.mxu0 0
    %2176 = vmatmul.mubr.bf16.gmra.mrb[0].mxu0 %v2091
    %v2177 = vpop.f32.mrb[0].mxu0
    %v2178 = vadd.f32 %v2069, %v2177
    %v2179 = vpop.f32.mrb[0].mxu0
    %v2180 = vpop.f32.mrb[0].mxu0
    %v2181 = vadd.f32 %v2072, %v2180
    %v2182 = vpop.f32.mrb[0].mxu0
    %2183 = vmatprep.mubr.bf16.mxu0 0
    %2184 = vmatmul.mubr.bf16.gmra.mrb[0].mxu0 %v2092
    %v2185 = vpop.f32.mrb[0].mxu0
    %v2186 = vadd.f32 %v2077, %v2185
    %v2187 = vpop.f32.mrb[0].mxu0
    %v2188 = vpop.f32.mrb[0].mxu0
    %v2189 = vadd.f32 %v2080, %v2188
    %v2190 = vpop.f32.mrb[0].mxu0
    %2191 = vdwg.mxu0
    %v2192 = vld [vmem:[#allocation2] sm:$0xe]
    %v2193 = vld [vmem:[#allocation2 + $0xc] sm:$0xe]
    %v2198 = vrot.slane %v2192, 5
    %v2199 = vrot.slane %v2198, 4
    %v2200 = vrot.slane %v1892, 5
    %v2201 = vsel %vm340, %v2199, %v2200
    %v2202 = vrot.slane %v2200, 4
    %v2203 = vrot.slane %v1911, 5
    %v2204 = vsel %vm340, %v2202, %v2203
    %v2205 = vrot.slane %v2193, 5
    %v2206 = vrot.slane %v2205, 4
    %v2207 = vrot.slane %v1894, 5
    %v2208 = vsel %vm340, %v2206, %v2207
    %v2209 = vrot.slane %v2207, 4
    %v2210 = vrot.slane %v1912, 5
    %v2211 = vsel %vm340, %v2209, %v2210
    %s2212 = scalar_lea.vmem [#allocation8], 128
    %v2213 = vld [vmem:[%s2212] sm:$0xf]
    %v2214 = vld [vmem:[%s2212 + $0x4] sm:$0xf]
    %v2215 = vld [vmem:[%s2212 + $0x8] sm:$0xf]
    %v2216 = vld [vmem:[%s2212 + $0xc] sm:$0xf]
    %v2217 = vld [vmem:[%s2212 + $0x10] sm:$0xf]
    %v2218 = vld [vmem:[%s2212 + $0x14] sm:$0xf]
    %v2219 = vld [vmem:[%s2212 + $0x18] sm:$0xf]
    %v2220 = vld [vmem:[%s2212 + $0x1c] sm:$0xf]
    %v2221 = vld [vmem:[%s2212 + $0x20] sm:$0xf]
    %v2222 = vld [vmem:[%s2212 + $0x24] sm:$0xf]
    %v2223 = vld [vmem:[%s2212 + $0x28] sm:$0xf]
    %v2224 = vld [vmem:[%s2212 + $0x2c] sm:$0xf]
    %v2225 = vld [vmem:[%s2212 + $0x30] sm:$0xf]
    %v2226 = vld [vmem:[%s2212 + $0x34] sm:$0xf]
    %v2227 = vld [vmem:[%s2212 + $0x38] sm:$0xf]
    %v2228 = vld [vmem:[%s2212 + $0x3c] sm:$0xf]
    %v2229 = vunpack.c.l.b16 %v2201
    %v2230 = vunpack.c.l.b16 %v2204
    %v2231 = vunpack.c.l.b16 %v2208
    %v2232 = vunpack.c.l.b16 %v2211
    %v2233 = vpack.c.b16 %v2230, %v2229
    %v2234 = vpack.c.b16 %v2232, %v2231
    %v2253 = vunpack.c.l.b16 %v2213
    %v2254 = vunpack.c.l.b16 %v2214
    %v2255 = vunpack.c.l.b16 %v2215
    %v2256 = vunpack.c.l.b16 %v2216
    %v2257 = vunpack.c.l.b16 %v2217
    %v2258 = vunpack.c.l.b16 %v2218
    %v2259 = vunpack.c.l.b16 %v2219
    %v2260 = vunpack.c.l.b16 %v2220
    %v2261 = vunpack.c.l.b16 %v2221
    %v2262 = vunpack.c.l.b16 %v2222
    %v2263 = vunpack.c.l.b16 %v2223
    %v2264 = vunpack.c.l.b16 %v2224
    %v2265 = vunpack.c.l.b16 %v2225
    %v2266 = vunpack.c.l.b16 %v2226
    %v2267 = vunpack.c.l.b16 %v2227
    %v2268 = vunpack.c.l.b16 %v2228
    %v2269 = vpack.c.b16 %v2254, %v2253
    %v2270 = vpack.c.b16 %v2256, %v2255
    %v2271 = vpack.c.b16 %v2258, %v2257
    %v2272 = vpack.c.b16 %v2260, %v2259
    %v2273 = vpack.c.b16 %v2262, %v2261
    %v2274 = vpack.c.b16 %v2264, %v2263
    %v2275 = vpack.c.b16 %v2266, %v2265
    %v2276 = vpack.c.b16 %v2268, %v2267
    %2285 = vmatprep.subr.bf16.mxu0 0
    %2286 = vmatpush1.bf16.msra.mxu0 %v2269
    %2287 = vmatprep.subr.bf16.mxu0 0
    %2288 = vmatpush1.bf16.msra.mxu0 %v2270
    %2289 = vmatprep.subr.bf16.mxu0 0
    %2290 = vmatpush1.bf16.msra.mxu0 %v2271
    %2291 = vmatprep.subr.bf16.mxu0 0
    %2292 = vmatpush1.bf16.msra.mxu0 %v2272
    %2293 = vmatprep.subr.bf16.mxu0 0
    %2294 = vmatpush1.bf16.msra.mxu0 %v2273
    %2295 = vmatprep.subr.bf16.mxu0 0
    %2296 = vmatpush1.bf16.msra.mxu0 %v2274
    %2297 = vmatprep.subr.bf16.mxu0 0
    %2298 = vmatpush1.bf16.msra.mxu0 %v2275
    %2299 = vmatprep.subr.bf16.mxu0 0
    %2300 = vmatpush1.bf16.msra.mxu0 %v2276
    %2301 = vmatprep.subr.bf16.mxu0 0
    %2302 = vmatpush1.bf16.msra.mxu0 0
    %2303 = vmatprep.subr.bf16.mxu0 0
    %2304 = vmatpush1.bf16.msra.mxu0 0
    %2305 = vmatprep.subr.bf16.mxu0 0
    %2306 = vmatpush1.bf16.msra.mxu0 0
    %2307 = vmatprep.subr.bf16.mxu0 0
    %2308 = vmatpush1.bf16.msra.mxu0 0
    %2309 = vmatprep.subr.bf16.mxu0 0
    %2310 = vmatpush1.bf16.msra.mxu0 0
    %2311 = vmatprep.subr.bf16.mxu0 0
    %2312 = vmatpush1.bf16.msra.mxu0 0
    %2313 = vmatprep.subr.bf16.mxu0 0
    %2314 = vmatpush1.bf16.msra.mxu0 0
    %2315 = vmatprep.subr.bf16.mxu0 0
    %2316 = vmatpush1.bf16.msra.mxu0 0
    %2317 = vmatprep.mubr.bf16.mxu0 0
    %2318 = vmatmul.mubr.bf16.gmra.mrb[0].mxu0 %v2233
    %v2319 = vpop.f32.mrb[0].mxu0
    %v2320 = vadd.f32 0.0, %v2319
    %v2321 = vpop.f32.mrb[0].mxu0
    %v2322 = vpop.f32.mrb[0].mxu0
    %v2323 = vadd.f32 0.0, %v2322
    %v2324 = vpop.f32.mrb[0].mxu0
    %2325 = vmatprep.mubr.bf16.mxu0 0
    %2326 = vmatmul.mubr.bf16.gmra.mrb[0].mxu0 %v2234
    %v2327 = vpop.f32.mrb[0].mxu0
    %v2328 = vadd.f32 0.0, %v2327
    %v2329 = vpop.f32.mrb[0].mxu0
    %v2330 = vpop.f32.mrb[0].mxu0
    %v2331 = vadd.f32 0.0, %v2330
    %v2332 = vpop.f32.mrb[0].mxu0
    %2333 = vdwg.mxu0
    %v2334 = vadd.f32 %v2178, %v2320
    %v2335 = vadd.f32 %v2181, %v2323
    %v2336 = vadd.f32 %v2186, %v2328
    %v2337 = vadd.f32 %v2189, %v2331
    %v2338 = vadd.f32 %v2334, %v2335
    %v2339 = vadd.f32 %v2338, %v2336
    %v2340 = vadd.f32 %v2339, %v2337
    %v2341 = vrot.slane %v2340, 4
    %v2342 = vadd.f32 %v2340, %v2341
    %v2343 = vrot.slane %v2342, 2
    %v2344 = vadd.f32 %v2342, %v2343
    %v2345 = vrot.slane %v2344, 1
    %v2346 = vadd.f32 %v2344, %v2345
    %v2347 = vmul.f32 %v2334, %v2334
    %v2348 = vmul.f32 %v2335, %v2335
    %v2349 = vmul.f32 %v2336, %v2336
    %v2350 = vmul.f32 %v2337, %v2337
    %v2351 = vadd.f32 %v2347, %v2348
    %v2352 = vadd.f32 %v2351, %v2349
    %v2353 = vadd.f32 %v2352, %v2350
    %v2354 = vrot.slane %v2353, 4
    %v2355 = vadd.f32 %v2353, %v2354
    %v2356 = vrot.slane %v2355, 2
    %v2357 = vadd.f32 %v2355, %v2356
    %v2358 = vrot.slane %v2357, 1
    %v2359 = vadd.f32 %v2357, %v2358
    %v2360 = vld [vmem:[#allocation9] sm:$0xff]
    %v2361 = vld [vmem:[#allocation9 + $0x8] sm:$0xff]
    %v2362 = vld [vmem:[#allocation9 + $0x10] sm:$0xff]
    %v2363 = vld [vmem:[#allocation9 + $0x18] sm:$0xff]
    %v2364 = vld [vmem:[#allocation9 + $0x20] sm:$0xff]
    %v2365 = vld [vmem:[#allocation9 + $0x28] sm:$0xff]
    %v2366 = vld [vmem:[#allocation9 + $0x30] sm:$0xff]
    %v2367 = vld [vmem:[#allocation9 + $0x38] sm:$0xff]
    %v2368 = vld [vmem:[#allocation9 + $0x40] sm:$0xff]
    %v2369 = vld [vmem:[#allocation9 + $0x48] sm:$0xff]
    %v2370 = vld [vmem:[#allocation9 + $0x50] sm:$0xff]
    %v2371 = vld [vmem:[#allocation9 + $0x58] sm:$0xff]
    %v2372 = vld [vmem:[#allocation9 + $0x60] sm:$0xff]
    %v2373 = vld [vmem:[#allocation9 + $0x68] sm:$0xff]
    %v2374 = vld [vmem:[#allocation9 + $0x70] sm:$0xff]
    %v2375 = vld [vmem:[#allocation9 + $0x78] sm:$0xff]
    %2376 = vmatprep.subr.mxu0 0.0
    %v2377 = vand.u32 %v2360, 4294901760
    %2378 = vmatpush1.msra.mxu0 %v2377
    %2379 = vmatprep.subr.mxu0 0.0
    %v2380 = vand.u32 %v2361, 4294901760
    %2381 = vmatpush1.msra.mxu0 %v2380
    %2382 = vmatprep.subr.mxu0 0.0
    %v2383 = vand.u32 %v2362, 4294901760
    %2384 = vmatpush1.msra.mxu0 %v2383
    %2385 = vmatprep.subr.mxu0 0.0
    %v2386 = vand.u32 %v2363, 4294901760
    %2387 = vmatpush1.msra.mxu0 %v2386
    %2388 = vmatprep.subr.mxu0 0.0
    %v2389 = vand.u32 %v2364, 4294901760
    %2390 = vmatpush1.msra.mxu0 %v2389
    %2391 = vmatprep.subr.mxu0 0.0
    %v2392 = vand.u32 %v2365, 4294901760
    %2393 = vmatpush1.msra.mxu0 %v2392
    %2394 = vmatprep.subr.mxu0 0.0
    %v2395 = vand.u32 %v2366, 4294901760
    %2396 = vmatpush1.msra.mxu0 %v2395
    %2397 = vmatprep.subr.mxu0 0.0
    %v2398 = vand.u32 %v2367, 4294901760
    %2399 = vmatpush1.msra.mxu0 %v2398
    %2400 = vmatprep.subr.mxu0 0.0
    %v2401 = vand.u32 %v2368, 4294901760
    %2402 = vmatpush1.msra.mxu0 %v2401
    %2403 = vmatprep.subr.mxu0 0.0
    %v2404 = vand.u32 %v2369, 4294901760
    %2405 = vmatpush1.msra.mxu0 %v2404
    %2406 = vmatprep.subr.mxu0 0.0
    %v2407 = vand.u32 %v2370, 4294901760
    %2408 = vmatpush1.msra.mxu0 %v2407
    %2409 = vmatprep.subr.mxu0 0.0
    %v2410 = vand.u32 %v2371, 4294901760
    %2411 = vmatpush1.msra.mxu0 %v2410
    %2412 = vmatprep.subr.mxu0 0.0
    %v2413 = vand.u32 %v2372, 4294901760
    %2414 = vmatpush1.msra.mxu0 %v2413
    %2415 = vmatprep.subr.mxu0 0.0
    %v2416 = vand.u32 %v2373, 4294901760
    %2417 = vmatpush1.msra.mxu0 %v2416
    %2418 = vmatprep.subr.mxu0 0.0
    %v2419 = vand.u32 %v2374, 4294901760
    %2420 = vmatpush1.msra.mxu0 %v2419
    %2421 = vmatprep.subr.mxu0 0.0
    %v2422 = vand.u32 %v2375, 4294901760
    %2423 = vmatpush1.msra.mxu0 %v2422
    %2424 = vmatprep.subr.mxu0 0.0
    %2425 = vmatpush1.msra.mxu0 0.0
    %2426 = vmatprep.subr.mxu0 0.0
    %2427 = vmatpush1.msra.mxu0 0.0
    %2428 = vmatprep.subr.mxu0 0.0
    %2429 = vmatpush1.msra.mxu0 0.0
    %2430 = vmatprep.subr.mxu0 0.0
    %2431 = vmatpush1.msra.mxu0 0.0
    %2432 = vmatprep.subr.mxu0 0.0
    %2433 = vmatpush1.msra.mxu0 0.0
    %2434 = vmatprep.subr.mxu0 0.0
    %2435 = vmatpush1.msra.mxu0 0.0
    %2436 = vmatprep.subr.mxu0 0.0
    %2437 = vmatpush1.msra.mxu0 0.0
    %2438 = vmatprep.subr.mxu0 0.0
    %2439 = vmatpush1.msra.mxu0 0.0
    %2440 = vmatprep.subr.mxu0 0.0
    %2441 = vmatpush1.msra.mxu0 0.0
    %2442 = vmatprep.subr.mxu0 0.0
    %2443 = vmatpush1.msra.mxu0 0.0
    %2444 = vmatprep.subr.mxu0 0.0
    %2445 = vmatpush1.msra.mxu0 0.0
    %2446 = vmatprep.subr.mxu0 0.0
    %2447 = vmatpush1.msra.mxu0 0.0
    %2448 = vmatprep.subr.mxu0 0.0
    %2449 = vmatpush1.msra.mxu0 0.0
    %2450 = vmatprep.subr.mxu0 0.0
    %2451 = vmatpush1.msra.mxu0 0.0
    %2452 = vmatprep.subr.mxu0 0.0
    %2453 = vmatpush1.msra.mxu0 0.0
    %2454 = vmatprep.subr.mxu0 0.0
    %2455 = vmatpush1.msra.mxu0 0.0
    %2456 = vmatprep.mubr.f32.mxu0 0.0
    %v2457 = vand.u32 %v2346, 4294901760
    %v2458 = vsub.f32 %v2346, %v2457
    %v2459 = vand.u32 %v2458, 4294901760
    %v2460 = vsub.f32 %v2458, %v2459
    %v2461 = vand.u32 %v2460, 4294901760
    %2462 = vmatmul.mubr.f32.gmra.mrb[0].mxu0 %v2461
    %v2463 = vpop.f32.mrb[0].mxu0
    %v2464 = vadd.f32 0.0, %v2463
    %v2465 = vpop.f32.mrb[0].mxu0
    %2466 = vdwg.mxu0
    %2467 = vmatprep.subr.mxu0 0.0
    %v2468 = vand.u32 %v2360, 4294901760
    %v2469 = vsub.f32 %v2360, %v2468
    %v2470 = vand.u32 %v2469, 4294901760
    %v2471 = vsub.f32 %v2469, %v2470
    %v2472 = vand.u32 %v2471, 4294901760
    %2473 = vmatpush1.msra.mxu0 %v2472
    %2474 = vmatprep.subr.mxu0 0.0
    %v2475 = vand.u32 %v2361, 4294901760
    %v2476 = vsub.f32 %v2361, %v2475
    %v2477 = vand.u32 %v2476, 4294901760
    %v2478 = vsub.f32 %v2476, %v2477
    %v2479 = vand.u32 %v2478, 4294901760
    %2480 = vmatpush1.msra.mxu0 %v2479
    %2481 = vmatprep.subr.mxu0 0.0
    %v2482 = vand.u32 %v2362, 4294901760
    %v2483 = vsub.f32 %v2362, %v2482
    %v2484 = vand.u32 %v2483, 4294901760
    %v2485 = vsub.f32 %v2483, %v2484
    %v2486 = vand.u32 %v2485, 4294901760
    %2487 = vmatpush1.msra.mxu0 %v2486
    %2488 = vmatprep.subr.mxu0 0.0
    %v2489 = vand.u32 %v2363, 4294901760
    %v2490 = vsub.f32 %v2363, %v2489
    %v2491 = vand.u32 %v2490, 4294901760
    %v2492 = vsub.f32 %v2490, %v2491
    %v2493 = vand.u32 %v2492, 4294901760
    %2494 = vmatpush1.msra.mxu0 %v2493
    %2495 = vmatprep.subr.mxu0 0.0
    %v2496 = vand.u32 %v2364, 4294901760
    %v2497 = vsub.f32 %v2364, %v2496
    %v2498 = vand.u32 %v2497, 4294901760
    %v2499 = vsub.f32 %v2497, %v2498
    %v2500 = vand.u32 %v2499, 4294901760
    %2501 = vmatpush1.msra.mxu0 %v2500
    %2502 = vmatprep.subr.mxu0 0.0
    %v2503 = vand.u32 %v2365, 4294901760
    %v2504 = vsub.f32 %v2365, %v2503
    %v2505 = vand.u32 %v2504, 4294901760
    %v2506 = vsub.f32 %v2504, %v2505
    %v2507 = vand.u32 %v2506, 4294901760
    %2508 = vmatpush1.msra.mxu0 %v2507
    %2509 = vmatprep.subr.mxu0 0.0
    %v2510 = vand.u32 %v2366, 4294901760
    %v2511 = vsub.f32 %v2366, %v2510
    %v2512 = vand.u32 %v2511, 4294901760
    %v2513 = vsub.f32 %v2511, %v2512
    %v2514 = vand.u32 %v2513, 4294901760
    %2515 = vmatpush1.msra.mxu0 %v2514
    %2516 = vmatprep.subr.mxu0 0.0
    %v2517 = vand.u32 %v2367, 4294901760
    %v2518 = vsub.f32 %v2367, %v2517
    %v2519 = vand.u32 %v2518, 4294901760
    %v2520 = vsub.f32 %v2518, %v2519
    %v2521 = vand.u32 %v2520, 4294901760
    %2522 = vmatpush1.msra.mxu0 %v2521
    %2523 = vmatprep.subr.mxu0 0.0
    %v2524 = vand.u32 %v2368, 4294901760
    %v2525 = vsub.f32 %v2368, %v2524
    %v2526 = vand.u32 %v2525, 4294901760
    %v2527 = vsub.f32 %v2525, %v2526
    %v2528 = vand.u32 %v2527, 4294901760
    %2529 = vmatpush1.msra.mxu0 %v2528
    %2530 = vmatprep.subr.mxu0 0.0
    %v2531 = vand.u32 %v2369, 4294901760
    %v2532 = vsub.f32 %v2369, %v2531
    %v2533 = vand.u32 %v2532, 4294901760
    %v2534 = vsub.f32 %v2532, %v2533
    %v2535 = vand.u32 %v2534, 4294901760
    %2536 = vmatpush1.msra.mxu0 %v2535
    %2537 = vmatprep.subr.mxu0 0.0
    %v2538 = vand.u32 %v2370, 4294901760
    %v2539 = vsub.f32 %v2370, %v2538
    %v2540 = vand.u32 %v2539, 4294901760
    %v2541 = vsub.f32 %v2539, %v2540
    %v2542 = vand.u32 %v2541, 4294901760
    %2543 = vmatpush1.msra.mxu0 %v2542
    %2544 = vmatprep.subr.mxu0 0.0
    %v2545 = vand.u32 %v2371, 4294901760
    %v2546 = vsub.f32 %v2371, %v2545
    %v2547 = vand.u32 %v2546, 4294901760
    %v2548 = vsub.f32 %v2546, %v2547
    %v2549 = vand.u32 %v2548, 4294901760
    %2550 = vmatpush1.msra.mxu0 %v2549
    %2551 = vmatprep.subr.mxu0 0.0
    %v2552 = vand.u32 %v2372, 4294901760
    %v2553 = vsub.f32 %v2372, %v2552
    %v2554 = vand.u32 %v2553, 4294901760
    %v2555 = vsub.f32 %v2553, %v2554
    %v2556 = vand.u32 %v2555, 4294901760
    %2557 = vmatpush1.msra.mxu0 %v2556
    %2558 = vmatprep.subr.mxu0 0.0
    %v2559 = vand.u32 %v2373, 4294901760
    %v2560 = vsub.f32 %v2373, %v2559
    %v2561 = vand.u32 %v2560, 4294901760
    %v2562 = vsub.f32 %v2560, %v2561
    %v2563 = vand.u32 %v2562, 4294901760
    %2564 = vmatpush1.msra.mxu0 %v2563
    %2565 = vmatprep.subr.mxu0 0.0
    %v2566 = vand.u32 %v2374, 4294901760
    %v2567 = vsub.f32 %v2374, %v2566
    %v2568 = vand.u32 %v2567, 4294901760
    %v2569 = vsub.f32 %v2567, %v2568
    %v2570 = vand.u32 %v2569, 4294901760
    %2571 = vmatpush1.msra.mxu0 %v2570
    %2572 = vmatprep.subr.mxu0 0.0
    %v2573 = vand.u32 %v2375, 4294901760
    %v2574 = vsub.f32 %v2375, %v2573
    %v2575 = vand.u32 %v2574, 4294901760
    %v2576 = vsub.f32 %v2574, %v2575
    %v2577 = vand.u32 %v2576, 4294901760
    %2578 = vmatpush1.msra.mxu0 %v2577
    %2579 = vmatprep.subr.mxu0 0.0
    %2580 = vmatpush1.msra.mxu0 0.0
    %2581 = vmatprep.subr.mxu0 0.0
    %2582 = vmatpush1.msra.mxu0 0.0
    %2583 = vmatprep.subr.mxu0 0.0
    %2584 = vmatpush1.msra.mxu0 0.0
    %2585 = vmatprep.subr.mxu0 0.0
    %2586 = vmatpush1.msra.mxu0 0.0
    %2587 = vmatprep.subr.mxu0 0.0
    %2588 = vmatpush1.msra.mxu0 0.0
    %2589 = vmatprep.subr.mxu0 0.0
    %2590 = vmatpush1.msra.mxu0 0.0
    %2591 = vmatprep.subr.mxu0 0.0
    %2592 = vmatpush1.msra.mxu0 0.0
    %2593 = vmatprep.subr.mxu0 0.0
    %2594 = vmatpush1.msra.mxu0 0.0
    %2595 = vmatprep.subr.mxu0 0.0
    %2596 = vmatpush1.msra.mxu0 0.0
    %2597 = vmatprep.subr.mxu0 0.0
    %2598 = vmatpush1.msra.mxu0 0.0
    %2599 = vmatprep.subr.mxu0 0.0
    %2600 = vmatpush1.msra.mxu0 0.0
    %2601 = vmatprep.subr.mxu0 0.0
    %2602 = vmatpush1.msra.mxu0 0.0
    %2603 = vmatprep.subr.mxu0 0.0
    %2604 = vmatpush1.msra.mxu0 0.0
    %2605 = vmatprep.subr.mxu0 0.0
    %2606 = vmatpush1.msra.mxu0 0.0
    %2607 = vmatprep.subr.mxu0 0.0
    %2608 = vmatpush1.msra.mxu0 0.0
    %2609 = vmatprep.subr.mxu0 0.0
    %2610 = vmatpush1.msra.mxu0 0.0
    %2611 = vmatprep.mubr.f32.mxu0 0.0
    %v2612 = vand.u32 %v2346, 4294901760
    %2613 = vmatmul.mubr.f32.gmra.mrb[0].mxu0 %v2612
    %v2614 = vpop.f32.mrb[0].mxu0
    %v2615 = vadd.f32 %v2464, %v2614
    %v2616 = vpop.f32.mrb[0].mxu0
    %2617 = vdwg.mxu0
    %2618 = vmatprep.subr.mxu0 0.0
    %v2619 = vand.u32 %v2360, 4294901760
    %v2620 = vsub.f32 %v2360, %v2619
    %2621 = vmatpush1.msra.mxu0 %v2620
    %2622 = vmatprep.subr.mxu0 0.0
    %v2623 = vand.u32 %v2361, 4294901760
    %v2624 = vsub.f32 %v2361, %v2623
    %2625 = vmatpush1.msra.mxu0 %v2624
    %2626 = vmatprep.subr.mxu0 0.0
    %v2627 = vand.u32 %v2362, 4294901760
    %v2628 = vsub.f32 %v2362, %v2627
    %2629 = vmatpush1.msra.mxu0 %v2628
    %2630 = vmatprep.subr.mxu0 0.0
    %v2631 = vand.u32 %v2363, 4294901760
    %v2632 = vsub.f32 %v2363, %v2631
    %2633 = vmatpush1.msra.mxu0 %v2632
    %2634 = vmatprep.subr.mxu0 0.0
    %v2635 = vand.u32 %v2364, 4294901760
    %v2636 = vsub.f32 %v2364, %v2635
    %2637 = vmatpush1.msra.mxu0 %v2636
    %2638 = vmatprep.subr.mxu0 0.0
    %v2639 = vand.u32 %v2365, 4294901760
    %v2640 = vsub.f32 %v2365, %v2639
    %2641 = vmatpush1.msra.mxu0 %v2640
    %2642 = vmatprep.subr.mxu0 0.0
    %v2643 = vand.u32 %v2366, 4294901760
    %v2644 = vsub.f32 %v2366, %v2643
    %2645 = vmatpush1.msra.mxu0 %v2644
    %2646 = vmatprep.subr.mxu0 0.0
    %v2647 = vand.u32 %v2367, 4294901760
    %v2648 = vsub.f32 %v2367, %v2647
    %2649 = vmatpush1.msra.mxu0 %v2648
    %2650 = vmatprep.subr.mxu0 0.0
    %v2651 = vand.u32 %v2368, 4294901760
    %v2652 = vsub.f32 %v2368, %v2651
    %2653 = vmatpush1.msra.mxu0 %v2652
    %2654 = vmatprep.subr.mxu0 0.0
    %v2655 = vand.u32 %v2369, 4294901760
    %v2656 = vsub.f32 %v2369, %v2655
    %2657 = vmatpush1.msra.mxu0 %v2656
    %2658 = vmatprep.subr.mxu0 0.0
    %v2659 = vand.u32 %v2370, 4294901760
    %v2660 = vsub.f32 %v2370, %v2659
    %2661 = vmatpush1.msra.mxu0 %v2660
    %2662 = vmatprep.subr.mxu0 0.0
    %v2663 = vand.u32 %v2371, 4294901760
    %v2664 = vsub.f32 %v2371, %v2663
    %2665 = vmatpush1.msra.mxu0 %v2664
    %2666 = vmatprep.subr.mxu0 0.0
    %v2667 = vand.u32 %v2372, 4294901760
    %v2668 = vsub.f32 %v2372, %v2667
    %2669 = vmatpush1.msra.mxu0 %v2668
    %2670 = vmatprep.subr.mxu0 0.0
    %v2671 = vand.u32 %v2373, 4294901760
    %v2672 = vsub.f32 %v2373, %v2671
    %2673 = vmatpush1.msra.mxu0 %v2672
    %2674 = vmatprep.subr.mxu0 0.0
    %v2675 = vand.u32 %v2374, 4294901760
    %v2676 = vsub.f32 %v2374, %v2675
    %2677 = vmatpush1.msra.mxu0 %v2676
    %2678 = vmatprep.subr.mxu0 0.0
    %v2679 = vand.u32 %v2375, 4294901760
    %v2680 = vsub.f32 %v2375, %v2679
    %2681 = vmatpush1.msra.mxu0 %v2680
    %2682 = vmatprep.subr.mxu0 0.0
    %2683 = vmatpush1.msra.mxu0 0.0
    %2684 = vmatprep.subr.mxu0 0.0
    %2685 = vmatpush1.msra.mxu0 0.0
    %2686 = vmatprep.subr.mxu0 0.0
    %2687 = vmatpush1.msra.mxu0 0.0
    %2688 = vmatprep.subr.mxu0 0.0
    %2689 = vmatpush1.msra.mxu0 0.0
    %2690 = vmatprep.subr.mxu0 0.0
    %2691 = vmatpush1.msra.mxu0 0.0
    %2692 = vmatprep.subr.mxu0 0.0
    %2693 = vmatpush1.msra.mxu0 0.0
    %2694 = vmatprep.subr.mxu0 0.0
    %2695 = vmatpush1.msra.mxu0 0.0
    %2696 = vmatprep.subr.mxu0 0.0
    %2697 = vmatpush1.msra.mxu0 0.0
    %2698 = vmatprep.subr.mxu0 0.0
    %2699 = vmatpush1.msra.mxu0 0.0
    %2700 = vmatprep.subr.mxu0 0.0
    %2701 = vmatpush1.msra.mxu0 0.0
    %2702 = vmatprep.subr.mxu0 0.0
    %2703 = vmatpush1.msra.mxu0 0.0
    %2704 = vmatprep.subr.mxu0 0.0
    %2705 = vmatpush1.msra.mxu0 0.0
    %2706 = vmatprep.subr.mxu0 0.0
    %2707 = vmatpush1.msra.mxu0 0.0
    %2708 = vmatprep.subr.mxu0 0.0
    %2709 = vmatpush1.msra.mxu0 0.0
    %2710 = vmatprep.subr.mxu0 0.0
    %2711 = vmatpush1.msra.mxu0 0.0
    %2712 = vmatprep.subr.mxu0 0.0
    %2713 = vmatpush1.msra.mxu0 0.0
    %2714 = vmatprep.mubr.f32.mxu0 0.0
    %v2715 = vand.u32 %v2346, 4294901760
    %v2716 = vsub.f32 %v2346, %v2715
    %2717 = vmatmul.mubr.f32.gmra.mrb[0].mxu0 %v2716
    %v2718 = vpop.f32.mrb[0].mxu0
    %v2719 = vadd.f32 %v2615, %v2718
    %v2720 = vpop.f32.mrb[0].mxu0
    %2721 = vdwg.mxu0
    %2722 = vmatprep.subr.mxu0 0.0
    %v2723 = vand.u32 %v2360, 4294901760
    %2724 = vmatpush1.msra.mxu0 %v2723
    %2725 = vmatprep.subr.mxu0 0.0
    %v2726 = vand.u32 %v2361, 4294901760
    %2727 = vmatpush1.msra.mxu0 %v2726
    %2728 = vmatprep.subr.mxu0 0.0
    %v2729 = vand.u32 %v2362, 4294901760
    %2730 = vmatpush1.msra.mxu0 %v2729
    %2731 = vmatprep.subr.mxu0 0.0
    %v2732 = vand.u32 %v2363, 4294901760
    %2733 = vmatpush1.msra.mxu0 %v2732
    %2734 = vmatprep.subr.mxu0 0.0
    %v2735 = vand.u32 %v2364, 4294901760
    %2736 = vmatpush1.msra.mxu0 %v2735
    %2737 = vmatprep.subr.mxu0 0.0
    %v2738 = vand.u32 %v2365, 4294901760
    %2739 = vmatpush1.msra.mxu0 %v2738
    %2740 = vmatprep.subr.mxu0 0.0
    %v2741 = vand.u32 %v2366, 4294901760
    %2742 = vmatpush1.msra.mxu0 %v2741
    %2743 = vmatprep.subr.mxu0 0.0
    %v2744 = vand.u32 %v2367, 4294901760
    %2745 = vmatpush1.msra.mxu0 %v2744
    %2746 = vmatprep.subr.mxu0 0.0
    %v2747 = vand.u32 %v2368, 4294901760
    %2748 = vmatpush1.msra.mxu0 %v2747
    %2749 = vmatprep.subr.mxu0 0.0
    %v2750 = vand.u32 %v2369, 4294901760
    %2751 = vmatpush1.msra.mxu0 %v2750
    %2752 = vmatprep.subr.mxu0 0.0
    %v2753 = vand.u32 %v2370, 4294901760
    %2754 = vmatpush1.msra.mxu0 %v2753
    %2755 = vmatprep.subr.mxu0 0.0
    %v2756 = vand.u32 %v2371, 4294901760
    %2757 = vmatpush1.msra.mxu0 %v2756
    %2758 = vmatprep.subr.mxu0 0.0
    %v2759 = vand.u32 %v2372, 4294901760
    %2760 = vmatpush1.msra.mxu0 %v2759
    %2761 = vmatprep.subr.mxu0 0.0
    %v2762 = vand.u32 %v2373, 4294901760
    %2763 = vmatpush1.msra.mxu0 %v2762
    %2764 = vmatprep.subr.mxu0 0.0
    %v2765 = vand.u32 %v2374, 4294901760
    %2766 = vmatpush1.msra.mxu0 %v2765
    %2767 = vmatprep.subr.mxu0 0.0
    %v2768 = vand.u32 %v2375, 4294901760
    %2769 = vmatpush1.msra.mxu0 %v2768
    %2770 = vmatprep.subr.mxu0 0.0
    %2771 = vmatpush1.msra.mxu0 0.0
    %2772 = vmatprep.subr.mxu0 0.0
    %2773 = vmatpush1.msra.mxu0 0.0
    %2774 = vmatprep.subr.mxu0 0.0
    %2775 = vmatpush1.msra.mxu0 0.0
    %2776 = vmatprep.subr.mxu0 0.0
    %2777 = vmatpush1.msra.mxu0 0.0
    %2778 = vmatprep.subr.mxu0 0.0
    %2779 = vmatpush1.msra.mxu0 0.0
    %2780 = vmatprep.subr.mxu0 0.0
    %2781 = vmatpush1.msra.mxu0 0.0
    %2782 = vmatprep.subr.mxu0 0.0
    %2783 = vmatpush1.msra.mxu0 0.0
    %2784 = vmatprep.subr.mxu0 0.0
    %2785 = vmatpush1.msra.mxu0 0.0
    %2786 = vmatprep.subr.mxu0 0.0
    %2787 = vmatpush1.msra.mxu0 0.0
    %2788 = vmatprep.subr.mxu0 0.0
    %2789 = vmatpush1.msra.mxu0 0.0
    %2790 = vmatprep.subr.mxu0 0.0
    %2791 = vmatpush1.msra.mxu0 0.0
    %2792 = vmatprep.subr.mxu0 0.0
    %2793 = vmatpush1.msra.mxu0 0.0
    %2794 = vmatprep.subr.mxu0 0.0
    %2795 = vmatpush1.msra.mxu0 0.0
    %2796 = vmatprep.subr.mxu0 0.0
    %2797 = vmatpush1.msra.mxu0 0.0
    %2798 = vmatprep.subr.mxu0 0.0
    %2799 = vmatpush1.msra.mxu0 0.0
    %2800 = vmatprep.subr.mxu0 0.0
    %2801 = vmatpush1.msra.mxu0 0.0
    %2802 = vmatprep.mubr.f32.mxu0 0.0
    %v2803 = vand.u32 %v2346, 4294901760
    %v2804 = vsub.f32 %v2346, %v2803
    %v2805 = vand.u32 %v2804, 4294901760
    %2806 = vmatmul.mubr.f32.gmra.mrb[0].mxu0 %v2805
    %v2807 = vpop.f32.mrb[0].mxu0
    %v2808 = vadd.f32 %v2719, %v2807
    %v2809 = vpop.f32.mrb[0].mxu0
    %2810 = vdwg.mxu0
    %2811 = vmatprep.subr.mxu0 0.0
    %v2812 = vand.u32 %v2360, 4294901760
    %v2813 = vsub.f32 %v2360, %v2812
    %v2814 = vand.u32 %v2813, 4294901760
    %2815 = vmatpush1.msra.mxu0 %v2814
    %2816 = vmatprep.subr.mxu0 0.0
    %v2817 = vand.u32 %v2361, 4294901760
    %v2818 = vsub.f32 %v2361, %v2817
    %v2819 = vand.u32 %v2818, 4294901760
    %2820 = vmatpush1.msra.mxu0 %v2819
    %2821 = vmatprep.subr.mxu0 0.0
    %v2822 = vand.u32 %v2362, 4294901760
    %v2823 = vsub.f32 %v2362, %v2822
    %v2824 = vand.u32 %v2823, 4294901760
    %2825 = vmatpush1.msra.mxu0 %v2824
    %2826 = vmatprep.subr.mxu0 0.0
    %v2827 = vand.u32 %v2363, 4294901760
    %v2828 = vsub.f32 %v2363, %v2827
    %v2829 = vand.u32 %v2828, 4294901760
    %2830 = vmatpush1.msra.mxu0 %v2829
    %2831 = vmatprep.subr.mxu0 0.0
    %v2832 = vand.u32 %v2364, 4294901760
    %v2833 = vsub.f32 %v2364, %v2832
    %v2834 = vand.u32 %v2833, 4294901760
    %2835 = vmatpush1.msra.mxu0 %v2834
    %2836 = vmatprep.subr.mxu0 0.0
    %v2837 = vand.u32 %v2365, 4294901760
    %v2838 = vsub.f32 %v2365, %v2837
    %v2839 = vand.u32 %v2838, 4294901760
    %2840 = vmatpush1.msra.mxu0 %v2839
    %2841 = vmatprep.subr.mxu0 0.0
    %v2842 = vand.u32 %v2366, 4294901760
    %v2843 = vsub.f32 %v2366, %v2842
    %v2844 = vand.u32 %v2843, 4294901760
    %2845 = vmatpush1.msra.mxu0 %v2844
    %2846 = vmatprep.subr.mxu0 0.0
    %v2847 = vand.u32 %v2367, 4294901760
    %v2848 = vsub.f32 %v2367, %v2847
    %v2849 = vand.u32 %v2848, 4294901760
    %2850 = vmatpush1.msra.mxu0 %v2849
    %2851 = vmatprep.subr.mxu0 0.0
    %v2852 = vand.u32 %v2368, 4294901760
    %v2853 = vsub.f32 %v2368, %v2852
    %v2854 = vand.u32 %v2853, 4294901760
    %2855 = vmatpush1.msra.mxu0 %v2854
    %2856 = vmatprep.subr.mxu0 0.0
    %v2857 = vand.u32 %v2369, 4294901760
    %v2858 = vsub.f32 %v2369, %v2857
    %v2859 = vand.u32 %v2858, 4294901760
    %2860 = vmatpush1.msra.mxu0 %v2859
    %2861 = vmatprep.subr.mxu0 0.0
    %v2862 = vand.u32 %v2370, 4294901760
    %v2863 = vsub.f32 %v2370, %v2862
    %v2864 = vand.u32 %v2863, 4294901760
    %2865 = vmatpush1.msra.mxu0 %v2864
    %2866 = vmatprep.subr.mxu0 0.0
    %v2867 = vand.u32 %v2371, 4294901760
    %v2868 = vsub.f32 %v2371, %v2867
    %v2869 = vand.u32 %v2868, 4294901760
    %2870 = vmatpush1.msra.mxu0 %v2869
    %2871 = vmatprep.subr.mxu0 0.0
    %v2872 = vand.u32 %v2372, 4294901760
    %v2873 = vsub.f32 %v2372, %v2872
    %v2874 = vand.u32 %v2873, 4294901760
    %2875 = vmatpush1.msra.mxu0 %v2874
    %2876 = vmatprep.subr.mxu0 0.0
    %v2877 = vand.u32 %v2373, 4294901760
    %v2878 = vsub.f32 %v2373, %v2877
    %v2879 = vand.u32 %v2878, 4294901760
    %2880 = vmatpush1.msra.mxu0 %v2879
    %2881 = vmatprep.subr.mxu0 0.0
    %v2882 = vand.u32 %v2374, 4294901760
    %v2883 = vsub.f32 %v2374, %v2882
    %v2884 = vand.u32 %v2883, 4294901760
    %2885 = vmatpush1.msra.mxu0 %v2884
    %2886 = vmatprep.subr.mxu0 0.0
    %v2887 = vand.u32 %v2375, 4294901760
    %v2888 = vsub.f32 %v2375, %v2887
    %v2889 = vand.u32 %v2888, 4294901760
    %2890 = vmatpush1.msra.mxu0 %v2889
    %2891 = vmatprep.subr.mxu0 0.0
    %2892 = vmatpush1.msra.mxu0 0.0
    %2893 = vmatprep.subr.mxu0 0.0
    %2894 = vmatpush1.msra.mxu0 0.0
    %2895 = vmatprep.subr.mxu0 0.0
    %2896 = vmatpush1.msra.mxu0 0.0
    %2897 = vmatprep.subr.mxu0 0.0
    %2898 = vmatpush1.msra.mxu0 0.0
    %2899 = vmatprep.subr.mxu0 0.0
    %2900 = vmatpush1.msra.mxu0 0.0
    %2901 = vmatprep.subr.mxu0 0.0
    %2902 = vmatpush1.msra.mxu0 0.0
    %2903 = vmatprep.subr.mxu0 0.0
    %2904 = vmatpush1.msra.mxu0 0.0
    %2905 = vmatprep.subr.mxu0 0.0
    %2906 = vmatpush1.msra.mxu0 0.0
    %2907 = vmatprep.subr.mxu0 0.0
    %2908 = vmatpush1.msra.mxu0 0.0
    %2909 = vmatprep.subr.mxu0 0.0
    %2910 = vmatpush1.msra.mxu0 0.0
    %2911 = vmatprep.subr.mxu0 0.0
    %2912 = vmatpush1.msra.mxu0 0.0
    %2913 = vmatprep.subr.mxu0 0.0
    %2914 = vmatpush1.msra.mxu0 0.0
    %2915 = vmatprep.subr.mxu0 0.0
    %2916 = vmatpush1.msra.mxu0 0.0
    %2917 = vmatprep.subr.mxu0 0.0
    %2918 = vmatpush1.msra.mxu0 0.0
    %2919 = vmatprep.subr.mxu0 0.0
    %2920 = vmatpush1.msra.mxu0 0.0
    %2921 = vmatprep.subr.mxu0 0.0
    %2922 = vmatpush1.msra.mxu0 0.0
    %2923 = vmatprep.mubr.f32.mxu0 0.0
    %v2924 = vand.u32 %v2346, 4294901760
    %2925 = vmatmul.mubr.f32.gmra.mrb[0].mxu0 %v2924
    %v2926 = vpop.f32.mrb[0].mxu0
    %v2927 = vadd.f32 %v2808, %v2926
    %v2928 = vpop.f32.mrb[0].mxu0
    %2929 = vdwg.mxu0
    %2930 = vmatprep.subr.mxu0 0.0
    %v2931 = vand.u32 %v2360, 4294901760
    %2932 = vmatpush1.msra.mxu0 %v2931
    %2933 = vmatprep.subr.mxu0 0.0
    %v2934 = vand.u32 %v2361, 4294901760
    %2935 = vmatpush1.msra.mxu0 %v2934
    %2936 = vmatprep.subr.mxu0 0.0
    %v2937 = vand.u32 %v2362, 4294901760
    %2938 = vmatpush1.msra.mxu0 %v2937
    %2939 = vmatprep.subr.mxu0 0.0
    %v2940 = vand.u32 %v2363, 4294901760
    %2941 = vmatpush1.msra.mxu0 %v2940
    %2942 = vmatprep.subr.mxu0 0.0
    %v2943 = vand.u32 %v2364, 4294901760
    %2944 = vmatpush1.msra.mxu0 %v2943
    %2945 = vmatprep.subr.mxu0 0.0
    %v2946 = vand.u32 %v2365, 4294901760
    %2947 = vmatpush1.msra.mxu0 %v2946
    %2948 = vmatprep.subr.mxu0 0.0
    %v2949 = vand.u32 %v2366, 4294901760
    %2950 = vmatpush1.msra.mxu0 %v2949
    %2951 = vmatprep.subr.mxu0 0.0
    %v2952 = vand.u32 %v2367, 4294901760
    %2953 = vmatpush1.msra.mxu0 %v2952
    %2954 = vmatprep.subr.mxu0 0.0
    %v2955 = vand.u32 %v2368, 4294901760
    %2956 = vmatpush1.msra.mxu0 %v2955
    %2957 = vmatprep.subr.mxu0 0.0
    %v2958 = vand.u32 %v2369, 4294901760
    %2959 = vmatpush1.msra.mxu0 %v2958
    %2960 = vmatprep.subr.mxu0 0.0
    %v2961 = vand.u32 %v2370, 4294901760
    %2962 = vmatpush1.msra.mxu0 %v2961
    %2963 = vmatprep.subr.mxu0 0.0
    %v2964 = vand.u32 %v2371, 4294901760
    %2965 = vmatpush1.msra.mxu0 %v2964
    %2966 = vmatprep.subr.mxu0 0.0
    %v2967 = vand.u32 %v2372, 4294901760
    %2968 = vmatpush1.msra.mxu0 %v2967
    %2969 = vmatprep.subr.mxu0 0.0
    %v2970 = vand.u32 %v2373, 4294901760
    %2971 = vmatpush1.msra.mxu0 %v2970
    %2972 = vmatprep.subr.mxu0 0.0
    %v2973 = vand.u32 %v2374, 4294901760
    %2974 = vmatpush1.msra.mxu0 %v2973
    %2975 = vmatprep.subr.mxu0 0.0
    %v2976 = vand.u32 %v2375, 4294901760
    %2977 = vmatpush1.msra.mxu0 %v2976
    %2978 = vmatprep.subr.mxu0 0.0
    %2979 = vmatpush1.msra.mxu0 0.0
    %2980 = vmatprep.subr.mxu0 0.0
    %2981 = vmatpush1.msra.mxu0 0.0
    %2982 = vmatprep.subr.mxu0 0.0
    %2983 = vmatpush1.msra.mxu0 0.0
    %2984 = vmatprep.subr.mxu0 0.0
    %2985 = vmatpush1.msra.mxu0 0.0
    %2986 = vmatprep.subr.mxu0 0.0
    %2987 = vmatpush1.msra.mxu0 0.0
    %2988 = vmatprep.subr.mxu0 0.0
    %2989 = vmatpush1.msra.mxu0 0.0
    %2990 = vmatprep.subr.mxu0 0.0
    %2991 = vmatpush1.msra.mxu0 0.0
    %2992 = vmatprep.subr.mxu0 0.0
    %2993 = vmatpush1.msra.mxu0 0.0
    %2994 = vmatprep.subr.mxu0 0.0
    %2995 = vmatpush1.msra.mxu0 0.0
    %2996 = vmatprep.subr.mxu0 0.0
    %2997 = vmatpush1.msra.mxu0 0.0
    %2998 = vmatprep.subr.mxu0 0.0
    %2999 = vmatpush1.msra.mxu0 0.0
    %3000 = vmatprep.subr.mxu0 0.0
    %3001 = vmatpush1.msra.mxu0 0.0
    %3002 = vmatprep.subr.mxu0 0.0
    %3003 = vmatpush1.msra.mxu0 0.0
    %3004 = vmatprep.subr.mxu0 0.0
    %3005 = vmatpush1.msra.mxu0 0.0
    %3006 = vmatprep.subr.mxu0 0.0
    %3007 = vmatpush1.msra.mxu0 0.0
    %3008 = vmatprep.subr.mxu0 0.0
    %3009 = vmatpush1.msra.mxu0 0.0
    %3010 = vmatprep.mubr.f32.mxu0 0.0
    %v3011 = vand.u32 %v2346, 4294901760
    %3012 = vmatmul.mubr.f32.gmra.mrb[0].mxu0 %v3011
    %v3013 = vpop.f32.mrb[0].mxu0
    %v3014 = vadd.f32 %v2927, %v3013
    %v3015 = vpop.f32.mrb[0].mxu0
    %3016 = vdwg.mxu0
    %3017 = vmatprep.subr.mxu0 0.0
    %v3018 = vand.u32 %v2360, 4294901760
    %3019 = vmatpush1.msra.mxu0 %v3018
    %3020 = vmatprep.subr.mxu0 0.0
    %v3021 = vand.u32 %v2361, 4294901760
    %3022 = vmatpush1.msra.mxu0 %v3021
    %3023 = vmatprep.subr.mxu0 0.0
    %v3024 = vand.u32 %v2362, 4294901760
    %3025 = vmatpush1.msra.mxu0 %v3024
    %3026 = vmatprep.subr.mxu0 0.0
    %v3027 = vand.u32 %v2363, 4294901760
    %3028 = vmatpush1.msra.mxu0 %v3027
    %3029 = vmatprep.subr.mxu0 0.0
    %v3030 = vand.u32 %v2364, 4294901760
    %3031 = vmatpush1.msra.mxu0 %v3030
    %3032 = vmatprep.subr.mxu0 0.0
    %v3033 = vand.u32 %v2365, 4294901760
    %3034 = vmatpush1.msra.mxu0 %v3033
    %3035 = vmatprep.subr.mxu0 0.0
    %v3036 = vand.u32 %v2366, 4294901760
    %3037 = vmatpush1.msra.mxu0 %v3036
    %3038 = vmatprep.subr.mxu0 0.0
    %v3039 = vand.u32 %v2367, 4294901760
    %3040 = vmatpush1.msra.mxu0 %v3039
    %3041 = vmatprep.subr.mxu0 0.0
    %v3042 = vand.u32 %v2368, 4294901760
    %3043 = vmatpush1.msra.mxu0 %v3042
    %3044 = vmatprep.subr.mxu0 0.0
    %v3045 = vand.u32 %v2369, 4294901760
    %3046 = vmatpush1.msra.mxu0 %v3045
    %3047 = vmatprep.subr.mxu0 0.0
    %v3048 = vand.u32 %v2370, 4294901760
    %3049 = vmatpush1.msra.mxu0 %v3048
    %3050 = vmatprep.subr.mxu0 0.0
    %v3051 = vand.u32 %v2371, 4294901760
    %3052 = vmatpush1.msra.mxu0 %v3051
    %3053 = vmatprep.subr.mxu0 0.0
    %v3054 = vand.u32 %v2372, 4294901760
    %3055 = vmatpush1.msra.mxu0 %v3054
    %3056 = vmatprep.subr.mxu0 0.0
    %v3057 = vand.u32 %v2373, 4294901760
    %3058 = vmatpush1.msra.mxu0 %v3057
    %3059 = vmatprep.subr.mxu0 0.0
    %v3060 = vand.u32 %v2374, 4294901760
    %3061 = vmatpush1.msra.mxu0 %v3060
    %3062 = vmatprep.subr.mxu0 0.0
    %v3063 = vand.u32 %v2375, 4294901760
    %3064 = vmatpush1.msra.mxu0 %v3063
    %3065 = vmatprep.subr.mxu0 0.0
    %3066 = vmatpush1.msra.mxu0 0.0
    %3067 = vmatprep.subr.mxu0 0.0
    %3068 = vmatpush1.msra.mxu0 0.0
    %3069 = vmatprep.subr.mxu0 0.0
    %3070 = vmatpush1.msra.mxu0 0.0
    %3071 = vmatprep.subr.mxu0 0.0
    %3072 = vmatpush1.msra.mxu0 0.0
    %3073 = vmatprep.subr.mxu0 0.0
    %3074 = vmatpush1.msra.mxu0 0.0
    %3075 = vmatprep.subr.mxu0 0.0
    %3076 = vmatpush1.msra.mxu0 0.0
    %3077 = vmatprep.subr.mxu0 0.0
    %3078 = vmatpush1.msra.mxu0 0.0
    %3079 = vmatprep.subr.mxu0 0.0
    %3080 = vmatpush1.msra.mxu0 0.0
    %3081 = vmatprep.subr.mxu0 0.0
    %3082 = vmatpush1.msra.mxu0 0.0
    %3083 = vmatprep.subr.mxu0 0.0
    %3084 = vmatpush1.msra.mxu0 0.0
    %3085 = vmatprep.subr.mxu0 0.0
    %3086 = vmatpush1.msra.mxu0 0.0
    %3087 = vmatprep.subr.mxu0 0.0
    %3088 = vmatpush1.msra.mxu0 0.0
    %3089 = vmatprep.subr.mxu0 0.0
    %3090 = vmatpush1.msra.mxu0 0.0
    %3091 = vmatprep.subr.mxu0 0.0
    %3092 = vmatpush1.msra.mxu0 0.0
    %3093 = vmatprep.subr.mxu0 0.0
    %3094 = vmatpush1.msra.mxu0 0.0
    %3095 = vmatprep.subr.mxu0 0.0
    %3096 = vmatpush1.msra.mxu0 0.0
    %3097 = vmatprep.mubr.f32.mxu0 0.0
    %v3098 = vand.u32 %v2359, 4294901760
    %v3099 = vsub.f32 %v2359, %v3098
    %v3100 = vand.u32 %v3099, 4294901760
    %v3101 = vsub.f32 %v3099, %v3100
    %v3102 = vand.u32 %v3101, 4294901760
    %3103 = vmatmul.mubr.f32.gmra.mrb[0].mxu0 %v3102
    %v3104 = vpop.f32.mrb[0].mxu0
    %v3105 = vadd.f32 0.0, %v3104
    %v3106 = vpop.f32.mrb[0].mxu0
    %3107 = vdwg.mxu0
    %3108 = vmatprep.subr.mxu0 0.0
    %v3109 = vand.u32 %v2360, 4294901760
    %v3110 = vsub.f32 %v2360, %v3109
    %v3111 = vand.u32 %v3110, 4294901760
    %v3112 = vsub.f32 %v3110, %v3111
    %v3113 = vand.u32 %v3112, 4294901760
    %3114 = vmatpush1.msra.mxu0 %v3113
    %3115 = vmatprep.subr.mxu0 0.0
    %v3116 = vand.u32 %v2361, 4294901760
    %v3117 = vsub.f32 %v2361, %v3116
    %v3118 = vand.u32 %v3117, 4294901760
    %v3119 = vsub.f32 %v3117, %v3118
    %v3120 = vand.u32 %v3119, 4294901760
    %3121 = vmatpush1.msra.mxu0 %v3120
    %3122 = vmatprep.subr.mxu0 0.0
    %v3123 = vand.u32 %v2362, 4294901760
    %v3124 = vsub.f32 %v2362, %v3123
    %v3125 = vand.u32 %v3124, 4294901760
    %v3126 = vsub.f32 %v3124, %v3125
    %v3127 = vand.u32 %v3126, 4294901760
    %3128 = vmatpush1.msra.mxu0 %v3127
    %3129 = vmatprep.subr.mxu0 0.0
    %v3130 = vand.u32 %v2363, 4294901760
    %v3131 = vsub.f32 %v2363, %v3130
    %v3132 = vand.u32 %v3131, 4294901760
    %v3133 = vsub.f32 %v3131, %v3132
    %v3134 = vand.u32 %v3133, 4294901760
    %3135 = vmatpush1.msra.mxu0 %v3134
    %3136 = vmatprep.subr.mxu0 0.0
    %v3137 = vand.u32 %v2364, 4294901760
    %v3138 = vsub.f32 %v2364, %v3137
    %v3139 = vand.u32 %v3138, 4294901760
    %v3140 = vsub.f32 %v3138, %v3139
    %v3141 = vand.u32 %v3140, 4294901760
    %3142 = vmatpush1.msra.mxu0 %v3141
    %3143 = vmatprep.subr.mxu0 0.0
    %v3144 = vand.u32 %v2365, 4294901760
    %v3145 = vsub.f32 %v2365, %v3144
    %v3146 = vand.u32 %v3145, 4294901760
    %v3147 = vsub.f32 %v3145, %v3146
    %v3148 = vand.u32 %v3147, 4294901760
    %3149 = vmatpush1.msra.mxu0 %v3148
    %3150 = vmatprep.subr.mxu0 0.0
    %v3151 = vand.u32 %v2366, 4294901760
    %v3152 = vsub.f32 %v2366, %v3151
    %v3153 = vand.u32 %v3152, 4294901760
    %v3154 = vsub.f32 %v3152, %v3153
    %v3155 = vand.u32 %v3154, 4294901760
    %3156 = vmatpush1.msra.mxu0 %v3155
    %3157 = vmatprep.subr.mxu0 0.0
    %v3158 = vand.u32 %v2367, 4294901760
    %v3159 = vsub.f32 %v2367, %v3158
    %v3160 = vand.u32 %v3159, 4294901760
    %v3161 = vsub.f32 %v3159, %v3160
    %v3162 = vand.u32 %v3161, 4294901760
    %3163 = vmatpush1.msra.mxu0 %v3162
    %3164 = vmatprep.subr.mxu0 0.0
    %v3165 = vand.u32 %v2368, 4294901760
    %v3166 = vsub.f32 %v2368, %v3165
    %v3167 = vand.u32 %v3166, 4294901760
    %v3168 = vsub.f32 %v3166, %v3167
    %v3169 = vand.u32 %v3168, 4294901760
    %3170 = vmatpush1.msra.mxu0 %v3169
    %3171 = vmatprep.subr.mxu0 0.0
    %v3172 = vand.u32 %v2369, 4294901760
    %v3173 = vsub.f32 %v2369, %v3172
    %v3174 = vand.u32 %v3173, 4294901760
    %v3175 = vsub.f32 %v3173, %v3174
    %v3176 = vand.u32 %v3175, 4294901760
    %3177 = vmatpush1.msra.mxu0 %v3176
    %3178 = vmatprep.subr.mxu0 0.0
    %v3179 = vand.u32 %v2370, 4294901760
    %v3180 = vsub.f32 %v2370, %v3179
    %v3181 = vand.u32 %v3180, 4294901760
    %v3182 = vsub.f32 %v3180, %v3181
    %v3183 = vand.u32 %v3182, 4294901760
    %3184 = vmatpush1.msra.mxu0 %v3183
    %3185 = vmatprep.subr.mxu0 0.0
    %v3186 = vand.u32 %v2371, 4294901760
    %v3187 = vsub.f32 %v2371, %v3186
    %v3188 = vand.u32 %v3187, 4294901760
    %v3189 = vsub.f32 %v3187, %v3188
    %v3190 = vand.u32 %v3189, 4294901760
    %3191 = vmatpush1.msra.mxu0 %v3190
    %3192 = vmatprep.subr.mxu0 0.0
    %v3193 = vand.u32 %v2372, 4294901760
    %v3194 = vsub.f32 %v2372, %v3193
    %v3195 = vand.u32 %v3194, 4294901760
    %v3196 = vsub.f32 %v3194, %v3195
    %v3197 = vand.u32 %v3196, 4294901760
    %3198 = vmatpush1.msra.mxu0 %v3197
    %3199 = vmatprep.subr.mxu0 0.0
    %v3200 = vand.u32 %v2373, 4294901760
    %v3201 = vsub.f32 %v2373, %v3200
    %v3202 = vand.u32 %v3201, 4294901760
    %v3203 = vsub.f32 %v3201, %v3202
    %v3204 = vand.u32 %v3203, 4294901760
    %3205 = vmatpush1.msra.mxu0 %v3204
    %3206 = vmatprep.subr.mxu0 0.0
    %v3207 = vand.u32 %v2374, 4294901760
    %v3208 = vsub.f32 %v2374, %v3207
    %v3209 = vand.u32 %v3208, 4294901760
    %v3210 = vsub.f32 %v3208, %v3209
    %v3211 = vand.u32 %v3210, 4294901760
    %3212 = vmatpush1.msra.mxu0 %v3211
    %3213 = vmatprep.subr.mxu0 0.0
    %v3214 = vand.u32 %v2375, 4294901760
    %v3215 = vsub.f32 %v2375, %v3214
    %v3216 = vand.u32 %v3215, 4294901760
    %v3217 = vsub.f32 %v3215, %v3216
    %v3218 = vand.u32 %v3217, 4294901760
    %3219 = vmatpush1.msra.mxu0 %v3218
    %3220 = vmatprep.subr.mxu0 0.0
    %3221 = vmatpush1.msra.mxu0 0.0
    %3222 = vmatprep.subr.mxu0 0.0
    %3223 = vmatpush1.msra.mxu0 0.0
    %3224 = vmatprep.subr.mxu0 0.0
    %3225 = vmatpush1.msra.mxu0 0.0
    %3226 = vmatprep.subr.mxu0 0.0
    %3227 = vmatpush1.msra.mxu0 0.0
    %3228 = vmatprep.subr.mxu0 0.0
    %3229 = vmatpush1.msra.mxu0 0.0
    %3230 = vmatprep.subr.mxu0 0.0
    %3231 = vmatpush1.msra.mxu0 0.0
    %3232 = vmatprep.subr.mxu0 0.0
    %3233 = vmatpush1.msra.mxu0 0.0
    %3234 = vmatprep.subr.mxu0 0.0
    %3235 = vmatpush1.msra.mxu0 0.0
    %3236 = vmatprep.subr.mxu0 0.0
    %3237 = vmatpush1.msra.mxu0 0.0
    %3238 = vmatprep.subr.mxu0 0.0
    %3239 = vmatpush1.msra.mxu0 0.0
    %3240 = vmatprep.subr.mxu0 0.0
    %3241 = vmatpush1.msra.mxu0 0.0
    %3242 = vmatprep.subr.mxu0 0.0
    %3243 = vmatpush1.msra.mxu0 0.0
    %3244 = vmatprep.subr.mxu0 0.0
    %3245 = vmatpush1.msra.mxu0 0.0
    %3246 = vmatprep.subr.mxu0 0.0
    %3247 = vmatpush1.msra.mxu0 0.0
    %3248 = vmatprep.subr.mxu0 0.0
    %3249 = vmatpush1.msra.mxu0 0.0
    %3250 = vmatprep.subr.mxu0 0.0
    %3251 = vmatpush1.msra.mxu0 0.0
    %3252 = vmatprep.mubr.f32.mxu0 0.0
    %v3253 = vand.u32 %v2359, 4294901760
    %3254 = vmatmul.mubr.f32.gmra.mrb[0].mxu0 %v3253
    %v3255 = vpop.f32.mrb[0].mxu0
    %v3256 = vadd.f32 %v3105, %v3255
    %v3257 = vpop.f32.mrb[0].mxu0
    %3258 = vdwg.mxu0
    %3259 = vmatprep.subr.mxu0 0.0
    %v3260 = vand.u32 %v2360, 4294901760
    %v3261 = vsub.f32 %v2360, %v3260
    %3262 = vmatpush1.msra.mxu0 %v3261
    %3263 = vmatprep.subr.mxu0 0.0
    %v3264 = vand.u32 %v2361, 4294901760
    %v3265 = vsub.f32 %v2361, %v3264
    %3266 = vmatpush1.msra.mxu0 %v3265
    %3267 = vmatprep.subr.mxu0 0.0
    %v3268 = vand.u32 %v2362, 4294901760
    %v3269 = vsub.f32 %v2362, %v3268
    %3270 = vmatpush1.msra.mxu0 %v3269
    %3271 = vmatprep.subr.mxu0 0.0
    %v3272 = vand.u32 %v2363, 4294901760
    %v3273 = vsub.f32 %v2363, %v3272
    %3274 = vmatpush1.msra.mxu0 %v3273
    %3275 = vmatprep.subr.mxu0 0.0
    %v3276 = vand.u32 %v2364, 4294901760
    %v3277 = vsub.f32 %v2364, %v3276
    %3278 = vmatpush1.msra.mxu0 %v3277
    %3279 = vmatprep.subr.mxu0 0.0
    %v3280 = vand.u32 %v2365, 4294901760
    %v3281 = vsub.f32 %v2365, %v3280
    %3282 = vmatpush1.msra.mxu0 %v3281
    %3283 = vmatprep.subr.mxu0 0.0
    %v3284 = vand.u32 %v2366, 4294901760
    %v3285 = vsub.f32 %v2366, %v3284
    %3286 = vmatpush1.msra.mxu0 %v3285
    %3287 = vmatprep.subr.mxu0 0.0
    %v3288 = vand.u32 %v2367, 4294901760
    %v3289 = vsub.f32 %v2367, %v3288
    %3290 = vmatpush1.msra.mxu0 %v3289
    %3291 = vmatprep.subr.mxu0 0.0
    %v3292 = vand.u32 %v2368, 4294901760
    %v3293 = vsub.f32 %v2368, %v3292
    %3294 = vmatpush1.msra.mxu0 %v3293
    %3295 = vmatprep.subr.mxu0 0.0
    %v3296 = vand.u32 %v2369, 4294901760
    %v3297 = vsub.f32 %v2369, %v3296
    %3298 = vmatpush1.msra.mxu0 %v3297
    %3299 = vmatprep.subr.mxu0 0.0
    %v3300 = vand.u32 %v2370, 4294901760
    %v3301 = vsub.f32 %v2370, %v3300
    %3302 = vmatpush1.msra.mxu0 %v3301
    %3303 = vmatprep.subr.mxu0 0.0
    %v3304 = vand.u32 %v2371, 4294901760
    %v3305 = vsub.f32 %v2371, %v3304
    %3306 = vmatpush1.msra.mxu0 %v3305
    %3307 = vmatprep.subr.mxu0 0.0
    %v3308 = vand.u32 %v2372, 4294901760
    %v3309 = vsub.f32 %v2372, %v3308
    %3310 = vmatpush1.msra.mxu0 %v3309
    %3311 = vmatprep.subr.mxu0 0.0
    %v3312 = vand.u32 %v2373, 4294901760
    %v3313 = vsub.f32 %v2373, %v3312
    %3314 = vmatpush1.msra.mxu0 %v3313
    %3315 = vmatprep.subr.mxu0 0.0
    %v3316 = vand.u32 %v2374, 4294901760
    %v3317 = vsub.f32 %v2374, %v3316
    %3318 = vmatpush1.msra.mxu0 %v3317
    %3319 = vmatprep.subr.mxu0 0.0
    %v3320 = vand.u32 %v2375, 4294901760
    %v3321 = vsub.f32 %v2375, %v3320
    %3322 = vmatpush1.msra.mxu0 %v3321
    %3323 = vmatprep.subr.mxu0 0.0
    %3324 = vmatpush1.msra.mxu0 0.0
    %3325 = vmatprep.subr.mxu0 0.0
    %3326 = vmatpush1.msra.mxu0 0.0
    %3327 = vmatprep.subr.mxu0 0.0
    %3328 = vmatpush1.msra.mxu0 0.0
    %3329 = vmatprep.subr.mxu0 0.0
    %3330 = vmatpush1.msra.mxu0 0.0
    %3331 = vmatprep.subr.mxu0 0.0
    %3332 = vmatpush1.msra.mxu0 0.0
    %3333 = vmatprep.subr.mxu0 0.0
    %3334 = vmatpush1.msra.mxu0 0.0
    %3335 = vmatprep.subr.mxu0 0.0
    %3336 = vmatpush1.msra.mxu0 0.0
    %3337 = vmatprep.subr.mxu0 0.0
    %3338 = vmatpush1.msra.mxu0 0.0
    %3339 = vmatprep.subr.mxu0 0.0
    %3340 = vmatpush1.msra.mxu0 0.0
    %3341 = vmatprep.subr.mxu0 0.0
    %3342 = vmatpush1.msra.mxu0 0.0
    %3343 = vmatprep.subr.mxu0 0.0
    %3344 = vmatpush1.msra.mxu0 0.0
    %3345 = vmatprep.subr.mxu0 0.0
    %3346 = vmatpush1.msra.mxu0 0.0
    %3347 = vmatprep.subr.mxu0 0.0
    %3348 = vmatpush1.msra.mxu0 0.0
    %3349 = vmatprep.subr.mxu0 0.0
    %3350 = vmatpush1.msra.mxu0 0.0
    %3351 = vmatprep.subr.mxu0 0.0
    %3352 = vmatpush1.msra.mxu0 0.0
    %3353 = vmatprep.subr.mxu0 0.0
    %3354 = vmatpush1.msra.mxu0 0.0
    %3355 = vmatprep.mubr.f32.mxu0 0.0
    %v3356 = vand.u32 %v2359, 4294901760
    %v3357 = vsub.f32 %v2359, %v3356
    %3358 = vmatmul.mubr.f32.gmra.mrb[0].mxu0 %v3357
    %v3359 = vpop.f32.mrb[0].mxu0
    %v3360 = vadd.f32 %v3256, %v3359
    %v3361 = vpop.f32.mrb[0].mxu0
    %3362 = vdwg.mxu0
    %3363 = vmatprep.subr.mxu0 0.0
    %v3364 = vand.u32 %v2360, 4294901760
    %3365 = vmatpush1.msra.mxu0 %v3364
    %3366 = vmatprep.subr.mxu0 0.0
    %v3367 = vand.u32 %v2361, 4294901760
    %3368 = vmatpush1.msra.mxu0 %v3367
    %3369 = vmatprep.subr.mxu0 0.0
    %v3370 = vand.u32 %v2362, 4294901760
    %3371 = vmatpush1.msra.mxu0 %v3370
    %3372 = vmatprep.subr.mxu0 0.0
    %v3373 = vand.u32 %v2363, 4294901760
    %3374 = vmatpush1.msra.mxu0 %v3373
    %3375 = vmatprep.subr.mxu0 0.0
    %v3376 = vand.u32 %v2364, 4294901760
    %3377 = vmatpush1.msra.mxu0 %v3376
    %3378 = vmatprep.subr.mxu0 0.0
    %v3379 = vand.u32 %v2365, 4294901760
    %3380 = vmatpush1.msra.mxu0 %v3379
    %3381 = vmatprep.subr.mxu0 0.0
    %v3382 = vand.u32 %v2366, 4294901760
    %3383 = vmatpush1.msra.mxu0 %v3382
    %3384 = vmatprep.subr.mxu0 0.0
    %v3385 = vand.u32 %v2367, 4294901760
    %3386 = vmatpush1.msra.mxu0 %v3385
    %3387 = vmatprep.subr.mxu0 0.0
    %v3388 = vand.u32 %v2368, 4294901760
    %3389 = vmatpush1.msra.mxu0 %v3388
    %3390 = vmatprep.subr.mxu0 0.0
    %v3391 = vand.u32 %v2369, 4294901760
    %3392 = vmatpush1.msra.mxu0 %v3391
    %3393 = vmatprep.subr.mxu0 0.0
    %v3394 = vand.u32 %v2370, 4294901760
    %3395 = vmatpush1.msra.mxu0 %v3394
    %3396 = vmatprep.subr.mxu0 0.0
    %v3397 = vand.u32 %v2371, 4294901760
    %3398 = vmatpush1.msra.mxu0 %v3397
    %3399 = vmatprep.subr.mxu0 0.0
    %v3400 = vand.u32 %v2372, 4294901760
    %3401 = vmatpush1.msra.mxu0 %v3400
    %3402 = vmatprep.subr.mxu0 0.0
    %v3403 = vand.u32 %v2373, 4294901760
    %3404 = vmatpush1.msra.mxu0 %v3403
    %3405 = vmatprep.subr.mxu0 0.0
    %v3406 = vand.u32 %v2374, 4294901760
    %3407 = vmatpush1.msra.mxu0 %v3406
    %3408 = vmatprep.subr.mxu0 0.0
    %v3409 = vand.u32 %v2375, 4294901760
    %3410 = vmatpush1.msra.mxu0 %v3409
    %3411 = vmatprep.subr.mxu0 0.0
    %3412 = vmatpush1.msra.mxu0 0.0
    %3413 = vmatprep.subr.mxu0 0.0
    %3414 = vmatpush1.msra.mxu0 0.0
    %3415 = vmatprep.subr.mxu0 0.0
    %3416 = vmatpush1.msra.mxu0 0.0
    %3417 = vmatprep.subr.mxu0 0.0
    %3418 = vmatpush1.msra.mxu0 0.0
    %3419 = vmatprep.subr.mxu0 0.0
    %3420 = vmatpush1.msra.mxu0 0.0
    %3421 = vmatprep.subr.mxu0 0.0
    %3422 = vmatpush1.msra.mxu0 0.0
    %3423 = vmatprep.subr.mxu0 0.0
    %3424 = vmatpush1.msra.mxu0 0.0
    %3425 = vmatprep.subr.mxu0 0.0
    %3426 = vmatpush1.msra.mxu0 0.0
    %3427 = vmatprep.subr.mxu0 0.0
    %3428 = vmatpush1.msra.mxu0 0.0
    %3429 = vmatprep.subr.mxu0 0.0
    %3430 = vmatpush1.msra.mxu0 0.0
    %3431 = vmatprep.subr.mxu0 0.0
    %3432 = vmatpush1.msra.mxu0 0.0
    %3433 = vmatprep.subr.mxu0 0.0
    %3434 = vmatpush1.msra.mxu0 0.0
    %3435 = vmatprep.subr.mxu0 0.0
    %3436 = vmatpush1.msra.mxu0 0.0
    %3437 = vmatprep.subr.mxu0 0.0
    %3438 = vmatpush1.msra.mxu0 0.0
    %3439 = vmatprep.subr.mxu0 0.0
    %3440 = vmatpush1.msra.mxu0 0.0
    %3441 = vmatprep.subr.mxu0 0.0
    %3442 = vmatpush1.msra.mxu0 0.0
    %3443 = vmatprep.mubr.f32.mxu0 0.0
    %v3444 = vand.u32 %v2359, 4294901760
    %v3445 = vsub.f32 %v2359, %v3444
    %v3446 = vand.u32 %v3445, 4294901760
    %3447 = vmatmul.mubr.f32.gmra.mrb[0].mxu0 %v3446
    %v3448 = vpop.f32.mrb[0].mxu0
    %v3449 = vadd.f32 %v3360, %v3448
    %v3450 = vpop.f32.mrb[0].mxu0
    %3451 = vdwg.mxu0
    %3452 = vmatprep.subr.mxu0 0.0
    %v3453 = vand.u32 %v2360, 4294901760
    %v3454 = vsub.f32 %v2360, %v3453
    %v3455 = vand.u32 %v3454, 4294901760
    %3456 = vmatpush1.msra.mxu0 %v3455
    %3457 = vmatprep.subr.mxu0 0.0
    %v3458 = vand.u32 %v2361, 4294901760
    %v3459 = vsub.f32 %v2361, %v3458
    %v3460 = vand.u32 %v3459, 4294901760
    %3461 = vmatpush1.msra.mxu0 %v3460
    %3462 = vmatprep.subr.mxu0 0.0
    %v3463 = vand.u32 %v2362, 4294901760
    %v3464 = vsub.f32 %v2362, %v3463
    %v3465 = vand.u32 %v3464, 4294901760
    %3466 = vmatpush1.msra.mxu0 %v3465
    %3467 = vmatprep.subr.mxu0 0.0
    %v3468 = vand.u32 %v2363, 4294901760
    %v3469 = vsub.f32 %v2363, %v3468
    %v3470 = vand.u32 %v3469, 4294901760
    %3471 = vmatpush1.msra.mxu0 %v3470
    %3472 = vmatprep.subr.mxu0 0.0
    %v3473 = vand.u32 %v2364, 4294901760
    %v3474 = vsub.f32 %v2364, %v3473
    %v3475 = vand.u32 %v3474, 4294901760
    %3476 = vmatpush1.msra.mxu0 %v3475
    %3477 = vmatprep.subr.mxu0 0.0
    %v3478 = vand.u32 %v2365, 4294901760
    %v3479 = vsub.f32 %v2365, %v3478
    %v3480 = vand.u32 %v3479, 4294901760
    %3481 = vmatpush1.msra.mxu0 %v3480
    %3482 = vmatprep.subr.mxu0 0.0
    %v3483 = vand.u32 %v2366, 4294901760
    %v3484 = vsub.f32 %v2366, %v3483
    %v3485 = vand.u32 %v3484, 4294901760
    %3486 = vmatpush1.msra.mxu0 %v3485
    %3487 = vmatprep.subr.mxu0 0.0
    %v3488 = vand.u32 %v2367, 4294901760
    %v3489 = vsub.f32 %v2367, %v3488
    %v3490 = vand.u32 %v3489, 4294901760
    %3491 = vmatpush1.msra.mxu0 %v3490
    %3492 = vmatprep.subr.mxu0 0.0
    %v3493 = vand.u32 %v2368, 4294901760
    %v3494 = vsub.f32 %v2368, %v3493
    %v3495 = vand.u32 %v3494, 4294901760
    %3496 = vmatpush1.msra.mxu0 %v3495
    %3497 = vmatprep.subr.mxu0 0.0
    %v3498 = vand.u32 %v2369, 4294901760
    %v3499 = vsub.f32 %v2369, %v3498
    %v3500 = vand.u32 %v3499, 4294901760
    %3501 = vmatpush1.msra.mxu0 %v3500
    %3502 = vmatprep.subr.mxu0 0.0
    %v3503 = vand.u32 %v2370, 4294901760
    %v3504 = vsub.f32 %v2370, %v3503
    %v3505 = vand.u32 %v3504, 4294901760
    %3506 = vmatpush1.msra.mxu0 %v3505
    %3507 = vmatprep.subr.mxu0 0.0
    %v3508 = vand.u32 %v2371, 4294901760
    %v3509 = vsub.f32 %v2371, %v3508
    %v3510 = vand.u32 %v3509, 4294901760
    %3511 = vmatpush1.msra.mxu0 %v3510
    %3512 = vmatprep.subr.mxu0 0.0
    %v3513 = vand.u32 %v2372, 4294901760
    %v3514 = vsub.f32 %v2372, %v3513
    %v3515 = vand.u32 %v3514, 4294901760
    %3516 = vmatpush1.msra.mxu0 %v3515
    %3517 = vmatprep.subr.mxu0 0.0
    %v3518 = vand.u32 %v2373, 4294901760
    %v3519 = vsub.f32 %v2373, %v3518
    %v3520 = vand.u32 %v3519, 4294901760
    %3521 = vmatpush1.msra.mxu0 %v3520
    %3522 = vmatprep.subr.mxu0 0.0
    %v3523 = vand.u32 %v2374, 4294901760
    %v3524 = vsub.f32 %v2374, %v3523
    %v3525 = vand.u32 %v3524, 4294901760
    %3526 = vmatpush1.msra.mxu0 %v3525
    %3527 = vmatprep.subr.mxu0 0.0
    %v3528 = vand.u32 %v2375, 4294901760
    %v3529 = vsub.f32 %v2375, %v3528
    %v3530 = vand.u32 %v3529, 4294901760
    %3531 = vmatpush1.msra.mxu0 %v3530
    %3532 = vmatprep.subr.mxu0 0.0
    %3533 = vmatpush1.msra.mxu0 0.0
    %3534 = vmatprep.subr.mxu0 0.0
    %3535 = vmatpush1.msra.mxu0 0.0
    %3536 = vmatprep.subr.mxu0 0.0
    %3537 = vmatpush1.msra.mxu0 0.0
    %3538 = vmatprep.subr.mxu0 0.0
    %3539 = vmatpush1.msra.mxu0 0.0
    %3540 = vmatprep.subr.mxu0 0.0
    %3541 = vmatpush1.msra.mxu0 0.0
    %3542 = vmatprep.subr.mxu0 0.0
    %3543 = vmatpush1.msra.mxu0 0.0
    %3544 = vmatprep.subr.mxu0 0.0
    %3545 = vmatpush1.msra.mxu0 0.0
    %3546 = vmatprep.subr.mxu0 0.0
    %3547 = vmatpush1.msra.mxu0 0.0
    %3548 = vmatprep.subr.mxu0 0.0
    %3549 = vmatpush1.msra.mxu0 0.0
    %3550 = vmatprep.subr.mxu0 0.0
    %3551 = vmatpush1.msra.mxu0 0.0
    %3552 = vmatprep.subr.mxu0 0.0
    %3553 = vmatpush1.msra.mxu0 0.0
    %3554 = vmatprep.subr.mxu0 0.0
    %3555 = vmatpush1.msra.mxu0 0.0
    %3556 = vmatprep.subr.mxu0 0.0
    %3557 = vmatpush1.msra.mxu0 0.0
    %3558 = vmatprep.subr.mxu0 0.0
    %3559 = vmatpush1.msra.mxu0 0.0
    %3560 = vmatprep.subr.mxu0 0.0
    %3561 = vmatpush1.msra.mxu0 0.0
    %3562 = vmatprep.subr.mxu0 0.0
    %3563 = vmatpush1.msra.mxu0 0.0
    %3564 = vmatprep.mubr.f32.mxu0 0.0
    %v3565 = vand.u32 %v2359, 4294901760
    %3566 = vmatmul.mubr.f32.gmra.mrb[0].mxu0 %v3565
    %v3567 = vpop.f32.mrb[0].mxu0
    %v3568 = vadd.f32 %v3449, %v3567
    %v3569 = vpop.f32.mrb[0].mxu0
    %3570 = vdwg.mxu0
    %3571 = vmatprep.subr.mxu0 0.0
    %v3572 = vand.u32 %v2360, 4294901760
    %3573 = vmatpush1.msra.mxu0 %v3572
    %3574 = vmatprep.subr.mxu0 0.0
    %v3575 = vand.u32 %v2361, 4294901760
    %3576 = vmatpush1.msra.mxu0 %v3575
    %3577 = vmatprep.subr.mxu0 0.0
    %v3578 = vand.u32 %v2362, 4294901760
    %3579 = vmatpush1.msra.mxu0 %v3578
    %3580 = vmatprep.subr.mxu0 0.0
    %v3581 = vand.u32 %v2363, 4294901760
    %3582 = vmatpush1.msra.mxu0 %v3581
    %3583 = vmatprep.subr.mxu0 0.0
    %v3584 = vand.u32 %v2364, 4294901760
    %3585 = vmatpush1.msra.mxu0 %v3584
    %3586 = vmatprep.subr.mxu0 0.0
    %v3587 = vand.u32 %v2365, 4294901760
    %3588 = vmatpush1.msra.mxu0 %v3587
    %3589 = vmatprep.subr.mxu0 0.0
    %v3590 = vand.u32 %v2366, 4294901760
    %3591 = vmatpush1.msra.mxu0 %v3590
    %3592 = vmatprep.subr.mxu0 0.0
    %v3593 = vand.u32 %v2367, 4294901760
    %3594 = vmatpush1.msra.mxu0 %v3593
    %3595 = vmatprep.subr.mxu0 0.0
    %v3596 = vand.u32 %v2368, 4294901760
    %3597 = vmatpush1.msra.mxu0 %v3596
    %3598 = vmatprep.subr.mxu0 0.0
    %v3599 = vand.u32 %v2369, 4294901760
    %3600 = vmatpush1.msra.mxu0 %v3599
    %3601 = vmatprep.subr.mxu0 0.0
    %v3602 = vand.u32 %v2370, 4294901760
    %3603 = vmatpush1.msra.mxu0 %v3602
    %3604 = vmatprep.subr.mxu0 0.0
    %v3605 = vand.u32 %v2371, 4294901760
    %3606 = vmatpush1.msra.mxu0 %v3605
    %3607 = vmatprep.subr.mxu0 0.0
    %v3608 = vand.u32 %v2372, 4294901760
    %3609 = vmatpush1.msra.mxu0 %v3608
    %3610 = vmatprep.subr.mxu0 0.0
    %v3611 = vand.u32 %v2373, 4294901760
    %3612 = vmatpush1.msra.mxu0 %v3611
    %3613 = vmatprep.subr.mxu0 0.0
    %v3614 = vand.u32 %v2374, 4294901760
    %3615 = vmatpush1.msra.mxu0 %v3614
    %3616 = vmatprep.subr.mxu0 0.0
    %v3617 = vand.u32 %v2375, 4294901760
    %3618 = vmatpush1.msra.mxu0 %v3617
    %3619 = vmatprep.subr.mxu0 0.0
    %3620 = vmatpush1.msra.mxu0 0.0
    %3621 = vmatprep.subr.mxu0 0.0
    %3622 = vmatpush1.msra.mxu0 0.0
    %3623 = vmatprep.subr.mxu0 0.0
    %3624 = vmatpush1.msra.mxu0 0.0
    %3625 = vmatprep.subr.mxu0 0.0
    %3626 = vmatpush1.msra.mxu0 0.0
    %3627 = vmatprep.subr.mxu0 0.0
    %3628 = vmatpush1.msra.mxu0 0.0
    %3629 = vmatprep.subr.mxu0 0.0
    %3630 = vmatpush1.msra.mxu0 0.0
    %3631 = vmatprep.subr.mxu0 0.0
    %3632 = vmatpush1.msra.mxu0 0.0
    %3633 = vmatprep.subr.mxu0 0.0
    %3634 = vmatpush1.msra.mxu0 0.0
    %3635 = vmatprep.subr.mxu0 0.0
    %3636 = vmatpush1.msra.mxu0 0.0
    %3637 = vmatprep.subr.mxu0 0.0
    %3638 = vmatpush1.msra.mxu0 0.0
    %3639 = vmatprep.subr.mxu0 0.0
    %3640 = vmatpush1.msra.mxu0 0.0
    %3641 = vmatprep.subr.mxu0 0.0
    %3642 = vmatpush1.msra.mxu0 0.0
    %3643 = vmatprep.subr.mxu0 0.0
    %3644 = vmatpush1.msra.mxu0 0.0
    %3645 = vmatprep.subr.mxu0 0.0
    %3646 = vmatpush1.msra.mxu0 0.0
    %3647 = vmatprep.subr.mxu0 0.0
    %3648 = vmatpush1.msra.mxu0 0.0
    %3649 = vmatprep.subr.mxu0 0.0
    %3650 = vmatpush1.msra.mxu0 0.0
    %3651 = vmatprep.mubr.f32.mxu0 0.0
    %v3652 = vand.u32 %v2359, 4294901760
    %3653 = vmatmul.mubr.f32.gmra.mrb[0].mxu0 %v3652
    %v3654 = vpop.f32.mrb[0].mxu0
    %v3655 = vadd.f32 %v3568, %v3654
    %v3656 = vpop.f32.mrb[0].mxu0
    %3657 = vdwg.mxu0
    %v3658 = vmul.f32 %v3014, 0.001953125
    %v3659 = vmul.f32 %v3655, 0.001953125
    %v3660 = vmul.f32 %v3658, %v3658
    %v3661 = vsub.f32 %v3659, %v3660
    %v3662 = vld [vmem:[%s5] sm:$0x1]
    %v3663 = vadd.f32 %v3661, 1e-05
    %v3664 = vrsqrt.pop %v3663
    %v3665 = vmul.f32 %v3662, %v3664
    %v3666 = vld [vmem:[%s5 + $0x1] sm:$0x1]
    %v3667 = vmul.f32 %v3658, %v3665
    %v3668 = vsub.f32 %v3666, %v3667
    %v3669 = vlaneseq
    %v3670 = vshrl.u32 %v3669, 7
    %v3671 = vsub.s32 0, %v3670
    %v3672 = vrot.slane %v3665, %v3671
    %v3673 = vmul.f32 %v2334, %v3672
    %v3674 = vmul.f32 %v2335, %v3672
    %v3675 = vmul.f32 %v2336, %v3672
    %v3676 = vmul.f32 %v2337, %v3672
    %v3677 = vlaneseq
    %v3678 = vshrl.u32 %v3677, 7
    %v3679 = vsub.s32 0, %v3678
    %v3680 = vrot.slane %v3668, %v3679
    %v3681 = vadd.f32 %v3673, %v3680
    %v3682 = vadd.f32 %v3674, %v3680
    %v3683 = vadd.f32 %v3675, %v3680
    %v3684 = vadd.f32 %v3676, %v3680
    %v3685 = vmax.f32 %v3681, 0.0
    %v3686 = vmax.f32 %v3682, 0.0
    %v3687 = vmax.f32 %v3683, 0.0
    %v3688 = vmax.f32 %v3684, 0.0
    %3689 = vst [vmem:[#allocation11] sm:$0xff] %v3685
    %3690 = vst [vmem:[#allocation11 + $0x8] sm:$0xff] %v3686
    %3691 = vst [vmem:[#allocation11 + $0x10] sm:$0xff] %v3687
    %3692 = vst [vmem:[#allocation11 + $0x18] sm:$0xff] %v3688
    // Predicated region
    $region46: #{tpu_custom_call.1} parent=1 // pred_check
      _
    $region47: #{tpu_custom_call.1} parent=1 // pred_check_branch
      %3694 = sbr.rel (0) target = $region49
    $region48: #{tpu_custom_call.1} parent=1 // pred_region
      %s3696 = ssub.s32 512, 512
      %3697 = vsyncadd [#allocation5], %s3696
      %s3698 = sshll.u32 [#allocation11], 4
      %s3699 = int_to_ptr.vmem [resolvable:$true] %s3698
      %3704 = dma.vmem_to_hbm [thread:$0]  %s3699, 512, %s7, [#allocation5], 128, 128, 8
    $region49: #{tpu_custom_call.1} parent=1 // pred_fallthru
      _
    // Predicated region
    $region50: #{tpu_custom_call.1} parent=1 // pred_check
      _
    $region51: #{tpu_custom_call.1} parent=1 // pred_check_branch
      %3706 = sbr.rel (0) target = $region53
    $region52: #{tpu_custom_call.1} parent=1 // pred_region
      %3707 = dma.done [#allocation5], 512
    $region53: #{tpu_custom_call.1} parent=1 // pred_fallthru
      _
    %3708 = vsyncpa [#allocation4], 1
    %3709 = vsyncpa [#allocation7], 1
    %3710 = vsyncpa [#allocation10], 1
    %3711 = vsyncpa [#allocation5], 1

</llo_original>
